<compile_context>
chip_gen: v7x
topology: tpu7x:2x2x1
jax: 0.10.0
libtpu: 0.0.40
codegen_flags: <defaults>
</compile_context>

<pallas_src>
import jax
import jax.numpy as jnp
from jax import lax
from jax.experimental import pallas as pl
from jax.experimental.pallas import tpu as pltpu


LANES = 128                      # lane width / padding unit for big matmul dims
COMPUTE_DTYPE = jnp.bfloat16     # MXU-native storage dtype; accumulation is f32
VMEM_LIMIT = 48 * 1024 * 1024    # explicit scoped-VMEM budget (fits v7x's 64 MiB)

# Static hyper-parameters of the PyTorch module.
K_CONV = 4
C1_OUT, C2_OUT = 10, 20
C1_PAD, C2_PAD = 16, 32          # padded out-channel widths (full-dim blocks)
FC_IN, FC_HID, FC_OUT = 500, 80, 10


# ------------------------------ small helpers -------------------------------

def _round_up(x, m):
    return ((x + m - 1) // m) * m


def _pad_to(a, shape):
    pads = [(0, s - d) for d, s in zip(a.shape, shape)]
    return jnp.pad(a, pads)


def _choose_tile(n, cap, align):
    """Tile size (multiple of `align`, <= cap) and padded extent.

    Prefers >= 2 grid steps on the "parallel" axis when the problem is large
    enough, so both v7x TensorCores get work."""
    npad = _round_up(n, align)
    tile = min(cap, npad)
    if npad // tile < 2 and npad > align:
        tile = _round_up((npad + 1) // 2, align)
    npad = _round_up(npad, tile)
    return tile, npad


# ------------------------------ Pallas kernels ------------------------------

def _conv_relu_pool_kernel(p_ref, w_ref, b_ref, o_ref):
    """Fused im2col-conv + bias + ReLU + 2x2 max-pool for one N-tile.

    p_ref : [TN, 4*P]   patches; pool-window w occupies lanes [w*P, (w+1)*P)
    w_ref : [P, Cout]   conv weights (bf16), Cout padded to a full-dim block
    b_ref : [1, Cout]   bias (f32)
    o_ref : [TN, Cout]  pooled activations (bf16), written once
    """
    p_sz = w_ref.shape[0]
    w = w_ref[...]
    b = b_ref[...]
    acc = None
    for win in range(4):                       # unrolled: 4 dots into a vreg accumulator
        patch = p_ref[:, pl.ds(win * p_sz, p_sz)]
        y = jnp.dot(patch, w, preferred_element_type=jnp.float32)
        y = jnp.maximum(y + b, 0.0)            # bias + ReLU (before pooling, as in torch)
        acc = y if acc is None else jnp.maximum(acc, y)
    o_ref[...] = acc.astype(o_ref.dtype)


def _mlp_kernel(x_ref, w1_ref, b1_ref, w2_ref, b2_ref, o_ref):
    """fc1 + ReLU + fc2 for one batch tile.
    x:[TB,512] w1:[512,128] w2:[128,128] (lane/K padded, bf16); biases f32."""
    h = jnp.dot(x_ref[...], w1_ref[...], preferred_element_type=jnp.float32)
    h = jnp.maximum(h + b1_ref[...], 0.0)
    o = jnp.dot(h.astype(w2_ref.dtype), w2_ref[...],
                preferred_element_type=jnp.float32)
    o_ref[...] = (o + b2_ref[...]).astype(o_ref.dtype)


# ------------------------------ pallas_call wrappers -------------------------

def _conv_relu_pool(patches, w_mat, bias_row):
    """patches: [N, 4*P] -> pooled activations [Npad, Cout] (bf16)."""
    n, p4 = patches.shape
    p_sz, cout = w_mat.shape
    assert p4 == 4 * p_sz

    tn, npad = _choose_tile(n, cap=2048, align=LANES)
    patches = _pad_to(patches.astype(w_mat.dtype), (npad, p4))

    flops = int(2 * npad * 4 * p_sz * cout)
    bytes_accessed = int(patches.size * patches.dtype.itemsize
                         + w_mat.size * w_mat.dtype.itemsize
                         + bias_row.size * 4
                         + npad * cout * 2)

    return pl.pallas_call(
        _conv_relu_pool_kernel,
        out_shape=jax.ShapeDtypeStruct((npad, cout), COMPUTE_DTYPE),
        grid_spec=pltpu.PrefetchScalarGridSpec(
            num_scalar_prefetch=0,
            grid=(npad // tn,),
            in_specs=[
                pl.BlockSpec((tn, p4), lambda i: (i, 0)),
                pl.BlockSpec((p_sz, cout), lambda i: (0, 0)),   # resident weights
                pl.BlockSpec((1, cout), lambda i: (0, 0)),      # resident bias
            ],
            out_specs=pl.BlockSpec((tn, cout), lambda i: (i, 0)),
        ),
        compiler_params=pltpu.CompilerParams(
            dimension_semantics=("parallel",),
            vmem_limit_bytes=VMEM_LIMIT,
        ),
        cost_estimate=pl.CostEstimate(flops=flops, transcendentals=0,
                                      bytes_accessed=bytes_accessed),
    )(patches, w_mat, bias_row)


def _mlp(x, w1, b1, w2, b2):
    """x: [B, 512] -> logits [B, 128] (f32, lane-padded; caller slices :10)."""
    b_sz, k = x.shape
    hid = w1.shape[1]
    out = w2.shape[1]

    tb, bpad = _choose_tile(b_sz, cap=1024, align=8)
    x = _pad_to(x.astype(w1.dtype), (bpad, k))

    flops = int(2 * bpad * (k * hid + hid * out))
    bytes_accessed = int(x.size * x.dtype.itemsize
                         + w1.size * w1.dtype.itemsize
                         + w2.size * w2.dtype.itemsize
                         + (b1.size + b2.size) * 4
                         + bpad * out * 4)

    res = pl.pallas_call(
        _mlp_kernel,
        out_shape=jax.ShapeDtypeStruct((bpad, out), jnp.float32),
        grid_spec=pltpu.PrefetchScalarGridSpec(
            num_scalar_prefetch=0,
            grid=(bpad // tb,),
            in_specs=[
                pl.BlockSpec((tb, k), lambda i: (i, 0)),
                pl.BlockSpec((k, hid), lambda i: (0, 0)),
                pl.BlockSpec((1, hid), lambda i: (0, 0)),
                pl.BlockSpec((hid, out), lambda i: (0, 0)),
                pl.BlockSpec((1, out), lambda i: (0, 0)),
            ],
            out_specs=pl.BlockSpec((tb, out), lambda i: (i, 0)),
        ),
        compiler_params=pltpu.CompilerParams(
            dimension_semantics=("parallel",),
            vmem_limit_bytes=VMEM_LIMIT,
        ),
        cost_estimate=pl.CostEstimate(flops=flops, transcendentals=0,
                                      bytes_accessed=bytes_accessed),
    )(x, w1, b1, w2, b2)
    return res[:b_sz]


# ------------------------------ JAX glue -------------------------------------

def _im2col_pooled(x, k):
    """x: [B,H,W,C] -> patches [B*Hp*Wp, 4*(k*k*C)] grouped by 2x2 pool window.

    Row index = ((b*Hp + hp)*Wp + wp); within a row, pool window (dh,dw) owns
    the contiguous column range [(dh*2+dw)*P, (dh*2+dw+1)*P) with P = k*k*C in
    (kh, kw, cin) order.  Only two middle axes are swapped (window axis stays
    minor-adjacent), so the XLA transpose/reshape is near-free."""
    b, h, w, c = x.shape
    ho, wo = h - k + 1, w - k + 1
    hp, wp = ho // 2, wo // 2
    p_sz = k * k * c
    cols = []
    for kh in range(k):
        for kw in range(k):
            cols.append(x[:, kh:kh + ho, kw:kw + wo, :])
    patches = jnp.concatenate(cols, axis=-1)               # [B,Ho,Wo,P]
    p = patches[:, :2 * hp, :2 * wp, :]
    p = p.reshape(b, hp, 2, wp, 2, p_sz)
    p = p.transpose(0, 1, 3, 2, 4, 5)                      # [B,Hp,Wp,2,2,P]
    p = p.reshape(b * hp * wp, 4 * p_sz)                   # [N, 4*P]
    return p, (b, hp, wp)


def _conv_w_to_mat(w, cin_pad=None):
    """PyTorch conv weight [Cout,Cin,KH,KW] -> [KH*KW*Cinp, Cout] (im2col order),
    optionally zero-padding the input-channel dim to cin_pad."""
    cout = w.shape[0]
    w_hwio = jnp.transpose(w, (2, 3, 1, 0))                # (KH,KW,Cin,Cout)
    if cin_pad is not None:
        w_hwio = jnp.pad(w_hwio,
                         ((0, 0), (0, 0), (0, cin_pad - w_hwio.shape[2]), (0, 0)))
    return w_hwio.reshape(-1, cout)


def prepare_params(params, compute_dtype=COMPUTE_DTYPE):
    """One-time (outside jit) weight prep: transpose, padding, bf16 cast."""
    w1, b1, w2, b2, fw1, fb1, fw2, fb2 = params

    # conv1: K = 4*4*1 = 16, out channels padded 10 -> 16 (full-dim block).
    wm1 = _pad_to(_conv_w_to_mat(w1), (K_CONV * K_CONV * 1, C1_PAD)).astype(compute_dtype)
    bm1 = _pad_to(b1.reshape(1, -1), (1, C1_PAD)).astype(jnp.float32)

    # conv2: input channels padded 10 -> 16 so K = 4*4*16 = 256 (one MXU pass
    # on v6e/v7x); out channels padded 20 -> 32.
    wm2 = _pad_to(_conv_w_to_mat(w2, cin_pad=C1_PAD),
                  (K_CONV * K_CONV * C1_PAD, C2_PAD)).astype(compute_dtype)
    bm2 = _pad_to(b2.reshape(1, -1), (1, C2_PAD)).astype(jnp.float32)

    kin_pad = _round_up(FC_IN, LANES)      # 500 -> 512
    hid_pad = _round_up(FC_HID, LANES)     # 80  -> 128
    out_pad = _round_up(FC_OUT, LANES)     # 10  -> 128
    fwm1 = _pad_to(fw1.T, (kin_pad, hid_pad)).astype(compute_dtype)
    fwm2 = _pad_to(fw2.T, (hid_pad, out_pad)).astype(compute_dtype)
    fbm1 = _pad_to(fb1.reshape(1, -1), (1, hid_pad)).astype(jnp.float32)
    fbm2 = _pad_to(fb2.reshape(1, -1), (1, out_pad)).astype(jnp.float32)

    return (wm1, bm1, wm2, bm2, fwm1, fbm1, fwm2, fbm2)


def teacher_cnn_mnist_forward(x_nchw, prep):
    """x_nchw: [B,1,32,32] float32 -> logits [B,10] float32."""
    wm1, bm1, wm2, bm2, fwm1, fbm1, fwm2, fbm2 = prep
    x = jnp.transpose(x_nchw, (0, 2, 3, 1)).astype(COMPUTE_DTYPE)   # NCHW -> NHWC

    # conv1 + ReLU + 2x2 maxpool (fused Pallas kernel); keep 16 padded channels
    # (extra channels are exactly zero) so conv2's K is 256 and no lane-slice.
    p1, (b, hp1, wp1) = _im2col_pooled(x, K_CONV)            # [B*14*14, 64]
    n1 = b * hp1 * wp1
    a1 = _conv_relu_pool(p1, wm1, bm1)[:n1]                  # [n1, 16]
    a1 = a1.reshape(b, hp1, wp1, C1_PAD)                     # [B,14,14,16]

    # conv2 + ReLU + 2x2 maxpool (fused Pallas kernel), K = 256.
    p2, (_, hp2, wp2) = _im2col_pooled(a1, K_CONV)           # [B*5*5, 1024]
    n2 = b * hp2 * wp2
    a2 = _conv_relu_pool(p2, wm2, bm2)[:n2, :C2_OUT]         # [n2, 20]
    a2 = a2.reshape(b, hp2, wp2, C2_OUT)                     # [B,5,5,20]

    # flatten in PyTorch NCHW order (C,H,W), pad K 500 -> 512 (tiny tensor).
    flat = jnp.transpose(a2, (0, 3, 1, 2)).reshape(b, C2_OUT * hp2 * wp2)
    flat = _pad_to(flat, (b, fwm1.shape[0]))

    # fc1 + ReLU + fc2 (fused Pallas kernel)
    return _mlp(flat, fwm1, fbm1, fwm2, fbm2)[:, :FC_OUT]


# ------------------------------ reference (pure JAX, f32) --------------------

def _reference_forward(x_nchw, params):
    w1, b1, w2, b2, fw1, fb1, fw2, fb2 = params
    x = jnp.transpose(x_nchw, (0, 2, 3, 1))
    dn = ("NHWC", "HWIO", "NHWC")

    def conv(x, w, b):
        w_hwio = jnp.transpose(w, (2, 3, 1, 0))
        y = lax.conv_general_dilated(x, w_hwio, (1, 1), "VALID",
                                     dimension_numbers=dn)
        return y + b.reshape(1, 1, 1, -1)

    def pool(x):
        return lax.reduce_window(x, -jnp.inf, lax.max,
                                 (1, 2, 2, 1), (1, 2, 2, 1), "VALID")

    a1 = pool(jnp.maximum(conv(x, w1, b1), 0.0))
    a2 = pool(jnp.maximum(conv(a1, w2, b2), 0.0))
    flat = jnp.transpose(a2, (0, 3, 1, 2)).reshape(x.shape[0], FC_IN)
    h = jnp.maximum(flat @ fw1.T + fb1, 0.0)
    return h @ fw2.T + fb2


# ------------------------------ main ------------------------------------------

def _init_params(key):
    ks = jax.random.split(key, 8)
    w1 = 0.1 * jax.random.normal(ks[0], (C1_OUT, 1, K_CONV, K_CONV), jnp.float32)
    b1 = 0.1 * jax.random.normal(ks[1], (C1_OUT,), jnp.float32)
    w2 = 0.1 * jax.random.normal(ks[2], (C2_OUT, C1_OUT, K_CONV, K_CONV), jnp.float32)
    b2 = 0.1 * jax.random.normal(ks[3], (C2_OUT,), jnp.float32)
    fw1 = 0.05 * jax.random.normal(ks[4], (FC_HID, FC_IN), jnp.float32)
    fb1 = 0.05 * jax.random.normal(ks[5], (FC_HID,), jnp.float32)
    fw2 = 0.05 * jax.random.normal(ks[6], (FC_OUT, FC_HID), jnp.float32)
    fb2 = 0.05 * jax.random.normal(ks[7], (FC_OUT,), jnp.float32)
    return (w1, b1, w2, b2, fw1, fb1, fw2, fb2)


if __name__ == "__main__":
    key = jax.random.PRNGKey(0)
    pkey, xkey = jax.random.split(key)
    params = _init_params(pkey)
    prep = prepare_params(params)              # one-time prep, outside jit

    # MNIST-style input (32x32 so the module's 20*5*5 flatten is consistent)
    x = jax.random.normal(xkey, (2, 1, 32, 32), jnp.float32)

    fwd = jax.jit(teacher_cnn_mnist_forward)
    out = jax.block_until_ready(fwd(x, prep))
    assert out.shape == (2, FC_OUT), out.shape

    ref = jax.block_until_ready(_reference_forward(x, params))
    max_err = float(jnp.max(jnp.abs(out - ref)))
    # bf16 weights/activations (f32 accumulation) -> loosened tolerance vs f32 ref.
    assert jnp.allclose(out, ref, atol=5e-2, rtol=5e-2), ("mismatch", max_err)

    print("KERNEL_OK")
</pallas_src>

<mosaic_0001>
module attributes {stable_mosaic.version = 11 : i64} {
  func.func @_conv_relu_pool_kernel(%arg0: i32, %arg1: memref<256x64xbf16, #tpu.memory_space<vmem>>, %arg2: memref<16x16xbf16, #tpu.memory_space<vmem>>, %arg3: memref<1x16xf32, #tpu.memory_space<vmem>>, %arg4: memref<256x16xbf16, #tpu.memory_space<vmem>>) attributes {dimension_semantics = [#tpu.dimension_semantics<parallel>], iteration_bounds = array<i64: 2>, scalar_prefetch = 0 : i64, scratch_operands = 0 : i64, tpu.core_type = #tpu.core_type<tc>, window_params = [{transform_indices = @transform_0, window_bounds = array<i64: 256, 64>}, {pipeline_mode = #tpu.pipeline_mode<synchronous>, transform_indices = @transform_1, window_bounds = array<i64: 16, 16>}, {pipeline_mode = #tpu.pipeline_mode<synchronous>, transform_indices = @transform_2, window_bounds = array<i64: 1, 16>}, {transform_indices = @transform_3, window_bounds = array<i64: 256, 16>}]} {
    %c0 = arith.constant 0 : index
    %c0_0 = arith.constant 0 : index
    %0 = vector.load %arg2[%c0, %c0_0] : memref<16x16xbf16, #tpu.memory_space<vmem>>, vector<16x16xbf16>
    %c0_1 = arith.constant 0 : index
    %c0_2 = arith.constant 0 : index
    %1 = vector.load %arg3[%c0_1, %c0_2] : memref<1x16xf32, #tpu.memory_space<vmem>>, vector<1x16xf32>
    %c0_3 = arith.constant 0 : index
    %c0_4 = arith.constant 0 : index
    %2 = vector.load %arg1[%c0_3, %c0_4] : memref<256x64xbf16, #tpu.memory_space<vmem>>, vector<256x16xbf16>
    %cst = arith.constant dense<0.000000e+00> : vector<256x16xf32>
    %3 = tpu.matmul %2, %0, %cst {dimension_numbers = #tpu.dot_dimension_numbers<[1], [0], [0], [1], [0, 0, 1, 1], [], []>} : vector<256x16xbf16>, vector<16x16xbf16>, vector<256x16xf32> -> vector<256x16xf32>
    %4 = vector.broadcast %1 : vector<1x16xf32> to vector<256x16xf32>
    %5 = arith.addf %3, %4 : vector<256x16xf32>
    %cst_5 = arith.constant 0.000000e+00 : f32
    %6 = vector.broadcast %cst_5 : f32 to vector<256x16xf32>
    %7 = arith.maximumf %5, %6 : vector<256x16xf32>
    %c0_6 = arith.constant 0 : index
    %c16 = arith.constant 16 : index
    %8 = vector.load %arg1[%c0_6, %c16] : memref<256x64xbf16, #tpu.memory_space<vmem>>, vector<256x16xbf16>
    %cst_7 = arith.constant dense<0.000000e+00> : vector<256x16xf32>
    %9 = tpu.matmul %8, %0, %cst_7 {dimension_numbers = #tpu.dot_dimension_numbers<[1], [0], [0], [1], [0, 0, 1, 1], [], []>} : vector<256x16xbf16>, vector<16x16xbf16>, vector<256x16xf32> -> vector<256x16xf32>
    %10 = vector.broadcast %1 : vector<1x16xf32> to vector<256x16xf32>
    %11 = arith.addf %9, %10 : vector<256x16xf32>
    %cst_8 = arith.constant 0.000000e+00 : f32
    %12 = vector.broadcast %cst_8 : f32 to vector<256x16xf32>
    %13 = arith.maximumf %11, %12 : vector<256x16xf32>
    %14 = arith.maximumf %7, %13 : vector<256x16xf32>
    %c0_9 = arith.constant 0 : index
    %c32 = arith.constant 32 : index
    %15 = vector.load %arg1[%c0_9, %c32] : memref<256x64xbf16, #tpu.memory_space<vmem>>, vector<256x16xbf16>
    %cst_10 = arith.constant dense<0.000000e+00> : vector<256x16xf32>
    %16 = tpu.matmul %15, %0, %cst_10 {dimension_numbers = #tpu.dot_dimension_numbers<[1], [0], [0], [1], [0, 0, 1, 1], [], []>} : vector<256x16xbf16>, vector<16x16xbf16>, vector<256x16xf32> -> vector<256x16xf32>
    %17 = vector.broadcast %1 : vector<1x16xf32> to vector<256x16xf32>
    %18 = arith.addf %16, %17 : vector<256x16xf32>
    %cst_11 = arith.constant 0.000000e+00 : f32
    %19 = vector.broadcast %cst_11 : f32 to vector<256x16xf32>
    %20 = arith.maximumf %18, %19 : vector<256x16xf32>
    %21 = arith.maximumf %14, %20 : vector<256x16xf32>
    %c0_12 = arith.constant 0 : index
    %c48 = arith.constant 48 : index
    %22 = vector.load %arg1[%c0_12, %c48] : memref<256x64xbf16, #tpu.memory_space<vmem>>, vector<256x16xbf16>
    %cst_13 = arith.constant dense<0.000000e+00> : vector<256x16xf32>
    %23 = tpu.matmul %22, %0, %cst_13 {dimension_numbers = #tpu.dot_dimension_numbers<[1], [0], [0], [1], [0, 0, 1, 1], [], []>} : vector<256x16xbf16>, vector<16x16xbf16>, vector<256x16xf32> -> vector<256x16xf32>
    %24 = vector.broadcast %1 : vector<1x16xf32> to vector<256x16xf32>
    %25 = arith.addf %23, %24 : vector<256x16xf32>
    %cst_14 = arith.constant 0.000000e+00 : f32
    %26 = vector.broadcast %cst_14 : f32 to vector<256x16xf32>
    %27 = arith.maximumf %25, %26 : vector<256x16xf32>
    %28 = arith.maximumf %21, %27 : vector<256x16xf32>
    %29 = arith.truncf %28 : vector<256x16xf32> to vector<256x16xbf16>
    %c0_15 = arith.constant 0 : index
    %c0_16 = arith.constant 0 : index
    %30 = vector.load %arg4[%c0_15, %c0_16] : memref<256x16xbf16, #tpu.memory_space<vmem>>, vector<256x16xbf16>
    tpu.vector_store %arg4[%c0_15, %c0_16], %29 {strides = array<i32>} : memref<256x16xbf16, #tpu.memory_space<vmem>>, vector<256x16xbf16>,
    return
  }
  func.func @transform_0(%arg0: i32) -> (i32, i32) {
    %c0_i32 = arith.constant 0 : i32
    %c0_i32_0 = arith.constant 0 : i32
    return %arg0, %c0_i32 : i32, i32
  }
  func.func @transform_1(%arg0: i32) -> (i32, i32) {
    %c0_i32 = arith.constant 0 : i32
    %c0_i32_0 = arith.constant 0 : i32
    %c0_i32_1 = arith.constant 0 : i32
    return %c0_i32, %c0_i32_0 : i32, i32
  }
  func.func @transform_2(%arg0: i32) -> (i32, i32) {
    %c0_i32 = arith.constant 0 : i32
    %c0_i32_0 = arith.constant 0 : i32
    %c0_i32_1 = arith.constant 0 : i32
    return %c0_i32, %c0_i32_0 : i32, i32
  }
  func.func @transform_3(%arg0: i32) -> (i32, i32) {
    %c0_i32 = arith.constant 0 : i32
    %c0_i32_0 = arith.constant 0 : i32
    return %arg0, %c0_i32 : i32, i32
  }
}

module attributes {stable_mosaic.version = 11 : i64} {
  func.func @_conv_relu_pool_kernel(%arg0: i32, %arg1: memref<128x1024xbf16, #tpu.memory_space<vmem>>, %arg2: memref<256x32xbf16, #tpu.memory_space<vmem>>, %arg3: memref<1x32xf32, #tpu.memory_space<vmem>>, %arg4: memref<128x32xbf16, #tpu.memory_space<vmem>>) attributes {dimension_semantics = [#tpu.dimension_semantics<parallel>], iteration_bounds = array<i64: 1>, scalar_prefetch = 0 : i64, scratch_operands = 0 : i64, tpu.core_type = #tpu.core_type<tc>, window_params = [{transform_indices = @transform_0, window_bounds = array<i64: 128, 1024>}, {pipeline_mode = #tpu.pipeline_mode<synchronous>, transform_indices = @transform_1, window_bounds = array<i64: 256, 32>}, {pipeline_mode = #tpu.pipeline_mode<synchronous>, transform_indices = @transform_2, window_bounds = array<i64: 1, 32>}, {transform_indices = @transform_3, window_bounds = array<i64: 128, 32>}]} {
    %c0 = arith.constant 0 : index
    %c0_0 = arith.constant 0 : index
    %0 = vector.load %arg2[%c0, %c0_0] : memref<256x32xbf16, #tpu.memory_space<vmem>>, vector<256x32xbf16>
    %c0_1 = arith.constant 0 : index
    %c0_2 = arith.constant 0 : index
    %1 = vector.load %arg3[%c0_1, %c0_2] : memref<1x32xf32, #tpu.memory_space<vmem>>, vector<1x32xf32>
    %c0_3 = arith.constant 0 : index
    %c0_4 = arith.constant 0 : index
    %2 = vector.load %arg1[%c0_3, %c0_4] : memref<128x1024xbf16, #tpu.memory_space<vmem>>, vector<128x256xbf16>
    %cst = arith.constant dense<0.000000e+00> : vector<128x32xf32>
    %3 = tpu.matmul %2, %0, %cst {dimension_numbers = #tpu.dot_dimension_numbers<[1], [0], [0], [1], [0, 0, 1, 1], [], []>} : vector<128x256xbf16>, vector<256x32xbf16>, vector<128x32xf32> -> vector<128x32xf32>
    %4 = vector.broadcast %1 : vector<1x32xf32> to vector<128x32xf32>
    %5 = arith.addf %3, %4 : vector<128x32xf32>
    %cst_5 = arith.constant 0.000000e+00 : f32
    %6 = vector.broadcast %cst_5 : f32 to vector<128x32xf32>
    %7 = arith.maximumf %5, %6 : vector<128x32xf32>
    %c0_6 = arith.constant 0 : index
    %c256 = arith.constant 256 : index
    %8 = vector.load %arg1[%c0_6, %c256] : memref<128x1024xbf16, #tpu.memory_space<vmem>>, vector<128x256xbf16>
    %cst_7 = arith.constant dense<0.000000e+00> : vector<128x32xf32>
    %9 = tpu.matmul %8, %0, %cst_7 {dimension_numbers = #tpu.dot_dimension_numbers<[1], [0], [0], [1], [0, 0, 1, 1], [], []>} : vector<128x256xbf16>, vector<256x32xbf16>, vector<128x32xf32> -> vector<128x32xf32>
    %10 = vector.broadcast %1 : vector<1x32xf32> to vector<128x32xf32>
    %11 = arith.addf %9, %10 : vector<128x32xf32>
    %cst_8 = arith.constant 0.000000e+00 : f32
    %12 = vector.broadcast %cst_8 : f32 to vector<128x32xf32>
    %13 = arith.maximumf %11, %12 : vector<128x32xf32>
    %14 = arith.maximumf %7, %13 : vector<128x32xf32>
    %c0_9 = arith.constant 0 : index
    %c512 = arith.constant 512 : index
    %15 = vector.load %arg1[%c0_9, %c512] : memref<128x1024xbf16, #tpu.memory_space<vmem>>, vector<128x256xbf16>
    %cst_10 = arith.constant dense<0.000000e+00> : vector<128x32xf32>
    %16 = tpu.matmul %15, %0, %cst_10 {dimension_numbers = #tpu.dot_dimension_numbers<[1], [0], [0], [1], [0, 0, 1, 1], [], []>} : vector<128x256xbf16>, vector<256x32xbf16>, vector<128x32xf32> -> vector<128x32xf32>
    %17 = vector.broadcast %1 : vector<1x32xf32> to vector<128x32xf32>
    %18 = arith.addf %16, %17 : vector<128x32xf32>
    %cst_11 = arith.constant 0.000000e+00 : f32
    %19 = vector.broadcast %cst_11 : f32 to vector<128x32xf32>
    %20 = arith.maximumf %18, %19 : vector<128x32xf32>
    %21 = arith.maximumf %14, %20 : vector<128x32xf32>
    %c0_12 = arith.constant 0 : index
    %c768 = arith.constant 768 : index
    %22 = vector.load %arg1[%c0_12, %c768] : memref<128x1024xbf16, #tpu.memory_space<vmem>>, vector<128x256xbf16>
    %cst_13 = arith.constant dense<0.000000e+00> : vector<128x32xf32>
    %23 = tpu.matmul %22, %0, %cst_13 {dimension_numbers = #tpu.dot_dimension_numbers<[1], [0], [0], [1], [0, 0, 1, 1], [], []>} : vector<128x256xbf16>, vector<256x32xbf16>, vector<128x32xf32> -> vector<128x32xf32>
    %24 = vector.broadcast %1 : vector<1x32xf32> to vector<128x32xf32>
    %25 = arith.addf %23, %24 : vector<128x32xf32>
    %cst_14 = arith.constant 0.000000e+00 : f32
    %26 = vector.broadcast %cst_14 : f32 to vector<128x32xf32>
    %27 = arith.maximumf %25, %26 : vector<128x32xf32>
    %28 = arith.maximumf %21, %27 : vector<128x32xf32>
    %29 = arith.truncf %28 : vector<128x32xf32> to vector<128x32xbf16>
    %c0_15 = arith.constant 0 : index
    %c0_16 = arith.constant 0 : index
    %30 = vector.load %arg4[%c0_15, %c0_16] : memref<128x32xbf16, #tpu.memory_space<vmem>>, vector<128x32xbf16>
    tpu.vector_store %arg4[%c0_15, %c0_16], %29 {strides = array<i32>} : memref<128x32xbf16, #tpu.memory_space<vmem>>, vector<128x32xbf16>,
    return
  }
  func.func @transform_0(%arg0: i32) -> (i32, i32) {
    %c0_i32 = arith.constant 0 : i32
    %c0_i32_0 = arith.constant 0 : i32
    return %arg0, %c0_i32 : i32, i32
  }
  func.func @transform_1(%arg0: i32) -> (i32, i32) {
    %c0_i32 = arith.constant 0 : i32
    %c0_i32_0 = arith.constant 0 : i32
    %c0_i32_1 = arith.constant 0 : i32
    return %c0_i32, %c0_i32_0 : i32, i32
  }
  func.func @transform_2(%arg0: i32) -> (i32, i32) {
    %c0_i32 = arith.constant 0 : i32
    %c0_i32_0 = arith.constant 0 : i32
    %c0_i32_1 = arith.constant 0 : i32
    return %c0_i32, %c0_i32_0 : i32, i32
  }
  func.func @transform_3(%arg0: i32) -> (i32, i32) {
    %c0_i32 = arith.constant 0 : i32
    %c0_i32_0 = arith.constant 0 : i32
    return %arg0, %c0_i32 : i32, i32
  }
}

module attributes {stable_mosaic.version = 11 : i64} {
  func.func @_mlp_kernel(%arg0: i32, %arg1: memref<8x512xbf16, #tpu.memory_space<vmem>>, %arg2: memref<512x128xbf16, #tpu.memory_space<vmem>>, %arg3: memref<1x128xf32, #tpu.memory_space<vmem>>, %arg4: memref<128x128xbf16, #tpu.memory_space<vmem>>, %arg5: memref<1x128xf32, #tpu.memory_space<vmem>>, %arg6: memref<8x128xf32, #tpu.memory_space<vmem>>) attributes {dimension_semantics = [#tpu.dimension_semantics<parallel>], iteration_bounds = array<i64: 1>, scalar_prefetch = 0 : i64, scratch_operands = 0 : i64, tpu.core_type = #tpu.core_type<tc>, window_params = [{transform_indices = @transform_0, window_bounds = array<i64: 8, 512>}, {pipeline_mode = #tpu.pipeline_mode<synchronous>, transform_indices = @transform_1, window_bounds = array<i64: 512, 128>}, {pipeline_mode = #tpu.pipeline_mode<synchronous>, transform_indices = @transform_2, window_bounds = array<i64: 1, 128>}, {pipeline_mode = #tpu.pipeline_mode<synchronous>, transform_indices = @transform_3, window_bounds = array<i64: 128, 128>}, {pipeline_mode = #tpu.pipeline_mode<synchronous>, transform_indices = @transform_4, window_bounds = array<i64: 1, 128>}, {transform_indices = @transform_5, window_bounds = array<i64: 8, 128>}]} {
    %c0 = arith.constant 0 : index
    %c0_0 = arith.constant 0 : index
    %0 = vector.load %arg1[%c0, %c0_0] : memref<8x512xbf16, #tpu.memory_space<vmem>>, vector<8x512xbf16>
    %c0_1 = arith.constant 0 : index
    %c0_2 = arith.constant 0 : index
    %1 = vector.load %arg2[%c0_1, %c0_2] : memref<512x128xbf16, #tpu.memory_space<vmem>>, vector<512x128xbf16>
    %cst = arith.constant dense<0.000000e+00> : vector<8x128xf32>
    %2 = tpu.matmul %0, %1, %cst {dimension_numbers = #tpu.dot_dimension_numbers<[1], [0], [0], [1], [0, 0, 1, 1], [], []>} : vector<8x512xbf16>, vector<512x128xbf16>, vector<8x128xf32> -> vector<8x128xf32>
    %c0_3 = arith.constant 0 : index
    %c0_4 = arith.constant 0 : index
    %3 = vector.load %arg3[%c0_3, %c0_4] : memref<1x128xf32, #tpu.memory_space<vmem>>, vector<1x128xf32>
    %4 = vector.broadcast %3 : vector<1x128xf32> to vector<8x128xf32>
    %5 = arith.addf %2, %4 : vector<8x128xf32>
    %cst_5 = arith.constant 0.000000e+00 : f32
    %6 = vector.broadcast %cst_5 : f32 to vector<8x128xf32>
    %7 = arith.maximumf %5, %6 : vector<8x128xf32>
    %8 = arith.truncf %7 : vector<8x128xf32> to vector<8x128xbf16>
    %c0_6 = arith.constant 0 : index
    %c0_7 = arith.constant 0 : index
    %9 = vector.load %arg4[%c0_6, %c0_7] : memref<128x128xbf16, #tpu.memory_space<vmem>>, vector<128x128xbf16>
    %cst_8 = arith.constant dense<0.000000e+00> : vector<8x128xf32>
    %10 = tpu.matmul %8, %9, %cst_8 {dimension_numbers = #tpu.dot_dimension_numbers<[1], [0], [0], [1], [0, 0, 1, 1], [], []>} : vector<8x128xbf16>, vector<128x128xbf16>, vector<8x128xf32> -> vector<8x128xf32>
    %c0_9 = arith.constant 0 : index
    %c0_10 = arith.constant 0 : index
    %11 = vector.load %arg5[%c0_9, %c0_10] : memref<1x128xf32, #tpu.memory_space<vmem>>, vector<1x128xf32>
    %12 = vector.broadcast %11 : vector<1x128xf32> to vector<8x128xf32>
    %13 = arith.addf %10, %12 : vector<8x128xf32>
    %c0_11 = arith.constant 0 : index
    %c0_12 = arith.constant 0 : index
    %14 = vector.load %arg6[%c0_11, %c0_12] : memref<8x128xf32, #tpu.memory_space<vmem>>, vector<8x128xf32>
    tpu.vector_store %arg6[%c0_11, %c0_12], %13 {strides = array<i32>} : memref<8x128xf32, #tpu.memory_space<vmem>>, vector<8x128xf32>,
    return
  }
  func.func @transform_0(%arg0: i32) -> (i32, i32) {
    %c0_i32 = arith.constant 0 : i32
    %c0_i32_0 = arith.constant 0 : i32
    return %arg0, %c0_i32 : i32, i32
  }
  func.func @transform_1(%arg0: i32) -> (i32, i32) {
    %c0_i32 = arith.constant 0 : i32
    %c0_i32_0 = arith.constant 0 : i32
    %c0_i32_1 = arith.constant 0 : i32
    return %c0_i32, %c0_i32_0 : i32, i32
  }
  func.func @transform_2(%arg0: i32) -> (i32, i32) {
    %c0_i32 = arith.constant 0 : i32
    %c0_i32_0 = arith.constant 0 : i32
    %c0_i32_1 = arith.constant 0 : i32
    return %c0_i32, %c0_i32_0 : i32, i32
  }
  func.func @transform_3(%arg0: i32) -> (i32, i32) {
    %c0_i32 = arith.constant 0 : i32
    %c0_i32_0 = arith.constant 0 : i32
    %c0_i32_1 = arith.constant 0 : i32
    return %c0_i32, %c0_i32_0 : i32, i32
  }
  func.func @transform_4(%arg0: i32) -> (i32, i32) {
    %c0_i32 = arith.constant 0 : i32
    %c0_i32_0 = arith.constant 0 : i32
    %c0_i32_1 = arith.constant 0 : i32
    return %c0_i32, %c0_i32_0 : i32, i32
  }
  func.func @transform_5(%arg0: i32) -> (i32, i32) {
    %c0_i32 = arith.constant 0 : i32
    %c0_i32_0 = arith.constant 0 : i32
    return %arg0, %c0_i32 : i32, i32
  }
}

</mosaic_0001>

<llo_original>
// kernel: teacher_cnn_mnist_forward.3
$region0: #{teacher_cnn_mnist_forward.3}
  #allocation0 [shape = 'u32[]', space=smem, size = 0x4, offset = 0x4, fixed_abs, tag = 'smem constant byte address 0x4 - core index']
  #allocation1 [shape = 'u32[144,128]{1,0:T(1,128)}', space=vmem, size = 0x12000, scoped, tag = 'internal scratch']
  %s0 = inlined_call_operand.vmem [shape: bf16[512,64], index: 0, kind: input, shape index: {}]
  %s1 = inlined_call_operand.vmem [shape: bf16[16,16], index: 1, kind: input, shape index: {}]
  %s2 = inlined_call_operand.vmem [shape: f32[1,16], index: 2, kind: input, shape index: {}]
  %s3 = inlined_call_operand.vmem [shape: bf16[512,16], index: 3, kind: output, shape index: {}]
  %s4 = sld [smem:[#allocation0]]
  $region45: #{teacher_cnn_mnist_forward.3} parent=0
    _
  %s6 = ssub.s32 1, %s4
  %s7 = scalar_select 0, %s6, %s4
  loop: start=0, step=1, limit=4
  $region2: #{teacher_cnn_mnist_forward.3} parent=0 // loop_pre_header
    _
  $region3: #{teacher_cnn_mnist_forward.3} parent=0 // loop_header
    %s9 = sphi 0, %s13
    %p10 = scmp.ge.s32.totalorder %s9, 4
    %s19 = sphi 0, %s21
    %s22 = sphi 0, %s19
    %s23 = sphi 0, %s22
    %s39 = sphi 0, %s23
    %s43 = sphi 0, %s43
    %s45 = sphi 0, %s43
    %s46 = sphi 0, %s45
    %s60 = sphi 0, %s46
    %s64 = sphi 0, %s64
    %s66 = sphi 0, %s64
    %s67 = sphi 0, %s66
    %s81 = sphi 0, %s67
    %s87 = sphi 0, %s89
    %s90 = sphi 0, %s87
    %s91 = sphi 0, %s90
    %s107 = sphi 0, %s91
  $region4: #{teacher_cnn_mnist_forward.3} parent=0 // loop_header_branch
    %12 = sbr.rel (%p10) target = $region8
  $region5: #{teacher_cnn_mnist_forward.3} parent=0 // loop_body
    %s14 = ssub.s32 %s9, 1
    %s15 = ssub.s32 %s9, 2
    %s16 = sadd.s32 %s9, 1
    %s17 = ssub.s32 %s9, %s16
    %p18 = scmp.eq.s32.totalorder %s17, 0
    %s20 = sadd.s32 %s19, 1
    %s21 = scalar_select %p18, %s19, %s20
    %p24 = pneg %p18
    %p25 = scmp.eq.s32.totalorder %s9, 1
    %p26 = por %p24, %p25
    %p27 = scmp.ne.s32.totalorder %s19, %s22
    %p28 = scmp.eq.s32.totalorder %s9, 0
    %p29 = por %p27, %p28
    %p30 = scmp.ne.s32.totalorder %s19, %s22
    %p31 = scmp.eq.s32.totalorder %s14, 1
    %p32 = por %p30, %p31
    %p33 = scmp.ne.s32.totalorder %s22, %s23
    %p34 = scmp.eq.s32.totalorder %s14, 0
    %p35 = por %p33, %p34
    %p36 = scmp.ne.s32.totalorder %s22, %s23
    %p37 = scmp.eq.s32.totalorder %s15, 1
    %p38 = por %p36, %p37
    %p40 = scmp.ne.s32.totalorder %s23, %s39
    %p41 = scmp.eq.s32.totalorder %s15, 0
    %p42 = por %p40, %p41
    %s44 = sadd.s32 %s43, 1
    %p47 = scmp.eq.s32.totalorder %s9, 1
    %p48 = scmp.ne.s32.totalorder %s43, %s45
    %p49 = scmp.eq.s32.totalorder %s9, 0
    %p50 = por %p48, %p49
    %p51 = scmp.ne.s32.totalorder %s43, %s45
    %p52 = scmp.eq.s32.totalorder %s14, 1
    %p53 = por %p51, %p52
    %p54 = scmp.ne.s32.totalorder %s45, %s46
    %p55 = scmp.eq.s32.totalorder %s14, 0
    %p56 = por %p54, %p55
    %p57 = scmp.ne.s32.totalorder %s45, %s46
    %p58 = scmp.eq.s32.totalorder %s15, 1
    %p59 = por %p57, %p58
    %p61 = scmp.ne.s32.totalorder %s46, %s60
    %p62 = scmp.eq.s32.totalorder %s15, 0
    %p63 = por %p61, %p62
    %s65 = sadd.s32 %s64, 1
    %p68 = scmp.eq.s32.totalorder %s9, 1
    %p69 = scmp.ne.s32.totalorder %s64, %s66
    %p70 = scmp.eq.s32.totalorder %s9, 0
    %p71 = por %p69, %p70
    %p72 = scmp.ne.s32.totalorder %s64, %s66
    %p73 = scmp.eq.s32.totalorder %s14, 1
    %p74 = por %p72, %p73
    %p75 = scmp.ne.s32.totalorder %s66, %s67
    %p76 = scmp.eq.s32.totalorder %s14, 0
    %p77 = por %p75, %p76
    %p78 = scmp.ne.s32.totalorder %s66, %s67
    %p79 = scmp.eq.s32.totalorder %s15, 1
    %p80 = por %p78, %p79
    %p82 = scmp.ne.s32.totalorder %s67, %s81
    %p83 = scmp.eq.s32.totalorder %s15, 0
    %p84 = por %p82, %p83
    %s85 = ssub.s32 %s9, %s16
    %p86 = scmp.eq.s32.totalorder %s85, 0
    %s88 = sadd.s32 %s87, 1
    %s89 = scalar_select %p86, %s87, %s88
    %p92 = pneg %p86
    %p93 = scmp.eq.s32.totalorder %s9, 1
    %p94 = por %p92, %p93
    %p95 = scmp.ne.s32.totalorder %s87, %s90
    %p96 = scmp.eq.s32.totalorder %s9, 0
    %p97 = por %p95, %p96
    %p98 = scmp.ne.s32.totalorder %s87, %s90
    %p99 = scmp.eq.s32.totalorder %s14, 1
    %p100 = por %p98, %p99
    %p101 = scmp.ne.s32.totalorder %s90, %s91
    %p102 = scmp.eq.s32.totalorder %s14, 0
    %p103 = por %p101, %p102
    %p104 = scmp.ne.s32.totalorder %s90, %s91
    %p105 = scmp.eq.s32.totalorder %s15, 1
    %p106 = por %p104, %p105
    %p108 = scmp.ne.s32.totalorder %s91, %s107
    %p109 = scmp.eq.s32.totalorder %s15, 0
    %p110 = por %p108, %p109
    %p111 = scmp.le.s32.totalorder 1, %s9
    %p112 = scmp.lt.s32.totalorder %s9, 3
    %p113 = pnand %p111, %p112
    %p114 = pneg %p113
    // Predicated region
    $region9: #{teacher_cnn_mnist_forward.3} parent=5 // pred_check
      _
    $region10: #{teacher_cnn_mnist_forward.3} parent=5 // pred_check_branch
      %116 = sbr.rel (%p113) target = $region12
    $region11: #{teacher_cnn_mnist_forward.3} parent=5 // pred_region
      %s117 = ssub.s32 %s9, 1
      // Predicated region
      $region13: #{teacher_cnn_mnist_forward.3} parent=11 // pred_check
        %p118 = pneg %p56
      $region14: #{teacher_cnn_mnist_forward.3} parent=11 // pred_check_branch
        %120 = sbr.rel (%p118) target = $region16
      $region15: #{teacher_cnn_mnist_forward.3} parent=11 // pred_region
        _
      $region16: #{teacher_cnn_mnist_forward.3} parent=11 // pred_fallthru
        _
      // Predicated region
      $region17: #{teacher_cnn_mnist_forward.3} parent=11 // pred_check
        %p121 = pneg %p77
      $region18: #{teacher_cnn_mnist_forward.3} parent=11 // pred_check_branch
        %123 = sbr.rel (%p121) target = $region20
      $region19: #{teacher_cnn_mnist_forward.3} parent=11 // pred_region
        _
      $region20: #{teacher_cnn_mnist_forward.3} parent=11 // pred_fallthru
        _
    $region12: #{teacher_cnn_mnist_forward.3} parent=5 // pred_fallthru
      _
    %p124 = scmp.lt.s32.totalorder %s9, 2
    // Predicated region
    $region21: #{teacher_cnn_mnist_forward.3} parent=5 // pred_check
      %p125 = pneg %p124
    $region22: #{teacher_cnn_mnist_forward.3} parent=5 // pred_check_branch
      %127 = sbr.rel (%p125) target = $region24
    $region23: #{teacher_cnn_mnist_forward.3} parent=5 // pred_region
      // Predicated region
      $region25: #{teacher_cnn_mnist_forward.3} parent=23 // pred_check
        %p128 = pneg %p29
      $region26: #{teacher_cnn_mnist_forward.3} parent=23 // pred_check_branch
        %130 = sbr.rel (%p128) target = $region28
      $region27: #{teacher_cnn_mnist_forward.3} parent=23 // pred_region
        %s131 = smul.u32 32, %s9
        %p132 = scmp.lt.s32.totalorder %s131, 63
        %s133 = scalar_select %p132, %s131, 63
        %s134 = smul.addr %s133, 4
        %s135 = scalar_lea.vmem %s0, %s134
        %s136 = smul.u32 32, %s9
      $region28: #{teacher_cnn_mnist_forward.3} parent=23 // pred_fallthru
        _
    $region24: #{teacher_cnn_mnist_forward.3} parent=5 // pred_fallthru
      _
    %p137 = scmp.le.s32.totalorder 1, %s9
    %p138 = scmp.lt.s32.totalorder %s9, 3
    %p139 = pnand %p137, %p138
    %p140 = pneg %p139
    // Predicated region
    $region29: #{teacher_cnn_mnist_forward.3} parent=5 // pred_check
      _
    $region30: #{teacher_cnn_mnist_forward.3} parent=5 // pred_check_branch
      %142 = sbr.rel (%p139) target = $region32
    $region31: #{teacher_cnn_mnist_forward.3} parent=5 // pred_region
      %s143 = ssub.s32 %s9, 1
      %s144 = smul.u32 32, %s14
      %p145 = scmp.lt.s32.totalorder %s144, 63
      %s146 = scalar_select %p145, %s144, 63
      %s147 = smul.addr %s146, 4
      %s148 = scalar_lea.vmem %s0, %s147
      %p149 = pneg %p35
      %p150 = pneg %p32
      %p151 = pneg %p56
      %p152 = pneg %p53
      %p153 = pneg %p77
      %p154 = pneg %p74
      %p155 = pneg %p103
      %p156 = pneg %p100
      %s157 = smul.u32 32, %s14
      %p158 = scmp.lt.s32.totalorder %s157, 63
      %s159 = scalar_select %p158, %s157, 63
      %s160 = smul.addr %s159, 4
      %s161 = scalar_lea.vmem %s3, %s160
      %s162 = smul.u32 32, %s14
      %p163 = scmp.lt.s32.totalorder %s162, 63
      %s164 = scalar_select %p163, %s162, 63
      %s165 = smul.addr %s164, 4
      %s166 = scalar_lea.vmem %s0, %s165
      %s167 = smul.u32 32, %s14
      %s168 = smul.u32 32, %s14
      %p169 = scmp.lt.s32.totalorder %s168, 63
      %s170 = scalar_select %p169, %s168, 63
      %s171 = smul.addr %s170, 4
      %s172 = scalar_lea.vmem %s3, %s171
      %s173 = smul.u32 32, %s14
      %v175 = vld [vmem:[%s1] sm:$0xf]
      %v176 = vld [vmem:[%s1 + $0x4] sm:$0xf]
      %v177 = vld [vmem:[%s2] sm:$0x1]
      %v178 = vld [vmem:[%s166] sm:$0xf]
      %v179 = vld [vmem:[%s166 + $0x4] sm:$0xf]
      %v180 = vld [vmem:[%s166 + $0x8] sm:$0xf]
      %v181 = vld [vmem:[%s166 + $0xc] sm:$0xf]
      %v182 = vld [vmem:[%s166 + $0x10] sm:$0xf]
      %v183 = vld [vmem:[%s166 + $0x14] sm:$0xf]
      %v184 = vld [vmem:[%s166 + $0x18] sm:$0xf]
      %v185 = vld [vmem:[%s166 + $0x1c] sm:$0xf]
      %v186 = vld [vmem:[%s166 + $0x20] sm:$0xf]
      %v187 = vld [vmem:[%s166 + $0x24] sm:$0xf]
      %v188 = vld [vmem:[%s166 + $0x28] sm:$0xf]
      %v189 = vld [vmem:[%s166 + $0x2c] sm:$0xf]
      %v190 = vld [vmem:[%s166 + $0x30] sm:$0xf]
      %v191 = vld [vmem:[%s166 + $0x34] sm:$0xf]
      %v192 = vld [vmem:[%s166 + $0x38] sm:$0xf]
      %v193 = vld [vmem:[%s166 + $0x3c] sm:$0xf]
      %v194 = vld [vmem:[%s166 + $0x40] sm:$0xf]
      %v195 = vld [vmem:[%s166 + $0x44] sm:$0xf]
      %v196 = vld [vmem:[%s166 + $0x48] sm:$0xf]
      %v197 = vld [vmem:[%s166 + $0x4c] sm:$0xf]
      %v198 = vld [vmem:[%s166 + $0x50] sm:$0xf]
      %v199 = vld [vmem:[%s166 + $0x54] sm:$0xf]
      %v200 = vld [vmem:[%s166 + $0x58] sm:$0xf]
      %v201 = vld [vmem:[%s166 + $0x5c] sm:$0xf]
      %v202 = vld [vmem:[%s166 + $0x60] sm:$0xf]
      %v203 = vld [vmem:[%s166 + $0x64] sm:$0xf]
      %v204 = vld [vmem:[%s166 + $0x68] sm:$0xf]
      %v205 = vld [vmem:[%s166 + $0x6c] sm:$0xf]
      %v206 = vld [vmem:[%s166 + $0x70] sm:$0xf]
      %v207 = vld [vmem:[%s166 + $0x74] sm:$0xf]
      %v208 = vld [vmem:[%s166 + $0x78] sm:$0xf]
      %v209 = vld [vmem:[%s166 + $0x7c] sm:$0xf]
      %v211 = vlaneseq
      %v212 = vshrl.u32 %v211, 7
      %v213 = vsub.s32 0, %v212
      %v214 = vrot.slane %v177, %v213
      %v248 = vunpack.c.l.b16 %v178
      %v249 = vunpack.c.l.b16 %v179
      %v250 = vunpack.c.l.b16 %v180
      %v251 = vunpack.c.l.b16 %v181
      %v252 = vunpack.c.l.b16 %v182
      %v253 = vunpack.c.l.b16 %v183
      %v254 = vunpack.c.l.b16 %v184
      %v255 = vunpack.c.l.b16 %v185
      %v256 = vunpack.c.l.b16 %v186
      %v257 = vunpack.c.l.b16 %v187
      %v258 = vunpack.c.l.b16 %v188
      %v259 = vunpack.c.l.b16 %v189
      %v260 = vunpack.c.l.b16 %v190
      %v261 = vunpack.c.l.b16 %v191
      %v262 = vunpack.c.l.b16 %v192
      %v263 = vunpack.c.l.b16 %v193
      %v264 = vunpack.c.l.b16 %v194
      %v265 = vunpack.c.l.b16 %v195
      %v266 = vunpack.c.l.b16 %v196
      %v267 = vunpack.c.l.b16 %v197
      %v268 = vunpack.c.l.b16 %v198
      %v269 = vunpack.c.l.b16 %v199
      %v270 = vunpack.c.l.b16 %v200
      %v271 = vunpack.c.l.b16 %v201
      %v272 = vunpack.c.l.b16 %v202
      %v273 = vunpack.c.l.b16 %v203
      %v274 = vunpack.c.l.b16 %v204
      %v275 = vunpack.c.l.b16 %v205
      %v276 = vunpack.c.l.b16 %v206
      %v277 = vunpack.c.l.b16 %v207
      %v278 = vunpack.c.l.b16 %v208
      %v279 = vunpack.c.l.b16 %v209
      %v280 = vpack.c.b16 %v249, %v248
      %v281 = vpack.c.b16 %v251, %v250
      %v282 = vpack.c.b16 %v253, %v252
      %v283 = vpack.c.b16 %v255, %v254
      %v284 = vpack.c.b16 %v257, %v256
      %v285 = vpack.c.b16 %v259, %v258
      %v286 = vpack.c.b16 %v261, %v260
      %v287 = vpack.c.b16 %v263, %v262
      %v288 = vpack.c.b16 %v265, %v264
      %v289 = vpack.c.b16 %v267, %v266
      %v290 = vpack.c.b16 %v269, %v268
      %v291 = vpack.c.b16 %v271, %v270
      %v292 = vpack.c.b16 %v273, %v272
      %v293 = vpack.c.b16 %v275, %v274
      %v294 = vpack.c.b16 %v277, %v276
      %v295 = vpack.c.b16 %v279, %v278
      %v298 = vunpack.c.l.b16 %v175
      %v299 = vunpack.c.l.b16 %v176
      %v300 = vpack.c.b16 %v299, %v298
      %vm302 = vcmask 130048
      %v304 = vsel %vm302, %v280, 0
      %v307 = vsel %vm302, %v281, 0
      %v310 = vsel %vm302, %v282, 0
      %v313 = vsel %vm302, %v283, 0
      %v316 = vsel %vm302, %v284, 0
      %v319 = vsel %vm302, %v285, 0
      %v322 = vsel %vm302, %v286, 0
      %v325 = vsel %vm302, %v287, 0
      %v328 = vsel %vm302, %v288, 0
      %v331 = vsel %vm302, %v289, 0
      %v334 = vsel %vm302, %v290, 0
      %v337 = vsel %vm302, %v291, 0
      %v340 = vsel %vm302, %v292, 0
      %v343 = vsel %vm302, %v293, 0
      %v346 = vsel %vm302, %v294, 0
      %v349 = vsel %vm302, %v295, 0
      %351 = vmatprep.subr.bf16.mxu0 0
      %352 = vmatpush1.bf16.msra.mxu0 %v300
      %353 = vmatprep.subr.bf16.mxu0 0
      %354 = vmatpush1.bf16.msra.mxu0 0
      %355 = vmatprep.subr.bf16.mxu0 0
      %356 = vmatpush1.bf16.msra.mxu0 0
      %357 = vmatprep.subr.bf16.mxu0 0
      %358 = vmatpush1.bf16.msra.mxu0 0
      %359 = vmatprep.subr.bf16.mxu0 0
      %360 = vmatpush1.bf16.msra.mxu0 0
      %361 = vmatprep.subr.bf16.mxu0 0
      %362 = vmatpush1.bf16.msra.mxu0 0
      %363 = vmatprep.subr.bf16.mxu0 0
      %364 = vmatpush1.bf16.msra.mxu0 0
      %365 = vmatprep.subr.bf16.mxu0 0
      %366 = vmatpush1.bf16.msra.mxu0 0
      %367 = vmatprep.subr.bf16.mxu0 0
      %368 = vmatpush1.bf16.msra.mxu0 0
      %369 = vmatprep.subr.bf16.mxu0 0
      %370 = vmatpush1.bf16.msra.mxu0 0
      %371 = vmatprep.subr.bf16.mxu0 0
      %372 = vmatpush1.bf16.msra.mxu0 0
      %373 = vmatprep.subr.bf16.mxu0 0
      %374 = vmatpush1.bf16.msra.mxu0 0
      %375 = vmatprep.subr.bf16.mxu0 0
      %376 = vmatpush1.bf16.msra.mxu0 0
      %377 = vmatprep.subr.bf16.mxu0 0
      %378 = vmatpush1.bf16.msra.mxu0 0
      %379 = vmatprep.subr.bf16.mxu0 0
      %380 = vmatpush1.bf16.msra.mxu0 0
      %381 = vmatprep.subr.bf16.mxu0 0
      %382 = vmatpush1.bf16.msra.mxu0 0
      %383 = vmatprep.mubr.bf16.mxu0 0
      %384 = vmatmul.mubr.bf16.gmra.mrb[0].mxu0 %v304
      %v385 = vpop.f32.mrb[0].mxu0
      %v386 = vadd.f32 %v214, %v385
      %v387 = vpop.f32.mrb[0].mxu0
      %v388 = vpop.f32.mrb[0].mxu0
      %v389 = vadd.f32 %v214, %v388
      %v390 = vpop.f32.mrb[0].mxu0
      %391 = vmatprep.mubr.bf16.mxu0 0
      %392 = vmatmul.mubr.bf16.gmra.mrb[0].mxu0 %v307
      %v393 = vpop.f32.mrb[0].mxu0
      %v394 = vadd.f32 %v214, %v393
      %v395 = vpop.f32.mrb[0].mxu0
      %v396 = vpop.f32.mrb[0].mxu0
      %v397 = vadd.f32 %v214, %v396
      %v398 = vpop.f32.mrb[0].mxu0
      %399 = vmatprep.mubr.bf16.mxu0 0
      %400 = vmatmul.mubr.bf16.gmra.mrb[0].mxu0 %v310
      %v401 = vpop.f32.mrb[0].mxu0
      %v402 = vadd.f32 %v214, %v401
      %v403 = vpop.f32.mrb[0].mxu0
      %v404 = vpop.f32.mrb[0].mxu0
      %v405 = vadd.f32 %v214, %v404
      %v406 = vpop.f32.mrb[0].mxu0
      %407 = vmatprep.mubr.bf16.mxu0 0
      %408 = vmatmul.mubr.bf16.gmra.mrb[0].mxu0 %v313
      %v409 = vpop.f32.mrb[0].mxu0
      %v410 = vadd.f32 %v214, %v409
      %v411 = vpop.f32.mrb[0].mxu0
      %v412 = vpop.f32.mrb[0].mxu0
      %v413 = vadd.f32 %v214, %v412
      %v414 = vpop.f32.mrb[0].mxu0
      %415 = vmatprep.mubr.bf16.mxu0 0
      %416 = vmatmul.mubr.bf16.gmra.mrb[0].mxu0 %v316
      %v417 = vpop.f32.mrb[0].mxu0
      %v418 = vadd.f32 %v214, %v417
      %v419 = vpop.f32.mrb[0].mxu0
      %v420 = vpop.f32.mrb[0].mxu0
      %v421 = vadd.f32 %v214, %v420
      %v422 = vpop.f32.mrb[0].mxu0
      %423 = vmatprep.mubr.bf16.mxu0 0
      %424 = vmatmul.mubr.bf16.gmra.mrb[0].mxu0 %v319
      %v425 = vpop.f32.mrb[0].mxu0
      %v426 = vadd.f32 %v214, %v425
      %v427 = vpop.f32.mrb[0].mxu0
      %v428 = vpop.f32.mrb[0].mxu0
      %v429 = vadd.f32 %v214, %v428
      %v430 = vpop.f32.mrb[0].mxu0
      %431 = vmatprep.mubr.bf16.mxu0 0
      %432 = vmatmul.mubr.bf16.gmra.mrb[0].mxu0 %v322
      %v433 = vpop.f32.mrb[0].mxu0
      %v434 = vadd.f32 %v214, %v433
      %v435 = vpop.f32.mrb[0].mxu0
      %v436 = vpop.f32.mrb[0].mxu0
      %v437 = vadd.f32 %v214, %v436
      %v438 = vpop.f32.mrb[0].mxu0
      %439 = vmatprep.mubr.bf16.mxu0 0
      %440 = vmatmul.mubr.bf16.gmra.mrb[0].mxu0 %v325
      %v441 = vpop.f32.mrb[0].mxu0
      %v442 = vadd.f32 %v214, %v441
      %v443 = vpop.f32.mrb[0].mxu0
      %v444 = vpop.f32.mrb[0].mxu0
      %v445 = vadd.f32 %v214, %v444
      %v446 = vpop.f32.mrb[0].mxu0
      %447 = vmatprep.mubr.bf16.mxu0 0
      %448 = vmatmul.mubr.bf16.gmra.mrb[0].mxu0 %v328
      %v449 = vpop.f32.mrb[0].mxu0
      %v450 = vadd.f32 %v214, %v449
      %v451 = vpop.f32.mrb[0].mxu0
      %v452 = vpop.f32.mrb[0].mxu0
      %v453 = vadd.f32 %v214, %v452
      %v454 = vpop.f32.mrb[0].mxu0
      %455 = vmatprep.mubr.bf16.mxu0 0
      %456 = vmatmul.mubr.bf16.gmra.mrb[0].mxu0 %v331
      %v457 = vpop.f32.mrb[0].mxu0
      %v458 = vadd.f32 %v214, %v457
      %v459 = vpop.f32.mrb[0].mxu0
      %v460 = vpop.f32.mrb[0].mxu0
      %v461 = vadd.f32 %v214, %v460
      %v462 = vpop.f32.mrb[0].mxu0
      %463 = vmatprep.mubr.bf16.mxu0 0
      %464 = vmatmul.mubr.bf16.gmra.mrb[0].mxu0 %v334
      %v465 = vpop.f32.mrb[0].mxu0
      %v466 = vadd.f32 %v214, %v465
      %v467 = vpop.f32.mrb[0].mxu0
      %v468 = vpop.f32.mrb[0].mxu0
      %v469 = vadd.f32 %v214, %v468
      %v470 = vpop.f32.mrb[0].mxu0
      %471 = vmatprep.mubr.bf16.mxu0 0
      %472 = vmatmul.mubr.bf16.gmra.mrb[0].mxu0 %v337
      %v473 = vpop.f32.mrb[0].mxu0
      %v474 = vadd.f32 %v214, %v473
      %v475 = vpop.f32.mrb[0].mxu0
      %v476 = vpop.f32.mrb[0].mxu0
      %v477 = vadd.f32 %v214, %v476
      %v478 = vpop.f32.mrb[0].mxu0
      %479 = vmatprep.mubr.bf16.mxu0 0
      %480 = vmatmul.mubr.bf16.gmra.mrb[0].mxu0 %v340
      %v481 = vpop.f32.mrb[0].mxu0
      %v482 = vadd.f32 %v214, %v481
      %v483 = vpop.f32.mrb[0].mxu0
      %v484 = vpop.f32.mrb[0].mxu0
      %v485 = vadd.f32 %v214, %v484
      %v486 = vpop.f32.mrb[0].mxu0
      %487 = vmatprep.mubr.bf16.mxu0 0
      %488 = vmatmul.mubr.bf16.gmra.mrb[0].mxu0 %v343
      %v489 = vpop.f32.mrb[0].mxu0
      %v490 = vadd.f32 %v214, %v489
      %v491 = vpop.f32.mrb[0].mxu0
      %v492 = vpop.f32.mrb[0].mxu0
      %v493 = vadd.f32 %v214, %v492
      %v494 = vpop.f32.mrb[0].mxu0
      %495 = vmatprep.mubr.bf16.mxu0 0
      %496 = vmatmul.mubr.bf16.gmra.mrb[0].mxu0 %v346
      %v497 = vpop.f32.mrb[0].mxu0
      %v498 = vadd.f32 %v214, %v497
      %v499 = vpop.f32.mrb[0].mxu0
      %v500 = vpop.f32.mrb[0].mxu0
      %v501 = vadd.f32 %v214, %v500
      %v502 = vpop.f32.mrb[0].mxu0
      %503 = vmatprep.mubr.bf16.mxu0 0
      %504 = vmatmul.mubr.bf16.gmra.mrb[0].mxu0 %v349
      %v505 = vpop.f32.mrb[0].mxu0
      %v506 = vadd.f32 %v214, %v505
      %v507 = vpop.f32.mrb[0].mxu0
      %v508 = vpop.f32.mrb[0].mxu0
      %v509 = vadd.f32 %v214, %v508
      %v510 = vpop.f32.mrb[0].mxu0
      %511 = vdwg.mxu0
      %v512 = vmax.f32 %v386, 0.0
      %v513 = vmax.f32 %v389, 0.0
      %v514 = vmax.f32 %v394, 0.0
      %v515 = vmax.f32 %v397, 0.0
      %v516 = vmax.f32 %v402, 0.0
      %v517 = vmax.f32 %v405, 0.0
      %v518 = vmax.f32 %v410, 0.0
      %v519 = vmax.f32 %v413, 0.0
      %v520 = vmax.f32 %v418, 0.0
      %v521 = vmax.f32 %v421, 0.0
      %v522 = vmax.f32 %v426, 0.0
      %v523 = vmax.f32 %v429, 0.0
      %v524 = vmax.f32 %v434, 0.0
      %v525 = vmax.f32 %v437, 0.0
      %v526 = vmax.f32 %v442, 0.0
      %v527 = vmax.f32 %v445, 0.0
      %v528 = vmax.f32 %v450, 0.0
      %v529 = vmax.f32 %v453, 0.0
      %v530 = vmax.f32 %v458, 0.0
      %v531 = vmax.f32 %v461, 0.0
      %v532 = vmax.f32 %v466, 0.0
      %v533 = vmax.f32 %v469, 0.0
      %v534 = vmax.f32 %v474, 0.0
      %v535 = vmax.f32 %v477, 0.0
      %v536 = vmax.f32 %v482, 0.0
      %v537 = vmax.f32 %v485, 0.0
      %v538 = vmax.f32 %v490, 0.0
      %v539 = vmax.f32 %v493, 0.0
      %v540 = vmax.f32 %v498, 0.0
      %v541 = vmax.f32 %v501, 0.0
      %v542 = vmax.f32 %v506, 0.0
      %v543 = vmax.f32 %v509, 0.0
      %544 = vrot.lane.b32.xlu0 %v280, 112
      %v545 = vpop.permute.xlu0 %544
      %546 = vrot.lane.b32.xlu0 %v281, 112
      %v547 = vpop.permute.xlu0 %546
      %548 = vrot.lane.b32.xlu0 %v282, 112
      %v549 = vpop.permute.xlu0 %548
      %550 = vrot.lane.b32.xlu0 %v283, 112
      %v551 = vpop.permute.xlu0 %550
      %552 = vrot.lane.b32.xlu0 %v284, 112
      %v553 = vpop.permute.xlu0 %552
      %554 = vrot.lane.b32.xlu0 %v285, 112
      %v555 = vpop.permute.xlu0 %554
      %556 = vrot.lane.b32.xlu0 %v286, 112
      %v557 = vpop.permute.xlu0 %556
      %558 = vrot.lane.b32.xlu0 %v287, 112
      %v559 = vpop.permute.xlu0 %558
      %560 = vrot.lane.b32.xlu0 %v288, 112
      %v561 = vpop.permute.xlu0 %560
      %562 = vrot.lane.b32.xlu0 %v289, 112
      %v563 = vpop.permute.xlu0 %562
      %564 = vrot.lane.b32.xlu0 %v290, 112
      %v565 = vpop.permute.xlu0 %564
      %566 = vrot.lane.b32.xlu0 %v291, 112
      %v567 = vpop.permute.xlu0 %566
      %568 = vrot.lane.b32.xlu0 %v292, 112
      %v569 = vpop.permute.xlu0 %568
      %570 = vrot.lane.b32.xlu0 %v293, 112
      %v571 = vpop.permute.xlu0 %570
      %572 = vrot.lane.b32.xlu0 %v294, 112
      %v573 = vpop.permute.xlu0 %572
      %574 = vrot.lane.b32.xlu0 %v295, 112
      %v575 = vpop.permute.xlu0 %574
      %v577 = vsel %vm302, %v545, 0
      %v580 = vsel %vm302, %v547, 0
      %v583 = vsel %vm302, %v549, 0
      %v586 = vsel %vm302, %v551, 0
      %v589 = vsel %vm302, %v553, 0
      %v592 = vsel %vm302, %v555, 0
      %v595 = vsel %vm302, %v557, 0
      %v598 = vsel %vm302, %v559, 0
      %v601 = vsel %vm302, %v561, 0
      %v604 = vsel %vm302, %v563, 0
      %v607 = vsel %vm302, %v565, 0
      %v610 = vsel %vm302, %v567, 0
      %v613 = vsel %vm302, %v569, 0
      %v616 = vsel %vm302, %v571, 0
      %v619 = vsel %vm302, %v573, 0
      %v622 = vsel %vm302, %v575, 0
      %624 = vmatprep.subr.bf16.mxu0 0
      %625 = vmatpush1.bf16.msra.mxu0 %v300
      %626 = vmatprep.subr.bf16.mxu0 0
      %627 = vmatpush1.bf16.msra.mxu0 0
      %628 = vmatprep.subr.bf16.mxu0 0
      %629 = vmatpush1.bf16.msra.mxu0 0
      %630 = vmatprep.subr.bf16.mxu0 0
      %631 = vmatpush1.bf16.msra.mxu0 0
      %632 = vmatprep.subr.bf16.mxu0 0
      %633 = vmatpush1.bf16.msra.mxu0 0
      %634 = vmatprep.subr.bf16.mxu0 0
      %635 = vmatpush1.bf16.msra.mxu0 0
      %636 = vmatprep.subr.bf16.mxu0 0
      %637 = vmatpush1.bf16.msra.mxu0 0
      %638 = vmatprep.subr.bf16.mxu0 0
      %639 = vmatpush1.bf16.msra.mxu0 0
      %640 = vmatprep.subr.bf16.mxu0 0
      %641 = vmatpush1.bf16.msra.mxu0 0
      %642 = vmatprep.subr.bf16.mxu0 0
      %643 = vmatpush1.bf16.msra.mxu0 0
      %644 = vmatprep.subr.bf16.mxu0 0
      %645 = vmatpush1.bf16.msra.mxu0 0
      %646 = vmatprep.subr.bf16.mxu0 0
      %647 = vmatpush1.bf16.msra.mxu0 0
      %648 = vmatprep.subr.bf16.mxu0 0
      %649 = vmatpush1.bf16.msra.mxu0 0
      %650 = vmatprep.subr.bf16.mxu0 0
      %651 = vmatpush1.bf16.msra.mxu0 0
      %652 = vmatprep.subr.bf16.mxu0 0
      %653 = vmatpush1.bf16.msra.mxu0 0
      %654 = vmatprep.subr.bf16.mxu0 0
      %655 = vmatpush1.bf16.msra.mxu0 0
      %656 = vmatprep.mubr.bf16.mxu0 0
      %657 = vmatmul.mubr.bf16.gmra.mrb[0].mxu0 %v577
      %v658 = vpop.f32.mrb[0].mxu0
      %v659 = vadd.f32 %v214, %v658
      %v660 = vpop.f32.mrb[0].mxu0
      %v661 = vpop.f32.mrb[0].mxu0
      %v662 = vadd.f32 %v214, %v661
      %v663 = vpop.f32.mrb[0].mxu0
      %664 = vmatprep.mubr.bf16.mxu0 0
      %665 = vmatmul.mubr.bf16.gmra.mrb[0].mxu0 %v580
      %v666 = vpop.f32.mrb[0].mxu0
      %v667 = vadd.f32 %v214, %v666
      %v668 = vpop.f32.mrb[0].mxu0
      %v669 = vpop.f32.mrb[0].mxu0
      %v670 = vadd.f32 %v214, %v669
      %v671 = vpop.f32.mrb[0].mxu0
      %672 = vmatprep.mubr.bf16.mxu0 0
      %673 = vmatmul.mubr.bf16.gmra.mrb[0].mxu0 %v583
      %v674 = vpop.f32.mrb[0].mxu0
      %v675 = vadd.f32 %v214, %v674
      %v676 = vpop.f32.mrb[0].mxu0
      %v677 = vpop.f32.mrb[0].mxu0
      %v678 = vadd.f32 %v214, %v677
      %v679 = vpop.f32.mrb[0].mxu0
      %680 = vmatprep.mubr.bf16.mxu0 0
      %681 = vmatmul.mubr.bf16.gmra.mrb[0].mxu0 %v586
      %v682 = vpop.f32.mrb[0].mxu0
      %v683 = vadd.f32 %v214, %v682
      %v684 = vpop.f32.mrb[0].mxu0
      %v685 = vpop.f32.mrb[0].mxu0
      %v686 = vadd.f32 %v214, %v685
      %v687 = vpop.f32.mrb[0].mxu0
      %688 = vmatprep.mubr.bf16.mxu0 0
      %689 = vmatmul.mubr.bf16.gmra.mrb[0].mxu0 %v589
      %v690 = vpop.f32.mrb[0].mxu0
      %v691 = vadd.f32 %v214, %v690
      %v692 = vpop.f32.mrb[0].mxu0
      %v693 = vpop.f32.mrb[0].mxu0
      %v694 = vadd.f32 %v214, %v693
      %v695 = vpop.f32.mrb[0].mxu0
      %696 = vmatprep.mubr.bf16.mxu0 0
      %697 = vmatmul.mubr.bf16.gmra.mrb[0].mxu0 %v592
      %v698 = vpop.f32.mrb[0].mxu0
      %v699 = vadd.f32 %v214, %v698
      %v700 = vpop.f32.mrb[0].mxu0
      %v701 = vpop.f32.mrb[0].mxu0
      %v702 = vadd.f32 %v214, %v701
      %v703 = vpop.f32.mrb[0].mxu0
      %704 = vmatprep.mubr.bf16.mxu0 0
      %705 = vmatmul.mubr.bf16.gmra.mrb[0].mxu0 %v595
      %v706 = vpop.f32.mrb[0].mxu0
      %v707 = vadd.f32 %v214, %v706
      %v708 = vpop.f32.mrb[0].mxu0
      %v709 = vpop.f32.mrb[0].mxu0
      %v710 = vadd.f32 %v214, %v709
      %v711 = vpop.f32.mrb[0].mxu0
      %712 = vmatprep.mubr.bf16.mxu0 0
      %713 = vmatmul.mubr.bf16.gmra.mrb[0].mxu0 %v598
      %v714 = vpop.f32.mrb[0].mxu0
      %v715 = vadd.f32 %v214, %v714
      %v716 = vpop.f32.mrb[0].mxu0
      %v717 = vpop.f32.mrb[0].mxu0
      %v718 = vadd.f32 %v214, %v717
      %v719 = vpop.f32.mrb[0].mxu0
      %720 = vmatprep.mubr.bf16.mxu0 0
      %721 = vmatmul.mubr.bf16.gmra.mrb[0].mxu0 %v601
      %v722 = vpop.f32.mrb[0].mxu0
      %v723 = vadd.f32 %v214, %v722
      %v724 = vpop.f32.mrb[0].mxu0
      %v725 = vpop.f32.mrb[0].mxu0
      %v726 = vadd.f32 %v214, %v725
      %v727 = vpop.f32.mrb[0].mxu0
      %728 = vmatprep.mubr.bf16.mxu0 0
      %729 = vmatmul.mubr.bf16.gmra.mrb[0].mxu0 %v604
      %v730 = vpop.f32.mrb[0].mxu0
      %v731 = vadd.f32 %v214, %v730
      %v732 = vpop.f32.mrb[0].mxu0
      %v733 = vpop.f32.mrb[0].mxu0
      %v734 = vadd.f32 %v214, %v733
      %v735 = vpop.f32.mrb[0].mxu0
      %736 = vmatprep.mubr.bf16.mxu0 0
      %737 = vmatmul.mubr.bf16.gmra.mrb[0].mxu0 %v607
      %v738 = vpop.f32.mrb[0].mxu0
      %v739 = vadd.f32 %v214, %v738
      %v740 = vpop.f32.mrb[0].mxu0
      %v741 = vpop.f32.mrb[0].mxu0
      %v742 = vadd.f32 %v214, %v741
      %v743 = vpop.f32.mrb[0].mxu0
      %744 = vmatprep.mubr.bf16.mxu0 0
      %745 = vmatmul.mubr.bf16.gmra.mrb[0].mxu0 %v610
      %v746 = vpop.f32.mrb[0].mxu0
      %v747 = vadd.f32 %v214, %v746
      %v748 = vpop.f32.mrb[0].mxu0
      %v749 = vpop.f32.mrb[0].mxu0
      %v750 = vadd.f32 %v214, %v749
      %v751 = vpop.f32.mrb[0].mxu0
      %752 = vmatprep.mubr.bf16.mxu0 0
      %753 = vmatmul.mubr.bf16.gmra.mrb[0].mxu0 %v613
      %v754 = vpop.f32.mrb[0].mxu0
      %v755 = vadd.f32 %v214, %v754
      %v756 = vpop.f32.mrb[0].mxu0
      %v757 = vpop.f32.mrb[0].mxu0
      %v758 = vadd.f32 %v214, %v757
      %v759 = vpop.f32.mrb[0].mxu0
      %760 = vmatprep.mubr.bf16.mxu0 0
      %761 = vmatmul.mubr.bf16.gmra.mrb[0].mxu0 %v616
      %v762 = vpop.f32.mrb[0].mxu0
      %v763 = vadd.f32 %v214, %v762
      %v764 = vpop.f32.mrb[0].mxu0
      %v765 = vpop.f32.mrb[0].mxu0
      %v766 = vadd.f32 %v214, %v765
      %v767 = vpop.f32.mrb[0].mxu0
      %768 = vmatprep.mubr.bf16.mxu0 0
      %769 = vmatmul.mubr.bf16.gmra.mrb[0].mxu0 %v619
      %v770 = vpop.f32.mrb[0].mxu0
      %v771 = vadd.f32 %v214, %v770
      %v772 = vpop.f32.mrb[0].mxu0
      %v773 = vpop.f32.mrb[0].mxu0
      %v774 = vadd.f32 %v214, %v773
      %v775 = vpop.f32.mrb[0].mxu0
      %776 = vmatprep.mubr.bf16.mxu0 0
      %777 = vmatmul.mubr.bf16.gmra.mrb[0].mxu0 %v622
      %v778 = vpop.f32.mrb[0].mxu0
      %v779 = vadd.f32 %v214, %v778
      %v780 = vpop.f32.mrb[0].mxu0
      %v781 = vpop.f32.mrb[0].mxu0
      %v782 = vadd.f32 %v214, %v781
      %v783 = vpop.f32.mrb[0].mxu0
      %784 = vdwg.mxu0
      %v785 = vmax.f32 %v659, 0.0
      %v786 = vmax.f32 %v662, 0.0
      %v787 = vmax.f32 %v667, 0.0
      %v788 = vmax.f32 %v670, 0.0
      %v789 = vmax.f32 %v675, 0.0
      %v790 = vmax.f32 %v678, 0.0
      %v791 = vmax.f32 %v683, 0.0
      %v792 = vmax.f32 %v686, 0.0
      %v793 = vmax.f32 %v691, 0.0
      %v794 = vmax.f32 %v694, 0.0
      %v795 = vmax.f32 %v699, 0.0
      %v796 = vmax.f32 %v702, 0.0
      %v797 = vmax.f32 %v707, 0.0
      %v798 = vmax.f32 %v710, 0.0
      %v799 = vmax.f32 %v715, 0.0
      %v800 = vmax.f32 %v718, 0.0
      %v801 = vmax.f32 %v723, 0.0
      %v802 = vmax.f32 %v726, 0.0
      %v803 = vmax.f32 %v731, 0.0
      %v804 = vmax.f32 %v734, 0.0
      %v805 = vmax.f32 %v739, 0.0
      %v806 = vmax.f32 %v742, 0.0
      %v807 = vmax.f32 %v747, 0.0
      %v808 = vmax.f32 %v750, 0.0
      %v809 = vmax.f32 %v755, 0.0
      %v810 = vmax.f32 %v758, 0.0
      %v811 = vmax.f32 %v763, 0.0
      %v812 = vmax.f32 %v766, 0.0
      %v813 = vmax.f32 %v771, 0.0
      %v814 = vmax.f32 %v774, 0.0
      %v815 = vmax.f32 %v779, 0.0
      %v816 = vmax.f32 %v782, 0.0
      %v817 = vmax.f32 %v512, %v785
      %v818 = vmax.f32 %v513, %v786
      %v819 = vmax.f32 %v514, %v787
      %v820 = vmax.f32 %v515, %v788
      %v821 = vmax.f32 %v516, %v789
      %v822 = vmax.f32 %v517, %v790
      %v823 = vmax.f32 %v518, %v791
      %v824 = vmax.f32 %v519, %v792
      %v825 = vmax.f32 %v520, %v793
      %v826 = vmax.f32 %v521, %v794
      %v827 = vmax.f32 %v522, %v795
      %v828 = vmax.f32 %v523, %v796
      %v829 = vmax.f32 %v524, %v797
      %v830 = vmax.f32 %v525, %v798
      %v831 = vmax.f32 %v526, %v799
      %v832 = vmax.f32 %v527, %v800
      %v833 = vmax.f32 %v528, %v801
      %v834 = vmax.f32 %v529, %v802
      %v835 = vmax.f32 %v530, %v803
      %v836 = vmax.f32 %v531, %v804
      %v837 = vmax.f32 %v532, %v805
      %v838 = vmax.f32 %v533, %v806
      %v839 = vmax.f32 %v534, %v807
      %v840 = vmax.f32 %v535, %v808
      %v841 = vmax.f32 %v536, %v809
      %v842 = vmax.f32 %v537, %v810
      %v843 = vmax.f32 %v538, %v811
      %v844 = vmax.f32 %v539, %v812
      %v845 = vmax.f32 %v540, %v813
      %v846 = vmax.f32 %v541, %v814
      %v847 = vmax.f32 %v542, %v815
      %v848 = vmax.f32 %v543, %v816
      %849 = vrot.lane.b32.xlu0 %v280, 96
      %v850 = vpop.permute.xlu0 %849
      %851 = vrot.lane.b32.xlu0 %v281, 96
      %v852 = vpop.permute.xlu0 %851
      %853 = vrot.lane.b32.xlu0 %v282, 96
      %v854 = vpop.permute.xlu0 %853
      %855 = vrot.lane.b32.xlu0 %v283, 96
      %v856 = vpop.permute.xlu0 %855
      %857 = vrot.lane.b32.xlu0 %v284, 96
      %v858 = vpop.permute.xlu0 %857
      %859 = vrot.lane.b32.xlu0 %v285, 96
      %v860 = vpop.permute.xlu0 %859
      %861 = vrot.lane.b32.xlu0 %v286, 96
      %v862 = vpop.permute.xlu0 %861
      %863 = vrot.lane.b32.xlu0 %v287, 96
      %v864 = vpop.permute.xlu0 %863
      %865 = vrot.lane.b32.xlu0 %v288, 96
      %v866 = vpop.permute.xlu0 %865
      %867 = vrot.lane.b32.xlu0 %v289, 96
      %v868 = vpop.permute.xlu0 %867
      %869 = vrot.lane.b32.xlu0 %v290, 96
      %v870 = vpop.permute.xlu0 %869
      %871 = vrot.lane.b32.xlu0 %v291, 96
      %v872 = vpop.permute.xlu0 %871
      %873 = vrot.lane.b32.xlu0 %v292, 96
      %v874 = vpop.permute.xlu0 %873
      %875 = vrot.lane.b32.xlu0 %v293, 96
      %v876 = vpop.permute.xlu0 %875
      %877 = vrot.lane.b32.xlu0 %v294, 96
      %v878 = vpop.permute.xlu0 %877
      %879 = vrot.lane.b32.xlu0 %v295, 96
      %v880 = vpop.permute.xlu0 %879
      %v882 = vsel %vm302, %v850, 0
      %v885 = vsel %vm302, %v852, 0
      %v888 = vsel %vm302, %v854, 0
      %v891 = vsel %vm302, %v856, 0
      %v894 = vsel %vm302, %v858, 0
      %v897 = vsel %vm302, %v860, 0
      %v900 = vsel %vm302, %v862, 0
      %v903 = vsel %vm302, %v864, 0
      %v906 = vsel %vm302, %v866, 0
      %v909 = vsel %vm302, %v868, 0
      %v912 = vsel %vm302, %v870, 0
      %v915 = vsel %vm302, %v872, 0
      %v918 = vsel %vm302, %v874, 0
      %v921 = vsel %vm302, %v876, 0
      %v924 = vsel %vm302, %v878, 0
      %v927 = vsel %vm302, %v880, 0
      %929 = vmatprep.subr.bf16.mxu0 0
      %930 = vmatpush1.bf16.msra.mxu0 %v300
      %931 = vmatprep.subr.bf16.mxu0 0
      %932 = vmatpush1.bf16.msra.mxu0 0
      %933 = vmatprep.subr.bf16.mxu0 0
      %934 = vmatpush1.bf16.msra.mxu0 0
      %935 = vmatprep.subr.bf16.mxu0 0
      %936 = vmatpush1.bf16.msra.mxu0 0
      %937 = vmatprep.subr.bf16.mxu0 0
      %938 = vmatpush1.bf16.msra.mxu0 0
      %939 = vmatprep.subr.bf16.mxu0 0
      %940 = vmatpush1.bf16.msra.mxu0 0
      %941 = vmatprep.subr.bf16.mxu0 0
      %942 = vmatpush1.bf16.msra.mxu0 0
      %943 = vmatprep.subr.bf16.mxu0 0
      %944 = vmatpush1.bf16.msra.mxu0 0
      %945 = vmatprep.subr.bf16.mxu0 0
      %946 = vmatpush1.bf16.msra.mxu0 0
      %947 = vmatprep.subr.bf16.mxu0 0
      %948 = vmatpush1.bf16.msra.mxu0 0
      %949 = vmatprep.subr.bf16.mxu0 0
      %950 = vmatpush1.bf16.msra.mxu0 0
      %951 = vmatprep.subr.bf16.mxu0 0
      %952 = vmatpush1.bf16.msra.mxu0 0
      %953 = vmatprep.subr.bf16.mxu0 0
      %954 = vmatpush1.bf16.msra.mxu0 0
      %955 = vmatprep.subr.bf16.mxu0 0
      %956 = vmatpush1.bf16.msra.mxu0 0
      %957 = vmatprep.subr.bf16.mxu0 0
      %958 = vmatpush1.bf16.msra.mxu0 0
      %959 = vmatprep.subr.bf16.mxu0 0
      %960 = vmatpush1.bf16.msra.mxu0 0
      %961 = vmatprep.mubr.bf16.mxu0 0
      %962 = vmatmul.mubr.bf16.gmra.mrb[0].mxu0 %v882
      %v963 = vpop.f32.mrb[0].mxu0
      %v964 = vadd.f32 %v214, %v963
      %v965 = vpop.f32.mrb[0].mxu0
      %v966 = vpop.f32.mrb[0].mxu0
      %v967 = vadd.f32 %v214, %v966
      %v968 = vpop.f32.mrb[0].mxu0
      %969 = vmatprep.mubr.bf16.mxu0 0
      %970 = vmatmul.mubr.bf16.gmra.mrb[0].mxu0 %v885
      %v971 = vpop.f32.mrb[0].mxu0
      %v972 = vadd.f32 %v214, %v971
      %v973 = vpop.f32.mrb[0].mxu0
      %v974 = vpop.f32.mrb[0].mxu0
      %v975 = vadd.f32 %v214, %v974
      %v976 = vpop.f32.mrb[0].mxu0
      %977 = vmatprep.mubr.bf16.mxu0 0
      %978 = vmatmul.mubr.bf16.gmra.mrb[0].mxu0 %v888
      %v979 = vpop.f32.mrb[0].mxu0
      %v980 = vadd.f32 %v214, %v979
      %v981 = vpop.f32.mrb[0].mxu0
      %v982 = vpop.f32.mrb[0].mxu0
      %v983 = vadd.f32 %v214, %v982
      %v984 = vpop.f32.mrb[0].mxu0
      %985 = vmatprep.mubr.bf16.mxu0 0
      %986 = vmatmul.mubr.bf16.gmra.mrb[0].mxu0 %v891
      %v987 = vpop.f32.mrb[0].mxu0
      %v988 = vadd.f32 %v214, %v987
      %v989 = vpop.f32.mrb[0].mxu0
      %v990 = vpop.f32.mrb[0].mxu0
      %v991 = vadd.f32 %v214, %v990
      %v992 = vpop.f32.mrb[0].mxu0
      %993 = vmatprep.mubr.bf16.mxu0 0
      %994 = vmatmul.mubr.bf16.gmra.mrb[0].mxu0 %v894
      %v995 = vpop.f32.mrb[0].mxu0
      %v996 = vadd.f32 %v214, %v995
      %v997 = vpop.f32.mrb[0].mxu0
      %v998 = vpop.f32.mrb[0].mxu0
      %v999 = vadd.f32 %v214, %v998
      %v1000 = vpop.f32.mrb[0].mxu0
      %1001 = vmatprep.mubr.bf16.mxu0 0
      %1002 = vmatmul.mubr.bf16.gmra.mrb[0].mxu0 %v897
      %v1003 = vpop.f32.mrb[0].mxu0
      %v1004 = vadd.f32 %v214, %v1003
      %v1005 = vpop.f32.mrb[0].mxu0
      %v1006 = vpop.f32.mrb[0].mxu0
      %v1007 = vadd.f32 %v214, %v1006
      %v1008 = vpop.f32.mrb[0].mxu0
      %1009 = vmatprep.mubr.bf16.mxu0 0
      %1010 = vmatmul.mubr.bf16.gmra.mrb[0].mxu0 %v900
      %v1011 = vpop.f32.mrb[0].mxu0
      %v1012 = vadd.f32 %v214, %v1011
      %v1013 = vpop.f32.mrb[0].mxu0
      %v1014 = vpop.f32.mrb[0].mxu0
      %v1015 = vadd.f32 %v214, %v1014
      %v1016 = vpop.f32.mrb[0].mxu0
      %1017 = vmatprep.mubr.bf16.mxu0 0
      %1018 = vmatmul.mubr.bf16.gmra.mrb[0].mxu0 %v903
      %v1019 = vpop.f32.mrb[0].mxu0
      %v1020 = vadd.f32 %v214, %v1019
      %v1021 = vpop.f32.mrb[0].mxu0
      %v1022 = vpop.f32.mrb[0].mxu0
      %v1023 = vadd.f32 %v214, %v1022
      %v1024 = vpop.f32.mrb[0].mxu0
      %1025 = vmatprep.mubr.bf16.mxu0 0
      %1026 = vmatmul.mubr.bf16.gmra.mrb[0].mxu0 %v906
      %v1027 = vpop.f32.mrb[0].mxu0
      %v1028 = vadd.f32 %v214, %v1027
      %v1029 = vpop.f32.mrb[0].mxu0
      %v1030 = vpop.f32.mrb[0].mxu0
      %v1031 = vadd.f32 %v214, %v1030
      %v1032 = vpop.f32.mrb[0].mxu0
      %1033 = vmatprep.mubr.bf16.mxu0 0
      %1034 = vmatmul.mubr.bf16.gmra.mrb[0].mxu0 %v909
      %v1035 = vpop.f32.mrb[0].mxu0
      %v1036 = vadd.f32 %v214, %v1035
      %v1037 = vpop.f32.mrb[0].mxu0
      %v1038 = vpop.f32.mrb[0].mxu0
      %v1039 = vadd.f32 %v214, %v1038
      %v1040 = vpop.f32.mrb[0].mxu0
      %1041 = vmatprep.mubr.bf16.mxu0 0
      %1042 = vmatmul.mubr.bf16.gmra.mrb[0].mxu0 %v912
      %v1043 = vpop.f32.mrb[0].mxu0
      %v1044 = vadd.f32 %v214, %v1043
      %v1045 = vpop.f32.mrb[0].mxu0
      %v1046 = vpop.f32.mrb[0].mxu0
      %v1047 = vadd.f32 %v214, %v1046
      %v1048 = vpop.f32.mrb[0].mxu0
      %1049 = vmatprep.mubr.bf16.mxu0 0
      %1050 = vmatmul.mubr.bf16.gmra.mrb[0].mxu0 %v915
      %v1051 = vpop.f32.mrb[0].mxu0
      %v1052 = vadd.f32 %v214, %v1051
      %v1053 = vpop.f32.mrb[0].mxu0
      %v1054 = vpop.f32.mrb[0].mxu0
      %v1055 = vadd.f32 %v214, %v1054
      %v1056 = vpop.f32.mrb[0].mxu0
      %1057 = vmatprep.mubr.bf16.mxu0 0
      %1058 = vmatmul.mubr.bf16.gmra.mrb[0].mxu0 %v918
      %v1059 = vpop.f32.mrb[0].mxu0
      %v1060 = vadd.f32 %v214, %v1059
      %v1061 = vpop.f32.mrb[0].mxu0
      %v1062 = vpop.f32.mrb[0].mxu0
      %v1063 = vadd.f32 %v214, %v1062
      %v1064 = vpop.f32.mrb[0].mxu0
      %1065 = vmatprep.mubr.bf16.mxu0 0
      %1066 = vmatmul.mubr.bf16.gmra.mrb[0].mxu0 %v921
      %v1067 = vpop.f32.mrb[0].mxu0
      %v1068 = vadd.f32 %v214, %v1067
      %v1069 = vpop.f32.mrb[0].mxu0
      %v1070 = vpop.f32.mrb[0].mxu0
      %v1071 = vadd.f32 %v214, %v1070
      %v1072 = vpop.f32.mrb[0].mxu0
      %1073 = vmatprep.mubr.bf16.mxu0 0
      %1074 = vmatmul.mubr.bf16.gmra.mrb[0].mxu0 %v924
      %v1075 = vpop.f32.mrb[0].mxu0
      %v1076 = vadd.f32 %v214, %v1075
      %v1077 = vpop.f32.mrb[0].mxu0
      %v1078 = vpop.f32.mrb[0].mxu0
      %v1079 = vadd.f32 %v214, %v1078
      %v1080 = vpop.f32.mrb[0].mxu0
      %1081 = vmatprep.mubr.bf16.mxu0 0
      %1082 = vmatmul.mubr.bf16.gmra.mrb[0].mxu0 %v927
      %v1083 = vpop.f32.mrb[0].mxu0
      %v1084 = vadd.f32 %v214, %v1083
      %v1085 = vpop.f32.mrb[0].mxu0
      %v1086 = vpop.f32.mrb[0].mxu0
      %v1087 = vadd.f32 %v214, %v1086
      %v1088 = vpop.f32.mrb[0].mxu0
      %1089 = vdwg.mxu0
      %v1090 = vmax.f32 %v964, 0.0
      %v1091 = vmax.f32 %v967, 0.0
      %v1092 = vmax.f32 %v972, 0.0
      %v1093 = vmax.f32 %v975, 0.0
      %v1094 = vmax.f32 %v980, 0.0
      %v1095 = vmax.f32 %v983, 0.0
      %v1096 = vmax.f32 %v988, 0.0
      %v1097 = vmax.f32 %v991, 0.0
      %v1098 = vmax.f32 %v996, 0.0
      %v1099 = vmax.f32 %v999, 0.0
      %v1100 = vmax.f32 %v1004, 0.0
      %v1101 = vmax.f32 %v1007, 0.0
      %v1102 = vmax.f32 %v1012, 0.0
      %v1103 = vmax.f32 %v1015, 0.0
      %v1104 = vmax.f32 %v1020, 0.0
      %v1105 = vmax.f32 %v1023, 0.0
      %v1106 = vmax.f32 %v1028, 0.0
      %v1107 = vmax.f32 %v1031, 0.0
      %v1108 = vmax.f32 %v1036, 0.0
      %v1109 = vmax.f32 %v1039, 0.0
      %v1110 = vmax.f32 %v1044, 0.0
      %v1111 = vmax.f32 %v1047, 0.0
      %v1112 = vmax.f32 %v1052, 0.0
      %v1113 = vmax.f32 %v1055, 0.0
      %v1114 = vmax.f32 %v1060, 0.0
      %v1115 = vmax.f32 %v1063, 0.0
      %v1116 = vmax.f32 %v1068, 0.0
      %v1117 = vmax.f32 %v1071, 0.0
      %v1118 = vmax.f32 %v1076, 0.0
      %v1119 = vmax.f32 %v1079, 0.0
      %v1120 = vmax.f32 %v1084, 0.0
      %v1121 = vmax.f32 %v1087, 0.0
      %v1122 = vmax.f32 %v817, %v1090
      %v1123 = vmax.f32 %v818, %v1091
      %v1124 = vmax.f32 %v819, %v1092
      %v1125 = vmax.f32 %v820, %v1093
      %v1126 = vmax.f32 %v821, %v1094
      %v1127 = vmax.f32 %v822, %v1095
      %v1128 = vmax.f32 %v823, %v1096
      %v1129 = vmax.f32 %v824, %v1097
      %v1130 = vmax.f32 %v825, %v1098
      %v1131 = vmax.f32 %v826, %v1099
      %v1132 = vmax.f32 %v827, %v1100
      %v1133 = vmax.f32 %v828, %v1101
      %v1134 = vmax.f32 %v829, %v1102
      %v1135 = vmax.f32 %v830, %v1103
      %v1136 = vmax.f32 %v831, %v1104
      %v1137 = vmax.f32 %v832, %v1105
      %v1138 = vmax.f32 %v833, %v1106
      %v1139 = vmax.f32 %v834, %v1107
      %v1140 = vmax.f32 %v835, %v1108
      %v1141 = vmax.f32 %v836, %v1109
      %v1142 = vmax.f32 %v837, %v1110
      %v1143 = vmax.f32 %v838, %v1111
      %v1144 = vmax.f32 %v839, %v1112
      %v1145 = vmax.f32 %v840, %v1113
      %v1146 = vmax.f32 %v841, %v1114
      %v1147 = vmax.f32 %v842, %v1115
      %v1148 = vmax.f32 %v843, %v1116
      %v1149 = vmax.f32 %v844, %v1117
      %v1150 = vmax.f32 %v845, %v1118
      %v1151 = vmax.f32 %v846, %v1119
      %v1152 = vmax.f32 %v847, %v1120
      %v1153 = vmax.f32 %v848, %v1121
      %1154 = vrot.lane.b32.xlu0 %v280, 80
      %v1155 = vpop.permute.xlu0 %1154
      %1156 = vrot.lane.b32.xlu0 %v281, 80
      %v1157 = vpop.permute.xlu0 %1156
      %1158 = vrot.lane.b32.xlu0 %v282, 80
      %v1159 = vpop.permute.xlu0 %1158
      %1160 = vrot.lane.b32.xlu0 %v283, 80
      %v1161 = vpop.permute.xlu0 %1160
      %1162 = vrot.lane.b32.xlu0 %v284, 80
      %v1163 = vpop.permute.xlu0 %1162
      %1164 = vrot.lane.b32.xlu0 %v285, 80
      %v1165 = vpop.permute.xlu0 %1164
      %1166 = vrot.lane.b32.xlu0 %v286, 80
      %v1167 = vpop.permute.xlu0 %1166
      %1168 = vrot.lane.b32.xlu0 %v287, 80
      %v1169 = vpop.permute.xlu0 %1168
      %1170 = vrot.lane.b32.xlu0 %v288, 80
      %v1171 = vpop.permute.xlu0 %1170
      %1172 = vrot.lane.b32.xlu0 %v289, 80
      %v1173 = vpop.permute.xlu0 %1172
      %1174 = vrot.lane.b32.xlu0 %v290, 80
      %v1175 = vpop.permute.xlu0 %1174
      %1176 = vrot.lane.b32.xlu0 %v291, 80
      %v1177 = vpop.permute.xlu0 %1176
      %1178 = vrot.lane.b32.xlu0 %v292, 80
      %v1179 = vpop.permute.xlu0 %1178
      %1180 = vrot.lane.b32.xlu0 %v293, 80
      %v1181 = vpop.permute.xlu0 %1180
      %1182 = vrot.lane.b32.xlu0 %v294, 80
      %v1183 = vpop.permute.xlu0 %1182
      %1184 = vrot.lane.b32.xlu0 %v295, 80
      %v1185 = vpop.permute.xlu0 %1184
      %v1187 = vsel %vm302, %v1155, 0
      %v1190 = vsel %vm302, %v1157, 0
      %v1193 = vsel %vm302, %v1159, 0
      %v1196 = vsel %vm302, %v1161, 0
      %v1199 = vsel %vm302, %v1163, 0
      %v1202 = vsel %vm302, %v1165, 0
      %v1205 = vsel %vm302, %v1167, 0
      %v1208 = vsel %vm302, %v1169, 0
      %v1211 = vsel %vm302, %v1171, 0
      %v1214 = vsel %vm302, %v1173, 0
      %v1217 = vsel %vm302, %v1175, 0
      %v1220 = vsel %vm302, %v1177, 0
      %v1223 = vsel %vm302, %v1179, 0
      %v1226 = vsel %vm302, %v1181, 0
      %v1229 = vsel %vm302, %v1183, 0
      %v1232 = vsel %vm302, %v1185, 0
      %1234 = vmatprep.subr.bf16.mxu0 0
      %1235 = vmatpush1.bf16.msra.mxu0 %v300
      %1236 = vmatprep.subr.bf16.mxu0 0
      %1237 = vmatpush1.bf16.msra.mxu0 0
      %1238 = vmatprep.subr.bf16.mxu0 0
      %1239 = vmatpush1.bf16.msra.mxu0 0
      %1240 = vmatprep.subr.bf16.mxu0 0
      %1241 = vmatpush1.bf16.msra.mxu0 0
      %1242 = vmatprep.subr.bf16.mxu0 0
      %1243 = vmatpush1.bf16.msra.mxu0 0
      %1244 = vmatprep.subr.bf16.mxu0 0
      %1245 = vmatpush1.bf16.msra.mxu0 0
      %1246 = vmatprep.subr.bf16.mxu0 0
      %1247 = vmatpush1.bf16.msra.mxu0 0
      %1248 = vmatprep.subr.bf16.mxu0 0
      %1249 = vmatpush1.bf16.msra.mxu0 0
      %1250 = vmatprep.subr.bf16.mxu0 0
      %1251 = vmatpush1.bf16.msra.mxu0 0
      %1252 = vmatprep.subr.bf16.mxu0 0
      %1253 = vmatpush1.bf16.msra.mxu0 0
      %1254 = vmatprep.subr.bf16.mxu0 0
      %1255 = vmatpush1.bf16.msra.mxu0 0
      %1256 = vmatprep.subr.bf16.mxu0 0
      %1257 = vmatpush1.bf16.msra.mxu0 0
      %1258 = vmatprep.subr.bf16.mxu0 0
      %1259 = vmatpush1.bf16.msra.mxu0 0
      %1260 = vmatprep.subr.bf16.mxu0 0
      %1261 = vmatpush1.bf16.msra.mxu0 0
      %1262 = vmatprep.subr.bf16.mxu0 0
      %1263 = vmatpush1.bf16.msra.mxu0 0
      %1264 = vmatprep.subr.bf16.mxu0 0
      %1265 = vmatpush1.bf16.msra.mxu0 0
      %1266 = vmatprep.mubr.bf16.mxu0 0
      %1267 = vmatmul.mubr.bf16.gmra.mrb[0].mxu0 %v1187
      %v1268 = vpop.f32.mrb[0].mxu0
      %v1269 = vadd.f32 %v214, %v1268
      %v1270 = vpop.f32.mrb[0].mxu0
      %v1271 = vpop.f32.mrb[0].mxu0
      %v1272 = vadd.f32 %v214, %v1271
      %v1273 = vpop.f32.mrb[0].mxu0
      %1274 = vmatprep.mubr.bf16.mxu0 0
      %1275 = vmatmul.mubr.bf16.gmra.mrb[0].mxu0 %v1190
      %v1276 = vpop.f32.mrb[0].mxu0
      %v1277 = vadd.f32 %v214, %v1276
      %v1278 = vpop.f32.mrb[0].mxu0
      %v1279 = vpop.f32.mrb[0].mxu0
      %v1280 = vadd.f32 %v214, %v1279
      %v1281 = vpop.f32.mrb[0].mxu0
      %1282 = vmatprep.mubr.bf16.mxu0 0
      %1283 = vmatmul.mubr.bf16.gmra.mrb[0].mxu0 %v1193
      %v1284 = vpop.f32.mrb[0].mxu0
      %v1285 = vadd.f32 %v214, %v1284
      %v1286 = vpop.f32.mrb[0].mxu0
      %v1287 = vpop.f32.mrb[0].mxu0
      %v1288 = vadd.f32 %v214, %v1287
      %v1289 = vpop.f32.mrb[0].mxu0
      %1290 = vmatprep.mubr.bf16.mxu0 0
      %1291 = vmatmul.mubr.bf16.gmra.mrb[0].mxu0 %v1196
      %v1292 = vpop.f32.mrb[0].mxu0
      %v1293 = vadd.f32 %v214, %v1292
      %v1294 = vpop.f32.mrb[0].mxu0
      %v1295 = vpop.f32.mrb[0].mxu0
      %v1296 = vadd.f32 %v214, %v1295
      %v1297 = vpop.f32.mrb[0].mxu0
      %1298 = vmatprep.mubr.bf16.mxu0 0
      %1299 = vmatmul.mubr.bf16.gmra.mrb[0].mxu0 %v1199
      %v1300 = vpop.f32.mrb[0].mxu0
      %v1301 = vadd.f32 %v214, %v1300
      %v1302 = vpop.f32.mrb[0].mxu0
      %v1303 = vpop.f32.mrb[0].mxu0
      %v1304 = vadd.f32 %v214, %v1303
      %v1305 = vpop.f32.mrb[0].mxu0
      %1306 = vmatprep.mubr.bf16.mxu0 0
      %1307 = vmatmul.mubr.bf16.gmra.mrb[0].mxu0 %v1202
      %v1308 = vpop.f32.mrb[0].mxu0
      %v1309 = vadd.f32 %v214, %v1308
      %v1310 = vpop.f32.mrb[0].mxu0
      %v1311 = vpop.f32.mrb[0].mxu0
      %v1312 = vadd.f32 %v214, %v1311
      %v1313 = vpop.f32.mrb[0].mxu0
      %1314 = vmatprep.mubr.bf16.mxu0 0
      %1315 = vmatmul.mubr.bf16.gmra.mrb[0].mxu0 %v1205
      %v1316 = vpop.f32.mrb[0].mxu0
      %v1317 = vadd.f32 %v214, %v1316
      %v1318 = vpop.f32.mrb[0].mxu0
      %v1319 = vpop.f32.mrb[0].mxu0
      %v1320 = vadd.f32 %v214, %v1319
      %v1321 = vpop.f32.mrb[0].mxu0
      %1322 = vmatprep.mubr.bf16.mxu0 0
      %1323 = vmatmul.mubr.bf16.gmra.mrb[0].mxu0 %v1208
      %v1324 = vpop.f32.mrb[0].mxu0
      %v1325 = vadd.f32 %v214, %v1324
      %v1326 = vpop.f32.mrb[0].mxu0
      %v1327 = vpop.f32.mrb[0].mxu0
      %v1328 = vadd.f32 %v214, %v1327
      %v1329 = vpop.f32.mrb[0].mxu0
      %1330 = vmatprep.mubr.bf16.mxu0 0
      %1331 = vmatmul.mubr.bf16.gmra.mrb[0].mxu0 %v1211
      %v1332 = vpop.f32.mrb[0].mxu0
      %v1333 = vadd.f32 %v214, %v1332
      %v1334 = vpop.f32.mrb[0].mxu0
      %v1335 = vpop.f32.mrb[0].mxu0
      %v1336 = vadd.f32 %v214, %v1335
      %v1337 = vpop.f32.mrb[0].mxu0
      %1338 = vmatprep.mubr.bf16.mxu0 0
      %1339 = vmatmul.mubr.bf16.gmra.mrb[0].mxu0 %v1214
      %v1340 = vpop.f32.mrb[0].mxu0
      %v1341 = vadd.f32 %v214, %v1340
      %v1342 = vpop.f32.mrb[0].mxu0
      %v1343 = vpop.f32.mrb[0].mxu0
      %v1344 = vadd.f32 %v214, %v1343
      %v1345 = vpop.f32.mrb[0].mxu0
      %1346 = vmatprep.mubr.bf16.mxu0 0
      %1347 = vmatmul.mubr.bf16.gmra.mrb[0].mxu0 %v1217
      %v1348 = vpop.f32.mrb[0].mxu0
      %v1349 = vadd.f32 %v214, %v1348
      %v1350 = vpop.f32.mrb[0].mxu0
      %v1351 = vpop.f32.mrb[0].mxu0
      %v1352 = vadd.f32 %v214, %v1351
      %v1353 = vpop.f32.mrb[0].mxu0
      %1354 = vmatprep.mubr.bf16.mxu0 0
      %1355 = vmatmul.mubr.bf16.gmra.mrb[0].mxu0 %v1220
      %v1356 = vpop.f32.mrb[0].mxu0
      %v1357 = vadd.f32 %v214, %v1356
      %v1358 = vpop.f32.mrb[0].mxu0
      %v1359 = vpop.f32.mrb[0].mxu0
      %v1360 = vadd.f32 %v214, %v1359
      %v1361 = vpop.f32.mrb[0].mxu0
      %1362 = vmatprep.mubr.bf16.mxu0 0
      %1363 = vmatmul.mubr.bf16.gmra.mrb[0].mxu0 %v1223
      %v1364 = vpop.f32.mrb[0].mxu0
      %v1365 = vadd.f32 %v214, %v1364
      %v1366 = vpop.f32.mrb[0].mxu0
      %v1367 = vpop.f32.mrb[0].mxu0
      %v1368 = vadd.f32 %v214, %v1367
      %v1369 = vpop.f32.mrb[0].mxu0
      %1370 = vmatprep.mubr.bf16.mxu0 0
      %1371 = vmatmul.mubr.bf16.gmra.mrb[0].mxu0 %v1226
      %v1372 = vpop.f32.mrb[0].mxu0
      %v1373 = vadd.f32 %v214, %v1372
      %v1374 = vpop.f32.mrb[0].mxu0
      %v1375 = vpop.f32.mrb[0].mxu0
      %v1376 = vadd.f32 %v214, %v1375
      %v1377 = vpop.f32.mrb[0].mxu0
      %1378 = vmatprep.mubr.bf16.mxu0 0
      %1379 = vmatmul.mubr.bf16.gmra.mrb[0].mxu0 %v1229
      %v1380 = vpop.f32.mrb[0].mxu0
      %v1381 = vadd.f32 %v214, %v1380
      %v1382 = vpop.f32.mrb[0].mxu0
      %v1383 = vpop.f32.mrb[0].mxu0
      %v1384 = vadd.f32 %v214, %v1383
      %v1385 = vpop.f32.mrb[0].mxu0
      %1386 = vmatprep.mubr.bf16.mxu0 0
      %1387 = vmatmul.mubr.bf16.gmra.mrb[0].mxu0 %v1232
      %v1388 = vpop.f32.mrb[0].mxu0
      %v1389 = vadd.f32 %v214, %v1388
      %v1390 = vpop.f32.mrb[0].mxu0
      %v1391 = vpop.f32.mrb[0].mxu0
      %v1392 = vadd.f32 %v214, %v1391
      %v1393 = vpop.f32.mrb[0].mxu0
      %1394 = vdwg.mxu0
      %v1395 = vmax.f32 %v1269, 0.0
      %v1396 = vmax.f32 %v1272, 0.0
      %v1397 = vmax.f32 %v1277, 0.0
      %v1398 = vmax.f32 %v1280, 0.0
      %v1399 = vmax.f32 %v1285, 0.0
      %v1400 = vmax.f32 %v1288, 0.0
      %v1401 = vmax.f32 %v1293, 0.0
      %v1402 = vmax.f32 %v1296, 0.0
      %v1403 = vmax.f32 %v1301, 0.0
      %v1404 = vmax.f32 %v1304, 0.0
      %v1405 = vmax.f32 %v1309, 0.0
      %v1406 = vmax.f32 %v1312, 0.0
      %v1407 = vmax.f32 %v1317, 0.0
      %v1408 = vmax.f32 %v1320, 0.0
      %v1409 = vmax.f32 %v1325, 0.0
      %v1410 = vmax.f32 %v1328, 0.0
      %v1411 = vmax.f32 %v1333, 0.0
      %v1412 = vmax.f32 %v1336, 0.0
      %v1413 = vmax.f32 %v1341, 0.0
      %v1414 = vmax.f32 %v1344, 0.0
      %v1415 = vmax.f32 %v1349, 0.0
      %v1416 = vmax.f32 %v1352, 0.0
      %v1417 = vmax.f32 %v1357, 0.0
      %v1418 = vmax.f32 %v1360, 0.0
      %v1419 = vmax.f32 %v1365, 0.0
      %v1420 = vmax.f32 %v1368, 0.0
      %v1421 = vmax.f32 %v1373, 0.0
      %v1422 = vmax.f32 %v1376, 0.0
      %v1423 = vmax.f32 %v1381, 0.0
      %v1424 = vmax.f32 %v1384, 0.0
      %v1425 = vmax.f32 %v1389, 0.0
      %v1426 = vmax.f32 %v1392, 0.0
      %v1427 = vmax.f32 %v1122, %v1395
      %v1428 = vmax.f32 %v1123, %v1396
      %v1429 = vmax.f32 %v1124, %v1397
      %v1430 = vmax.f32 %v1125, %v1398
      %v1431 = vmax.f32 %v1126, %v1399
      %v1432 = vmax.f32 %v1127, %v1400
      %v1433 = vmax.f32 %v1128, %v1401
      %v1434 = vmax.f32 %v1129, %v1402
      %v1435 = vmax.f32 %v1130, %v1403
      %v1436 = vmax.f32 %v1131, %v1404
      %v1437 = vmax.f32 %v1132, %v1405
      %v1438 = vmax.f32 %v1133, %v1406
      %v1439 = vmax.f32 %v1134, %v1407
      %v1440 = vmax.f32 %v1135, %v1408
      %v1441 = vmax.f32 %v1136, %v1409
      %v1442 = vmax.f32 %v1137, %v1410
      %v1443 = vmax.f32 %v1138, %v1411
      %v1444 = vmax.f32 %v1139, %v1412
      %v1445 = vmax.f32 %v1140, %v1413
      %v1446 = vmax.f32 %v1141, %v1414
      %v1447 = vmax.f32 %v1142, %v1415
      %v1448 = vmax.f32 %v1143, %v1416
      %v1449 = vmax.f32 %v1144, %v1417
      %v1450 = vmax.f32 %v1145, %v1418
      %v1451 = vmax.f32 %v1146, %v1419
      %v1452 = vmax.f32 %v1147, %v1420
      %v1453 = vmax.f32 %v1148, %v1421
      %v1454 = vmax.f32 %v1149, %v1422
      %v1455 = vmax.f32 %v1150, %v1423
      %v1456 = vmax.f32 %v1151, %v1424
      %v1457 = vmax.f32 %v1152, %v1425
      %v1458 = vmax.f32 %v1153, %v1426
      %v1459 = vpack.c.bf16 %v1428, %v1427
      %v1460 = vpack.c.bf16 %v1430, %v1429
      %v1461 = vpack.c.bf16 %v1432, %v1431
      %v1462 = vpack.c.bf16 %v1434, %v1433
      %v1463 = vpack.c.bf16 %v1436, %v1435
      %v1464 = vpack.c.bf16 %v1438, %v1437
      %v1465 = vpack.c.bf16 %v1440, %v1439
      %v1466 = vpack.c.bf16 %v1442, %v1441
      %v1467 = vpack.c.bf16 %v1444, %v1443
      %v1468 = vpack.c.bf16 %v1446, %v1445
      %v1469 = vpack.c.bf16 %v1448, %v1447
      %v1470 = vpack.c.bf16 %v1450, %v1449
      %v1471 = vpack.c.bf16 %v1452, %v1451
      %v1472 = vpack.c.bf16 %v1454, %v1453
      %v1473 = vpack.c.bf16 %v1456, %v1455
      %v1474 = vpack.c.bf16 %v1458, %v1457
      %v1491 = vunpack.c.l.b16 %v1459
      %v1492 = vunpack.c.h.b16 %v1459
      %v1493 = vunpack.c.l.b16 %v1460
      %v1494 = vunpack.c.h.b16 %v1460
      %v1495 = vunpack.c.l.b16 %v1461
      %v1496 = vunpack.c.h.b16 %v1461
      %v1497 = vunpack.c.l.b16 %v1462
      %v1498 = vunpack.c.h.b16 %v1462
      %v1499 = vunpack.c.l.b16 %v1463
      %v1500 = vunpack.c.h.b16 %v1463
      %v1501 = vunpack.c.l.b16 %v1464
      %v1502 = vunpack.c.h.b16 %v1464
      %v1503 = vunpack.c.l.b16 %v1465
      %v1504 = vunpack.c.h.b16 %v1465
      %v1505 = vunpack.c.l.b16 %v1466
      %v1506 = vunpack.c.h.b16 %v1466
      %v1507 = vunpack.c.l.b16 %v1467
      %v1508 = vunpack.c.h.b16 %v1467
      %v1509 = vunpack.c.l.b16 %v1468
      %v1510 = vunpack.c.h.b16 %v1468
      %v1511 = vunpack.c.l.b16 %v1469
      %v1512 = vunpack.c.h.b16 %v1469
      %v1513 = vunpack.c.l.b16 %v1470
      %v1514 = vunpack.c.h.b16 %v1470
      %v1515 = vunpack.c.l.b16 %v1471
      %v1516 = vunpack.c.h.b16 %v1471
      %v1517 = vunpack.c.l.b16 %v1472
      %v1518 = vunpack.c.h.b16 %v1472
      %v1519 = vunpack.c.l.b16 %v1473
      %v1520 = vunpack.c.h.b16 %v1473
      %v1521 = vunpack.c.l.b16 %v1474
      %v1522 = vunpack.c.h.b16 %v1474
      %v1523 = vpack.c.b16 %v1491, %v1491
      %v1524 = vpack.c.b16 %v1492, %v1492
      %v1525 = vpack.c.b16 %v1493, %v1493
      %v1526 = vpack.c.b16 %v1494, %v1494
      %v1527 = vpack.c.b16 %v1495, %v1495
      %v1528 = vpack.c.b16 %v1496, %v1496
      %v1529 = vpack.c.b16 %v1497, %v1497
      %v1530 = vpack.c.b16 %v1498, %v1498
      %v1531 = vpack.c.b16 %v1499, %v1499
      %v1532 = vpack.c.b16 %v1500, %v1500
      %v1533 = vpack.c.b16 %v1501, %v1501
      %v1534 = vpack.c.b16 %v1502, %v1502
      %v1535 = vpack.c.b16 %v1503, %v1503
      %v1536 = vpack.c.b16 %v1504, %v1504
      %v1537 = vpack.c.b16 %v1505, %v1505
      %v1538 = vpack.c.b16 %v1506, %v1506
      %v1539 = vpack.c.b16 %v1507, %v1507
      %v1540 = vpack.c.b16 %v1508, %v1508
      %v1541 = vpack.c.b16 %v1509, %v1509
      %v1542 = vpack.c.b16 %v1510, %v1510
      %v1543 = vpack.c.b16 %v1511, %v1511
      %v1544 = vpack.c.b16 %v1512, %v1512
      %v1545 = vpack.c.b16 %v1513, %v1513
      %v1546 = vpack.c.b16 %v1514, %v1514
      %v1547 = vpack.c.b16 %v1515, %v1515
      %v1548 = vpack.c.b16 %v1516, %v1516
      %v1549 = vpack.c.b16 %v1517, %v1517
      %v1550 = vpack.c.b16 %v1518, %v1518
      %v1551 = vpack.c.b16 %v1519, %v1519
      %v1552 = vpack.c.b16 %v1520, %v1520
      %v1553 = vpack.c.b16 %v1521, %v1521
      %v1554 = vpack.c.b16 %v1522, %v1522
      %vm1587 = vcmask 125952
      %1588 = vst.msk [vmem:[%s172] sm:$0xf] %vm1587, %v1523
      %1589 = vst.msk [vmem:[%s172 + $0x4] sm:$0xf] %vm1587, %v1524
      %1590 = vst.msk [vmem:[%s172 + $0x8] sm:$0xf] %vm1587, %v1525
      %1591 = vst.msk [vmem:[%s172 + $0xc] sm:$0xf] %vm1587, %v1526
      %1592 = vst.msk [vmem:[%s172 + $0x10] sm:$0xf] %vm1587, %v1527
      %1593 = vst.msk [vmem:[%s172 + $0x14] sm:$0xf] %vm1587, %v1528
      %1594 = vst.msk [vmem:[%s172 + $0x18] sm:$0xf] %vm1587, %v1529
      %1595 = vst.msk [vmem:[%s172 + $0x1c] sm:$0xf] %vm1587, %v1530
      %1596 = vst.msk [vmem:[%s172 + $0x20] sm:$0xf] %vm1587, %v1531
      %1597 = vst.msk [vmem:[%s172 + $0x24] sm:$0xf] %vm1587, %v1532
      %1598 = vst.msk [vmem:[%s172 + $0x28] sm:$0xf] %vm1587, %v1533
      %1599 = vst.msk [vmem:[%s172 + $0x2c] sm:$0xf] %vm1587, %v1534
      %1600 = vst.msk [vmem:[%s172 + $0x30] sm:$0xf] %vm1587, %v1535
      %1601 = vst.msk [vmem:[%s172 + $0x34] sm:$0xf] %vm1587, %v1536
      %1602 = vst.msk [vmem:[%s172 + $0x38] sm:$0xf] %vm1587, %v1537
      %1603 = vst.msk [vmem:[%s172 + $0x3c] sm:$0xf] %vm1587, %v1538
      %1604 = vst.msk [vmem:[%s172 + $0x40] sm:$0xf] %vm1587, %v1539
      %1605 = vst.msk [vmem:[%s172 + $0x44] sm:$0xf] %vm1587, %v1540
      %1606 = vst.msk [vmem:[%s172 + $0x48] sm:$0xf] %vm1587, %v1541
      %1607 = vst.msk [vmem:[%s172 + $0x4c] sm:$0xf] %vm1587, %v1542
      %1608 = vst.msk [vmem:[%s172 + $0x50] sm:$0xf] %vm1587, %v1543
      %1609 = vst.msk [vmem:[%s172 + $0x54] sm:$0xf] %vm1587, %v1544
      %1610 = vst.msk [vmem:[%s172 + $0x58] sm:$0xf] %vm1587, %v1545
      %1611 = vst.msk [vmem:[%s172 + $0x5c] sm:$0xf] %vm1587, %v1546
      %1612 = vst.msk [vmem:[%s172 + $0x60] sm:$0xf] %vm1587, %v1547
      %1613 = vst.msk [vmem:[%s172 + $0x64] sm:$0xf] %vm1587, %v1548
      %1614 = vst.msk [vmem:[%s172 + $0x68] sm:$0xf] %vm1587, %v1549
      %1615 = vst.msk [vmem:[%s172 + $0x6c] sm:$0xf] %vm1587, %v1550
      %1616 = vst.msk [vmem:[%s172 + $0x70] sm:$0xf] %vm1587, %v1551
      %1617 = vst.msk [vmem:[%s172 + $0x74] sm:$0xf] %vm1587, %v1552
      %1618 = vst.msk [vmem:[%s172 + $0x78] sm:$0xf] %vm1587, %v1553
      %1619 = vst.msk [vmem:[%s172 + $0x7c] sm:$0xf] %vm1587, %v1554
      %s1620 = smul.u32 32, %s14
      %p1621 = scmp.lt.s32.totalorder %s1620, 63
      %s1622 = scalar_select %p1621, %s1620, 63
      %s1623 = smul.addr %s1622, 4
      %s1624 = scalar_lea.vmem %s3, %s1623
      // Predicated region
      $region33: #{teacher_cnn_mnist_forward.3} parent=31 // pred_check
        %p1625 = pneg %p100
      $region34: #{teacher_cnn_mnist_forward.3} parent=31 // pred_check_branch
        %1627 = sbr.rel (%p1625) target = $region36
      $region35: #{teacher_cnn_mnist_forward.3} parent=31 // pred_region
        %s1628 = smul.u32 32, %s14
      $region36: #{teacher_cnn_mnist_forward.3} parent=31 // pred_fallthru
        _
    $region32: #{teacher_cnn_mnist_forward.3} parent=5 // pred_fallthru
      _
    %p1629 = scmp.le.s32.totalorder 2, %s9
    // Predicated region
    $region37: #{teacher_cnn_mnist_forward.3} parent=5 // pred_check
      %p1630 = pneg %p1629
    $region38: #{teacher_cnn_mnist_forward.3} parent=5 // pred_check_branch
      %1632 = sbr.rel (%p1630) target = $region40
    $region39: #{teacher_cnn_mnist_forward.3} parent=5 // pred_region
      %s1633 = ssub.s32 %s9, 2
      // Predicated region
      $region41: #{teacher_cnn_mnist_forward.3} parent=39 // pred_check
        %p1634 = pneg %p106
      $region42: #{teacher_cnn_mnist_forward.3} parent=39 // pred_check_branch
        %1636 = sbr.rel (%p1634) target = $region44
      $region43: #{teacher_cnn_mnist_forward.3} parent=39 // pred_region
        %s1637 = smul.u32 32, %s15
        %p1638 = scmp.lt.s32.totalorder %s1637, 63
        %s1639 = scalar_select %p1638, %s1637, 63
        %s1640 = smul.addr %s1639, 4
        %s1641 = scalar_lea.vmem %s3, %s1640
      $region44: #{teacher_cnn_mnist_forward.3} parent=39 // pred_fallthru
        _
    $region40: #{teacher_cnn_mnist_forward.3} parent=5 // pred_fallthru
      _
  $region6: #{teacher_cnn_mnist_forward.3} parent=0 // loop_footer
    %s13 = sadd.s32 1, %s9
  $region7: #{teacher_cnn_mnist_forward.3} parent=0 // loop_footer_branch
    %8 = sbr.rel target = $region3
  $region8: #{teacher_cnn_mnist_forward.3} parent=0 // loop_exit
    _

// kernel: teacher_cnn_mnist_forward.4
$region0: #{teacher_cnn_mnist_forward.4}
  #allocation0 [shape = 'u32[]', space=smem, size = 0x4, offset = 0x4, fixed_abs, tag = 'smem constant byte address 0x4 - core index']
  #allocation1 [shape = 'u32[144,128]{1,0:T(1,128)}', space=vmem, size = 0x12000, scoped, tag = 'internal scratch']
  %s0 = inlined_call_operand.vmem [shape: bf16[128,1024], index: 0, kind: input, shape index: {}]
  %s1 = inlined_call_operand.vmem [shape: bf16[256,32], index: 1, kind: input, shape index: {}]
  %s2 = inlined_call_operand.vmem [shape: f32[1,32], index: 2, kind: input, shape index: {}]
  %s3 = inlined_call_operand.vmem [shape: bf16[128,32], index: 3, kind: output, shape index: {}]
  %s4 = sld [smem:[#allocation0]]
  $region22: #{teacher_cnn_mnist_forward.4} parent=0
    _
  %s6 = ssub.s32 1, %s4
  %s7 = scalar_select 0, %s6, %s4
  // Predicated region
  $region2: #{teacher_cnn_mnist_forward.4} parent=0 // pred_check
    _
  $region3: #{teacher_cnn_mnist_forward.4} parent=0 // pred_check_branch
    %9 = sbr.rel (0) target = $region5
  $region4: #{teacher_cnn_mnist_forward.4} parent=0 // pred_region
    _
  $region5: #{teacher_cnn_mnist_forward.4} parent=0 // pred_fallthru
    _
  // Predicated region
  $region6: #{teacher_cnn_mnist_forward.4} parent=0 // pred_check
    _
  $region7: #{teacher_cnn_mnist_forward.4} parent=0 // pred_check_branch
    %11 = sbr.rel (0) target = $region9
  $region8: #{teacher_cnn_mnist_forward.4} parent=0 // pred_region
    _
  $region9: #{teacher_cnn_mnist_forward.4} parent=0 // pred_fallthru
    _
  // Predicated region
  $region10: #{teacher_cnn_mnist_forward.4} parent=0 // pred_check
    _
  $region11: #{teacher_cnn_mnist_forward.4} parent=0 // pred_check_branch
    %13 = sbr.rel (0) target = $region13
  $region12: #{teacher_cnn_mnist_forward.4} parent=0 // pred_region
    _
  $region13: #{teacher_cnn_mnist_forward.4} parent=0 // pred_fallthru
    _
  %v15 = vld [vmem:[%s1] sm:$0xf]
  %v16 = vld [vmem:[%s1 + $0x4] sm:$0xf]
  %v17 = vld [vmem:[%s1 + $0x8] sm:$0xf]
  %v18 = vld [vmem:[%s1 + $0xc] sm:$0xf]
  %v19 = vld [vmem:[%s1 + $0x10] sm:$0xf]
  %v20 = vld [vmem:[%s1 + $0x14] sm:$0xf]
  %v21 = vld [vmem:[%s1 + $0x18] sm:$0xf]
  %v22 = vld [vmem:[%s1 + $0x1c] sm:$0xf]
  %v23 = vld [vmem:[%s1 + $0x20] sm:$0xf]
  %v24 = vld [vmem:[%s1 + $0x24] sm:$0xf]
  %v25 = vld [vmem:[%s1 + $0x28] sm:$0xf]
  %v26 = vld [vmem:[%s1 + $0x2c] sm:$0xf]
  %v27 = vld [vmem:[%s1 + $0x30] sm:$0xf]
  %v28 = vld [vmem:[%s1 + $0x34] sm:$0xf]
  %v29 = vld [vmem:[%s1 + $0x38] sm:$0xf]
  %v30 = vld [vmem:[%s1 + $0x3c] sm:$0xf]
  %v31 = vld [vmem:[%s1 + $0x40] sm:$0xf]
  %v32 = vld [vmem:[%s1 + $0x44] sm:$0xf]
  %v33 = vld [vmem:[%s1 + $0x48] sm:$0xf]
  %v34 = vld [vmem:[%s1 + $0x4c] sm:$0xf]
  %v35 = vld [vmem:[%s1 + $0x50] sm:$0xf]
  %v36 = vld [vmem:[%s1 + $0x54] sm:$0xf]
  %v37 = vld [vmem:[%s1 + $0x58] sm:$0xf]
  %v38 = vld [vmem:[%s1 + $0x5c] sm:$0xf]
  %v39 = vld [vmem:[%s1 + $0x60] sm:$0xf]
  %v40 = vld [vmem:[%s1 + $0x64] sm:$0xf]
  %v41 = vld [vmem:[%s1 + $0x68] sm:$0xf]
  %v42 = vld [vmem:[%s1 + $0x6c] sm:$0xf]
  %v43 = vld [vmem:[%s1 + $0x70] sm:$0xf]
  %v44 = vld [vmem:[%s1 + $0x74] sm:$0xf]
  %v45 = vld [vmem:[%s1 + $0x78] sm:$0xf]
  %v46 = vld [vmem:[%s1 + $0x7c] sm:$0xf]
  %v47 = vld [vmem:[%s2] sm:$0x1]
  %v48 = vld [vmem:[%s0] sm:$0xff]
  %v49 = vld [vmem:[%s0 + $0x20] sm:$0xff]
  %v50 = vld [vmem:[%s0 + $0x40] sm:$0xff]
  %v51 = vld [vmem:[%s0 + $0x60] sm:$0xff]
  %v52 = vld [vmem:[%s0 + $0x80] sm:$0xff]
  %v53 = vld [vmem:[%s0 + $0xa0] sm:$0xff]
  %v54 = vld [vmem:[%s0 + $0xc0] sm:$0xff]
  %v55 = vld [vmem:[%s0 + $0xe0] sm:$0xff]
  %v56 = vld [vmem:[%s0 + $0x100] sm:$0xff]
  %v57 = vld [vmem:[%s0 + $0x120] sm:$0xff]
  %v58 = vld [vmem:[%s0 + $0x140] sm:$0xff]
  %v59 = vld [vmem:[%s0 + $0x160] sm:$0xff]
  %v60 = vld [vmem:[%s0 + $0x180] sm:$0xff]
  %v61 = vld [vmem:[%s0 + $0x1a0] sm:$0xff]
  %v62 = vld [vmem:[%s0 + $0x1c0] sm:$0xff]
  %v63 = vld [vmem:[%s0 + $0x1e0] sm:$0xff]
  %v65 = vlaneseq
  %v66 = vshrl.u32 %v65, 7
  %v67 = vsub.s32 0, %v66
  %v68 = vrot.slane %v47, %v67
  %v86 = vunpack.c.l.b16 %v48
  %v87 = vunpack.c.h.b16 %v48
  %v88 = vunpack.c.l.b16 %v49
  %v89 = vunpack.c.h.b16 %v49
  %v90 = vunpack.c.l.b16 %v50
  %v91 = vunpack.c.h.b16 %v50
  %v92 = vunpack.c.l.b16 %v51
  %v93 = vunpack.c.h.b16 %v51
  %v94 = vunpack.c.l.b16 %v52
  %v95 = vunpack.c.h.b16 %v52
  %v96 = vunpack.c.l.b16 %v53
  %v97 = vunpack.c.h.b16 %v53
  %v98 = vunpack.c.l.b16 %v54
  %v99 = vunpack.c.h.b16 %v54
  %v100 = vunpack.c.l.b16 %v55
  %v101 = vunpack.c.h.b16 %v55
  %v102 = vunpack.c.l.b16 %v56
  %v103 = vunpack.c.h.b16 %v56
  %v104 = vunpack.c.l.b16 %v57
  %v105 = vunpack.c.h.b16 %v57
  %v106 = vunpack.c.l.b16 %v58
  %v107 = vunpack.c.h.b16 %v58
  %v108 = vunpack.c.l.b16 %v59
  %v109 = vunpack.c.h.b16 %v59
  %v110 = vunpack.c.l.b16 %v60
  %v111 = vunpack.c.h.b16 %v60
  %v112 = vunpack.c.l.b16 %v61
  %v113 = vunpack.c.h.b16 %v61
  %v114 = vunpack.c.l.b16 %v62
  %v115 = vunpack.c.h.b16 %v62
  %v116 = vunpack.c.l.b16 %v63
  %v117 = vunpack.c.h.b16 %v63
  %v118 = vpack.c.b16 %v88, %v86
  %v119 = vpack.c.b16 %v89, %v87
  %v120 = vpack.c.b16 %v92, %v90
  %v121 = vpack.c.b16 %v93, %v91
  %v122 = vpack.c.b16 %v96, %v94
  %v123 = vpack.c.b16 %v97, %v95
  %v124 = vpack.c.b16 %v100, %v98
  %v125 = vpack.c.b16 %v101, %v99
  %v126 = vpack.c.b16 %v104, %v102
  %v127 = vpack.c.b16 %v105, %v103
  %v128 = vpack.c.b16 %v108, %v106
  %v129 = vpack.c.b16 %v109, %v107
  %v130 = vpack.c.b16 %v112, %v110
  %v131 = vpack.c.b16 %v113, %v111
  %v132 = vpack.c.b16 %v116, %v114
  %v133 = vpack.c.b16 %v117, %v115
  %v182 = vunpack.c.l.b16 %v15
  %v183 = vunpack.c.l.b16 %v16
  %v184 = vunpack.c.l.b16 %v17
  %v185 = vunpack.c.l.b16 %v18
  %v186 = vunpack.c.l.b16 %v19
  %v187 = vunpack.c.l.b16 %v20
  %v188 = vunpack.c.l.b16 %v21
  %v189 = vunpack.c.l.b16 %v22
  %v190 = vunpack.c.l.b16 %v23
  %v191 = vunpack.c.l.b16 %v24
  %v192 = vunpack.c.l.b16 %v25
  %v193 = vunpack.c.l.b16 %v26
  %v194 = vunpack.c.l.b16 %v27
  %v195 = vunpack.c.l.b16 %v28
  %v196 = vunpack.c.l.b16 %v29
  %v197 = vunpack.c.l.b16 %v30
  %v198 = vunpack.c.l.b16 %v31
  %v199 = vunpack.c.l.b16 %v32
  %v200 = vunpack.c.l.b16 %v33
  %v201 = vunpack.c.l.b16 %v34
  %v202 = vunpack.c.l.b16 %v35
  %v203 = vunpack.c.l.b16 %v36
  %v204 = vunpack.c.l.b16 %v37
  %v205 = vunpack.c.l.b16 %v38
  %v206 = vunpack.c.l.b16 %v39
  %v207 = vunpack.c.l.b16 %v40
  %v208 = vunpack.c.l.b16 %v41
  %v209 = vunpack.c.l.b16 %v42
  %v210 = vunpack.c.l.b16 %v43
  %v211 = vunpack.c.l.b16 %v44
  %v212 = vunpack.c.l.b16 %v45
  %v213 = vunpack.c.l.b16 %v46
  %v214 = vpack.c.b16 %v183, %v182
  %v215 = vpack.c.b16 %v185, %v184
  %v216 = vpack.c.b16 %v187, %v186
  %v217 = vpack.c.b16 %v189, %v188
  %v218 = vpack.c.b16 %v191, %v190
  %v219 = vpack.c.b16 %v193, %v192
  %v220 = vpack.c.b16 %v195, %v194
  %v221 = vpack.c.b16 %v197, %v196
  %v222 = vpack.c.b16 %v199, %v198
  %v223 = vpack.c.b16 %v201, %v200
  %v224 = vpack.c.b16 %v203, %v202
  %v225 = vpack.c.b16 %v205, %v204
  %v226 = vpack.c.b16 %v207, %v206
  %v227 = vpack.c.b16 %v209, %v208
  %v228 = vpack.c.b16 %v211, %v210
  %v229 = vpack.c.b16 %v213, %v212
  %246 = vmatprep.subr.bf16.mxu0 0
  %247 = vmatpush1.bf16.msra.mxu0 %v214
  %248 = vmatprep.subr.bf16.mxu0 0
  %249 = vmatpush1.bf16.msra.mxu0 %v215
  %250 = vmatprep.subr.bf16.mxu0 0
  %251 = vmatpush1.bf16.msra.mxu0 %v216
  %252 = vmatprep.subr.bf16.mxu0 0
  %253 = vmatpush1.bf16.msra.mxu0 %v217
  %254 = vmatprep.subr.bf16.mxu0 0
  %255 = vmatpush1.bf16.msra.mxu0 %v218
  %256 = vmatprep.subr.bf16.mxu0 0
  %257 = vmatpush1.bf16.msra.mxu0 %v219
  %258 = vmatprep.subr.bf16.mxu0 0
  %259 = vmatpush1.bf16.msra.mxu0 %v220
  %260 = vmatprep.subr.bf16.mxu0 0
  %261 = vmatpush1.bf16.msra.mxu0 %v221
  %262 = vmatprep.subr.bf16.mxu0 0
  %263 = vmatpush1.bf16.msra.mxu0 %v222
  %264 = vmatprep.subr.bf16.mxu0 0
  %265 = vmatpush1.bf16.msra.mxu0 %v223
  %266 = vmatprep.subr.bf16.mxu0 0
  %267 = vmatpush1.bf16.msra.mxu0 %v224
  %268 = vmatprep.subr.bf16.mxu0 0
  %269 = vmatpush1.bf16.msra.mxu0 %v225
  %270 = vmatprep.subr.bf16.mxu0 0
  %271 = vmatpush1.bf16.msra.mxu0 %v226
  %272 = vmatprep.subr.bf16.mxu0 0
  %273 = vmatpush1.bf16.msra.mxu0 %v227
  %274 = vmatprep.subr.bf16.mxu0 0
  %275 = vmatpush1.bf16.msra.mxu0 %v228
  %276 = vmatprep.subr.bf16.mxu0 0
  %277 = vmatpush1.bf16.msra.mxu0 %v229
  %278 = vmatprep.mubr.bf16.mxu0 %v119
  %279 = vmatmul.mubr.bf16.gmra.mrb[0].mxu0 %v118
  %v280 = vpop.f32.mrb[0].mxu0
  %v281 = vadd.f32 %v68, %v280
  %v282 = vpop.f32.mrb[0].mxu0
  %v283 = vpop.f32.mrb[0].mxu0
  %v284 = vadd.f32 %v68, %v283
  %v285 = vpop.f32.mrb[0].mxu0
  %286 = vmatprep.mubr.bf16.mxu0 %v121
  %287 = vmatmul.mubr.bf16.gmra.mrb[0].mxu0 %v120
  %v288 = vpop.f32.mrb[0].mxu0
  %v289 = vadd.f32 %v68, %v288
  %v290 = vpop.f32.mrb[0].mxu0
  %v291 = vpop.f32.mrb[0].mxu0
  %v292 = vadd.f32 %v68, %v291
  %v293 = vpop.f32.mrb[0].mxu0
  %294 = vmatprep.mubr.bf16.mxu0 %v123
  %295 = vmatmul.mubr.bf16.gmra.mrb[0].mxu0 %v122
  %v296 = vpop.f32.mrb[0].mxu0
  %v297 = vadd.f32 %v68, %v296
  %v298 = vpop.f32.mrb[0].mxu0
  %v299 = vpop.f32.mrb[0].mxu0
  %v300 = vadd.f32 %v68, %v299
  %v301 = vpop.f32.mrb[0].mxu0
  %302 = vmatprep.mubr.bf16.mxu0 %v125
  %303 = vmatmul.mubr.bf16.gmra.mrb[0].mxu0 %v124
  %v304 = vpop.f32.mrb[0].mxu0
  %v305 = vadd.f32 %v68, %v304
  %v306 = vpop.f32.mrb[0].mxu0
  %v307 = vpop.f32.mrb[0].mxu0
  %v308 = vadd.f32 %v68, %v307
  %v309 = vpop.f32.mrb[0].mxu0
  %310 = vmatprep.mubr.bf16.mxu0 %v127
  %311 = vmatmul.mubr.bf16.gmra.mrb[0].mxu0 %v126
  %v312 = vpop.f32.mrb[0].mxu0
  %v313 = vadd.f32 %v68, %v312
  %v314 = vpop.f32.mrb[0].mxu0
  %v315 = vpop.f32.mrb[0].mxu0
  %v316 = vadd.f32 %v68, %v315
  %v317 = vpop.f32.mrb[0].mxu0
  %318 = vmatprep.mubr.bf16.mxu0 %v129
  %319 = vmatmul.mubr.bf16.gmra.mrb[0].mxu0 %v128
  %v320 = vpop.f32.mrb[0].mxu0
  %v321 = vadd.f32 %v68, %v320
  %v322 = vpop.f32.mrb[0].mxu0
  %v323 = vpop.f32.mrb[0].mxu0
  %v324 = vadd.f32 %v68, %v323
  %v325 = vpop.f32.mrb[0].mxu0
  %326 = vmatprep.mubr.bf16.mxu0 %v131
  %327 = vmatmul.mubr.bf16.gmra.mrb[0].mxu0 %v130
  %v328 = vpop.f32.mrb[0].mxu0
  %v329 = vadd.f32 %v68, %v328
  %v330 = vpop.f32.mrb[0].mxu0
  %v331 = vpop.f32.mrb[0].mxu0
  %v332 = vadd.f32 %v68, %v331
  %v333 = vpop.f32.mrb[0].mxu0
  %334 = vmatprep.mubr.bf16.mxu0 %v133
  %335 = vmatmul.mubr.bf16.gmra.mrb[0].mxu0 %v132
  %v336 = vpop.f32.mrb[0].mxu0
  %v337 = vadd.f32 %v68, %v336
  %v338 = vpop.f32.mrb[0].mxu0
  %v339 = vpop.f32.mrb[0].mxu0
  %v340 = vadd.f32 %v68, %v339
  %v341 = vpop.f32.mrb[0].mxu0
  %342 = vdwg.mxu0
  %v343 = vmax.f32 %v281, 0.0
  %v344 = vmax.f32 %v284, 0.0
  %v345 = vmax.f32 %v289, 0.0
  %v346 = vmax.f32 %v292, 0.0
  %v347 = vmax.f32 %v297, 0.0
  %v348 = vmax.f32 %v300, 0.0
  %v349 = vmax.f32 %v305, 0.0
  %v350 = vmax.f32 %v308, 0.0
  %v351 = vmax.f32 %v313, 0.0
  %v352 = vmax.f32 %v316, 0.0
  %v353 = vmax.f32 %v321, 0.0
  %v354 = vmax.f32 %v324, 0.0
  %v355 = vmax.f32 %v329, 0.0
  %v356 = vmax.f32 %v332, 0.0
  %v357 = vmax.f32 %v337, 0.0
  %v358 = vmax.f32 %v340, 0.0
  %v359 = vld [vmem:[%s0 + $0x8] sm:$0xff]
  %v360 = vld [vmem:[%s0 + $0x28] sm:$0xff]
  %v361 = vld [vmem:[%s0 + $0x48] sm:$0xff]
  %v362 = vld [vmem:[%s0 + $0x68] sm:$0xff]
  %v363 = vld [vmem:[%s0 + $0x88] sm:$0xff]
  %v364 = vld [vmem:[%s0 + $0xa8] sm:$0xff]
  %v365 = vld [vmem:[%s0 + $0xc8] sm:$0xff]
  %v366 = vld [vmem:[%s0 + $0xe8] sm:$0xff]
  %v367 = vld [vmem:[%s0 + $0x108] sm:$0xff]
  %v368 = vld [vmem:[%s0 + $0x128] sm:$0xff]
  %v369 = vld [vmem:[%s0 + $0x148] sm:$0xff]
  %v370 = vld [vmem:[%s0 + $0x168] sm:$0xff]
  %v371 = vld [vmem:[%s0 + $0x188] sm:$0xff]
  %v372 = vld [vmem:[%s0 + $0x1a8] sm:$0xff]
  %v373 = vld [vmem:[%s0 + $0x1c8] sm:$0xff]
  %v374 = vld [vmem:[%s0 + $0x1e8] sm:$0xff]
  %v391 = vunpack.c.l.b16 %v359
  %v392 = vunpack.c.h.b16 %v359
  %v393 = vunpack.c.l.b16 %v360
  %v394 = vunpack.c.h.b16 %v360
  %v395 = vunpack.c.l.b16 %v361
  %v396 = vunpack.c.h.b16 %v361
  %v397 = vunpack.c.l.b16 %v362
  %v398 = vunpack.c.h.b16 %v362
  %v399 = vunpack.c.l.b16 %v363
  %v400 = vunpack.c.h.b16 %v363
  %v401 = vunpack.c.l.b16 %v364
  %v402 = vunpack.c.h.b16 %v364
  %v403 = vunpack.c.l.b16 %v365
  %v404 = vunpack.c.h.b16 %v365
  %v405 = vunpack.c.l.b16 %v366
  %v406 = vunpack.c.h.b16 %v366
  %v407 = vunpack.c.l.b16 %v367
  %v408 = vunpack.c.h.b16 %v367
  %v409 = vunpack.c.l.b16 %v368
  %v410 = vunpack.c.h.b16 %v368
  %v411 = vunpack.c.l.b16 %v369
  %v412 = vunpack.c.h.b16 %v369
  %v413 = vunpack.c.l.b16 %v370
  %v414 = vunpack.c.h.b16 %v370
  %v415 = vunpack.c.l.b16 %v371
  %v416 = vunpack.c.h.b16 %v371
  %v417 = vunpack.c.l.b16 %v372
  %v418 = vunpack.c.h.b16 %v372
  %v419 = vunpack.c.l.b16 %v373
  %v420 = vunpack.c.h.b16 %v373
  %v421 = vunpack.c.l.b16 %v374
  %v422 = vunpack.c.h.b16 %v374
  %v423 = vpack.c.b16 %v393, %v391
  %v424 = vpack.c.b16 %v394, %v392
  %v425 = vpack.c.b16 %v397, %v395
  %v426 = vpack.c.b16 %v398, %v396
  %v427 = vpack.c.b16 %v401, %v399
  %v428 = vpack.c.b16 %v402, %v400
  %v429 = vpack.c.b16 %v405, %v403
  %v430 = vpack.c.b16 %v406, %v404
  %v431 = vpack.c.b16 %v409, %v407
  %v432 = vpack.c.b16 %v410, %v408
  %v433 = vpack.c.b16 %v413, %v411
  %v434 = vpack.c.b16 %v414, %v412
  %v435 = vpack.c.b16 %v417, %v415
  %v436 = vpack.c.b16 %v418, %v416
  %v437 = vpack.c.b16 %v421, %v419
  %v438 = vpack.c.b16 %v422, %v420
  %455 = vmatprep.subr.bf16.mxu0 0
  %456 = vmatpush1.bf16.msra.mxu0 %v214
  %457 = vmatprep.subr.bf16.mxu0 0
  %458 = vmatpush1.bf16.msra.mxu0 %v215
  %459 = vmatprep.subr.bf16.mxu0 0
  %460 = vmatpush1.bf16.msra.mxu0 %v216
  %461 = vmatprep.subr.bf16.mxu0 0
  %462 = vmatpush1.bf16.msra.mxu0 %v217
  %463 = vmatprep.subr.bf16.mxu0 0
  %464 = vmatpush1.bf16.msra.mxu0 %v218
  %465 = vmatprep.subr.bf16.mxu0 0
  %466 = vmatpush1.bf16.msra.mxu0 %v219
  %467 = vmatprep.subr.bf16.mxu0 0
  %468 = vmatpush1.bf16.msra.mxu0 %v220
  %469 = vmatprep.subr.bf16.mxu0 0
  %470 = vmatpush1.bf16.msra.mxu0 %v221
  %471 = vmatprep.subr.bf16.mxu0 0
  %472 = vmatpush1.bf16.msra.mxu0 %v222
  %473 = vmatprep.subr.bf16.mxu0 0
  %474 = vmatpush1.bf16.msra.mxu0 %v223
  %475 = vmatprep.subr.bf16.mxu0 0
  %476 = vmatpush1.bf16.msra.mxu0 %v224
  %477 = vmatprep.subr.bf16.mxu0 0
  %478 = vmatpush1.bf16.msra.mxu0 %v225
  %479 = vmatprep.subr.bf16.mxu0 0
  %480 = vmatpush1.bf16.msra.mxu0 %v226
  %481 = vmatprep.subr.bf16.mxu0 0
  %482 = vmatpush1.bf16.msra.mxu0 %v227
  %483 = vmatprep.subr.bf16.mxu0 0
  %484 = vmatpush1.bf16.msra.mxu0 %v228
  %485 = vmatprep.subr.bf16.mxu0 0
  %486 = vmatpush1.bf16.msra.mxu0 %v229
  %487 = vmatprep.mubr.bf16.mxu0 %v424
  %488 = vmatmul.mubr.bf16.gmra.mrb[0].mxu0 %v423
  %v489 = vpop.f32.mrb[0].mxu0
  %v490 = vadd.f32 %v68, %v489
  %v491 = vpop.f32.mrb[0].mxu0
  %v492 = vpop.f32.mrb[0].mxu0
  %v493 = vadd.f32 %v68, %v492
  %v494 = vpop.f32.mrb[0].mxu0
  %495 = vmatprep.mubr.bf16.mxu0 %v426
  %496 = vmatmul.mubr.bf16.gmra.mrb[0].mxu0 %v425
  %v497 = vpop.f32.mrb[0].mxu0
  %v498 = vadd.f32 %v68, %v497
  %v499 = vpop.f32.mrb[0].mxu0
  %v500 = vpop.f32.mrb[0].mxu0
  %v501 = vadd.f32 %v68, %v500
  %v502 = vpop.f32.mrb[0].mxu0
  %503 = vmatprep.mubr.bf16.mxu0 %v428
  %504 = vmatmul.mubr.bf16.gmra.mrb[0].mxu0 %v427
  %v505 = vpop.f32.mrb[0].mxu0
  %v506 = vadd.f32 %v68, %v505
  %v507 = vpop.f32.mrb[0].mxu0
  %v508 = vpop.f32.mrb[0].mxu0
  %v509 = vadd.f32 %v68, %v508
  %v510 = vpop.f32.mrb[0].mxu0
  %511 = vmatprep.mubr.bf16.mxu0 %v430
  %512 = vmatmul.mubr.bf16.gmra.mrb[0].mxu0 %v429
  %v513 = vpop.f32.mrb[0].mxu0
  %v514 = vadd.f32 %v68, %v513
  %v515 = vpop.f32.mrb[0].mxu0
  %v516 = vpop.f32.mrb[0].mxu0
  %v517 = vadd.f32 %v68, %v516
  %v518 = vpop.f32.mrb[0].mxu0
  %519 = vmatprep.mubr.bf16.mxu0 %v432
  %520 = vmatmul.mubr.bf16.gmra.mrb[0].mxu0 %v431
  %v521 = vpop.f32.mrb[0].mxu0
  %v522 = vadd.f32 %v68, %v521
  %v523 = vpop.f32.mrb[0].mxu0
  %v524 = vpop.f32.mrb[0].mxu0
  %v525 = vadd.f32 %v68, %v524
  %v526 = vpop.f32.mrb[0].mxu0
  %527 = vmatprep.mubr.bf16.mxu0 %v434
  %528 = vmatmul.mubr.bf16.gmra.mrb[0].mxu0 %v433
  %v529 = vpop.f32.mrb[0].mxu0
  %v530 = vadd.f32 %v68, %v529
  %v531 = vpop.f32.mrb[0].mxu0
  %v532 = vpop.f32.mrb[0].mxu0
  %v533 = vadd.f32 %v68, %v532
  %v534 = vpop.f32.mrb[0].mxu0
  %535 = vmatprep.mubr.bf16.mxu0 %v436
  %536 = vmatmul.mubr.bf16.gmra.mrb[0].mxu0 %v435
  %v537 = vpop.f32.mrb[0].mxu0
  %v538 = vadd.f32 %v68, %v537
  %v539 = vpop.f32.mrb[0].mxu0
  %v540 = vpop.f32.mrb[0].mxu0
  %v541 = vadd.f32 %v68, %v540
  %v542 = vpop.f32.mrb[0].mxu0
  %543 = vmatprep.mubr.bf16.mxu0 %v438
  %544 = vmatmul.mubr.bf16.gmra.mrb[0].mxu0 %v437
  %v545 = vpop.f32.mrb[0].mxu0
  %v546 = vadd.f32 %v68, %v545
  %v547 = vpop.f32.mrb[0].mxu0
  %v548 = vpop.f32.mrb[0].mxu0
  %v549 = vadd.f32 %v68, %v548
  %v550 = vpop.f32.mrb[0].mxu0
  %551 = vdwg.mxu0
  %v552 = vmax.f32 %v490, 0.0
  %v553 = vmax.f32 %v493, 0.0
  %v554 = vmax.f32 %v498, 0.0
  %v555 = vmax.f32 %v501, 0.0
  %v556 = vmax.f32 %v506, 0.0
  %v557 = vmax.f32 %v509, 0.0
  %v558 = vmax.f32 %v514, 0.0
  %v559 = vmax.f32 %v517, 0.0
  %v560 = vmax.f32 %v522, 0.0
  %v561 = vmax.f32 %v525, 0.0
  %v562 = vmax.f32 %v530, 0.0
  %v563 = vmax.f32 %v533, 0.0
  %v564 = vmax.f32 %v538, 0.0
  %v565 = vmax.f32 %v541, 0.0
  %v566 = vmax.f32 %v546, 0.0
  %v567 = vmax.f32 %v549, 0.0
  %v568 = vmax.f32 %v343, %v552
  %v569 = vmax.f32 %v344, %v553
  %v570 = vmax.f32 %v345, %v554
  %v571 = vmax.f32 %v346, %v555
  %v572 = vmax.f32 %v347, %v556
  %v573 = vmax.f32 %v348, %v557
  %v574 = vmax.f32 %v349, %v558
  %v575 = vmax.f32 %v350, %v559
  %v576 = vmax.f32 %v351, %v560
  %v577 = vmax.f32 %v352, %v561
  %v578 = vmax.f32 %v353, %v562
  %v579 = vmax.f32 %v354, %v563
  %v580 = vmax.f32 %v355, %v564
  %v581 = vmax.f32 %v356, %v565
  %v582 = vmax.f32 %v357, %v566
  %v583 = vmax.f32 %v358, %v567
  %v584 = vld [vmem:[%s0 + $0x10] sm:$0xff]
  %v585 = vld [vmem:[%s0 + $0x30] sm:$0xff]
  %v586 = vld [vmem:[%s0 + $0x50] sm:$0xff]
  %v587 = vld [vmem:[%s0 + $0x70] sm:$0xff]
  %v588 = vld [vmem:[%s0 + $0x90] sm:$0xff]
  %v589 = vld [vmem:[%s0 + $0xb0] sm:$0xff]
  %v590 = vld [vmem:[%s0 + $0xd0] sm:$0xff]
  %v591 = vld [vmem:[%s0 + $0xf0] sm:$0xff]
  %v592 = vld [vmem:[%s0 + $0x110] sm:$0xff]
  %v593 = vld [vmem:[%s0 + $0x130] sm:$0xff]
  %v594 = vld [vmem:[%s0 + $0x150] sm:$0xff]
  %v595 = vld [vmem:[%s0 + $0x170] sm:$0xff]
  %v596 = vld [vmem:[%s0 + $0x190] sm:$0xff]
  %v597 = vld [vmem:[%s0 + $0x1b0] sm:$0xff]
  %v598 = vld [vmem:[%s0 + $0x1d0] sm:$0xff]
  %v599 = vld [vmem:[%s0 + $0x1f0] sm:$0xff]
  %v616 = vunpack.c.l.b16 %v584
  %v617 = vunpack.c.h.b16 %v584
  %v618 = vunpack.c.l.b16 %v585
  %v619 = vunpack.c.h.b16 %v585
  %v620 = vunpack.c.l.b16 %v586
  %v621 = vunpack.c.h.b16 %v586
  %v622 = vunpack.c.l.b16 %v587
  %v623 = vunpack.c.h.b16 %v587
  %v624 = vunpack.c.l.b16 %v588
  %v625 = vunpack.c.h.b16 %v588
  %v626 = vunpack.c.l.b16 %v589
  %v627 = vunpack.c.h.b16 %v589
  %v628 = vunpack.c.l.b16 %v590
  %v629 = vunpack.c.h.b16 %v590
  %v630 = vunpack.c.l.b16 %v591
  %v631 = vunpack.c.h.b16 %v591
  %v632 = vunpack.c.l.b16 %v592
  %v633 = vunpack.c.h.b16 %v592
  %v634 = vunpack.c.l.b16 %v593
  %v635 = vunpack.c.h.b16 %v593
  %v636 = vunpack.c.l.b16 %v594
  %v637 = vunpack.c.h.b16 %v594
  %v638 = vunpack.c.l.b16 %v595
  %v639 = vunpack.c.h.b16 %v595
  %v640 = vunpack.c.l.b16 %v596
  %v641 = vunpack.c.h.b16 %v596
  %v642 = vunpack.c.l.b16 %v597
  %v643 = vunpack.c.h.b16 %v597
  %v644 = vunpack.c.l.b16 %v598
  %v645 = vunpack.c.h.b16 %v598
  %v646 = vunpack.c.l.b16 %v599
  %v647 = vunpack.c.h.b16 %v599
  %v648 = vpack.c.b16 %v618, %v616
  %v649 = vpack.c.b16 %v619, %v617
  %v650 = vpack.c.b16 %v622, %v620
  %v651 = vpack.c.b16 %v623, %v621
  %v652 = vpack.c.b16 %v626, %v624
  %v653 = vpack.c.b16 %v627, %v625
  %v654 = vpack.c.b16 %v630, %v628
  %v655 = vpack.c.b16 %v631, %v629
  %v656 = vpack.c.b16 %v634, %v632
  %v657 = vpack.c.b16 %v635, %v633
  %v658 = vpack.c.b16 %v638, %v636
  %v659 = vpack.c.b16 %v639, %v637
  %v660 = vpack.c.b16 %v642, %v640
  %v661 = vpack.c.b16 %v643, %v641
  %v662 = vpack.c.b16 %v646, %v644
  %v663 = vpack.c.b16 %v647, %v645
  %680 = vmatprep.subr.bf16.mxu0 0
  %681 = vmatpush1.bf16.msra.mxu0 %v214
  %682 = vmatprep.subr.bf16.mxu0 0
  %683 = vmatpush1.bf16.msra.mxu0 %v215
  %684 = vmatprep.subr.bf16.mxu0 0
  %685 = vmatpush1.bf16.msra.mxu0 %v216
  %686 = vmatprep.subr.bf16.mxu0 0
  %687 = vmatpush1.bf16.msra.mxu0 %v217
  %688 = vmatprep.subr.bf16.mxu0 0
  %689 = vmatpush1.bf16.msra.mxu0 %v218
  %690 = vmatprep.subr.bf16.mxu0 0
  %691 = vmatpush1.bf16.msra.mxu0 %v219
  %692 = vmatprep.subr.bf16.mxu0 0
  %693 = vmatpush1.bf16.msra.mxu0 %v220
  %694 = vmatprep.subr.bf16.mxu0 0
  %695 = vmatpush1.bf16.msra.mxu0 %v221
  %696 = vmatprep.subr.bf16.mxu0 0
  %697 = vmatpush1.bf16.msra.mxu0 %v222
  %698 = vmatprep.subr.bf16.mxu0 0
  %699 = vmatpush1.bf16.msra.mxu0 %v223
  %700 = vmatprep.subr.bf16.mxu0 0
  %701 = vmatpush1.bf16.msra.mxu0 %v224
  %702 = vmatprep.subr.bf16.mxu0 0
  %703 = vmatpush1.bf16.msra.mxu0 %v225
  %704 = vmatprep.subr.bf16.mxu0 0
  %705 = vmatpush1.bf16.msra.mxu0 %v226
  %706 = vmatprep.subr.bf16.mxu0 0
  %707 = vmatpush1.bf16.msra.mxu0 %v227
  %708 = vmatprep.subr.bf16.mxu0 0
  %709 = vmatpush1.bf16.msra.mxu0 %v228
  %710 = vmatprep.subr.bf16.mxu0 0
  %711 = vmatpush1.bf16.msra.mxu0 %v229
  %712 = vmatprep.mubr.bf16.mxu0 %v649
  %713 = vmatmul.mubr.bf16.gmra.mrb[0].mxu0 %v648
  %v714 = vpop.f32.mrb[0].mxu0
  %v715 = vadd.f32 %v68, %v714
  %v716 = vpop.f32.mrb[0].mxu0
  %v717 = vpop.f32.mrb[0].mxu0
  %v718 = vadd.f32 %v68, %v717
  %v719 = vpop.f32.mrb[0].mxu0
  %720 = vmatprep.mubr.bf16.mxu0 %v651
  %721 = vmatmul.mubr.bf16.gmra.mrb[0].mxu0 %v650
  %v722 = vpop.f32.mrb[0].mxu0
  %v723 = vadd.f32 %v68, %v722
  %v724 = vpop.f32.mrb[0].mxu0
  %v725 = vpop.f32.mrb[0].mxu0
  %v726 = vadd.f32 %v68, %v725
  %v727 = vpop.f32.mrb[0].mxu0
  %728 = vmatprep.mubr.bf16.mxu0 %v653
  %729 = vmatmul.mubr.bf16.gmra.mrb[0].mxu0 %v652
  %v730 = vpop.f32.mrb[0].mxu0
  %v731 = vadd.f32 %v68, %v730
  %v732 = vpop.f32.mrb[0].mxu0
  %v733 = vpop.f32.mrb[0].mxu0
  %v734 = vadd.f32 %v68, %v733
  %v735 = vpop.f32.mrb[0].mxu0
  %736 = vmatprep.mubr.bf16.mxu0 %v655
  %737 = vmatmul.mubr.bf16.gmra.mrb[0].mxu0 %v654
  %v738 = vpop.f32.mrb[0].mxu0
  %v739 = vadd.f32 %v68, %v738
  %v740 = vpop.f32.mrb[0].mxu0
  %v741 = vpop.f32.mrb[0].mxu0
  %v742 = vadd.f32 %v68, %v741
  %v743 = vpop.f32.mrb[0].mxu0
  %744 = vmatprep.mubr.bf16.mxu0 %v657
  %745 = vmatmul.mubr.bf16.gmra.mrb[0].mxu0 %v656
  %v746 = vpop.f32.mrb[0].mxu0
  %v747 = vadd.f32 %v68, %v746
  %v748 = vpop.f32.mrb[0].mxu0
  %v749 = vpop.f32.mrb[0].mxu0
  %v750 = vadd.f32 %v68, %v749
  %v751 = vpop.f32.mrb[0].mxu0
  %752 = vmatprep.mubr.bf16.mxu0 %v659
  %753 = vmatmul.mubr.bf16.gmra.mrb[0].mxu0 %v658
  %v754 = vpop.f32.mrb[0].mxu0
  %v755 = vadd.f32 %v68, %v754
  %v756 = vpop.f32.mrb[0].mxu0
  %v757 = vpop.f32.mrb[0].mxu0
  %v758 = vadd.f32 %v68, %v757
  %v759 = vpop.f32.mrb[0].mxu0
  %760 = vmatprep.mubr.bf16.mxu0 %v661
  %761 = vmatmul.mubr.bf16.gmra.mrb[0].mxu0 %v660
  %v762 = vpop.f32.mrb[0].mxu0
  %v763 = vadd.f32 %v68, %v762
  %v764 = vpop.f32.mrb[0].mxu0
  %v765 = vpop.f32.mrb[0].mxu0
  %v766 = vadd.f32 %v68, %v765
  %v767 = vpop.f32.mrb[0].mxu0
  %768 = vmatprep.mubr.bf16.mxu0 %v663
  %769 = vmatmul.mubr.bf16.gmra.mrb[0].mxu0 %v662
  %v770 = vpop.f32.mrb[0].mxu0
  %v771 = vadd.f32 %v68, %v770
  %v772 = vpop.f32.mrb[0].mxu0
  %v773 = vpop.f32.mrb[0].mxu0
  %v774 = vadd.f32 %v68, %v773
  %v775 = vpop.f32.mrb[0].mxu0
  %776 = vdwg.mxu0
  %v777 = vmax.f32 %v715, 0.0
  %v778 = vmax.f32 %v718, 0.0
  %v779 = vmax.f32 %v723, 0.0
  %v780 = vmax.f32 %v726, 0.0
  %v781 = vmax.f32 %v731, 0.0
  %v782 = vmax.f32 %v734, 0.0
  %v783 = vmax.f32 %v739, 0.0
  %v784 = vmax.f32 %v742, 0.0
  %v785 = vmax.f32 %v747, 0.0
  %v786 = vmax.f32 %v750, 0.0
  %v787 = vmax.f32 %v755, 0.0
  %v788 = vmax.f32 %v758, 0.0
  %v789 = vmax.f32 %v763, 0.0
  %v790 = vmax.f32 %v766, 0.0
  %v791 = vmax.f32 %v771, 0.0
  %v792 = vmax.f32 %v774, 0.0
  %v793 = vmax.f32 %v568, %v777
  %v794 = vmax.f32 %v569, %v778
  %v795 = vmax.f32 %v570, %v779
  %v796 = vmax.f32 %v571, %v780
  %v797 = vmax.f32 %v572, %v781
  %v798 = vmax.f32 %v573, %v782
  %v799 = vmax.f32 %v574, %v783
  %v800 = vmax.f32 %v575, %v784
  %v801 = vmax.f32 %v576, %v785
  %v802 = vmax.f32 %v577, %v786
  %v803 = vmax.f32 %v578, %v787
  %v804 = vmax.f32 %v579, %v788
  %v805 = vmax.f32 %v580, %v789
  %v806 = vmax.f32 %v581, %v790
  %v807 = vmax.f32 %v582, %v791
  %v808 = vmax.f32 %v583, %v792
  %v809 = vld [vmem:[%s0 + $0x18] sm:$0xff]
  %v810 = vld [vmem:[%s0 + $0x38] sm:$0xff]
  %v811 = vld [vmem:[%s0 + $0x58] sm:$0xff]
  %v812 = vld [vmem:[%s0 + $0x78] sm:$0xff]
  %v813 = vld [vmem:[%s0 + $0x98] sm:$0xff]
  %v814 = vld [vmem:[%s0 + $0xb8] sm:$0xff]
  %v815 = vld [vmem:[%s0 + $0xd8] sm:$0xff]
  %v816 = vld [vmem:[%s0 + $0xf8] sm:$0xff]
  %v817 = vld [vmem:[%s0 + $0x118] sm:$0xff]
  %v818 = vld [vmem:[%s0 + $0x138] sm:$0xff]
  %v819 = vld [vmem:[%s0 + $0x158] sm:$0xff]
  %v820 = vld [vmem:[%s0 + $0x178] sm:$0xff]
  %v821 = vld [vmem:[%s0 + $0x198] sm:$0xff]
  %v822 = vld [vmem:[%s0 + $0x1b8] sm:$0xff]
  %v823 = vld [vmem:[%s0 + $0x1d8] sm:$0xff]
  %v824 = vld [vmem:[%s0 + $0x1f8] sm:$0xff]
  %v841 = vunpack.c.l.b16 %v809
  %v842 = vunpack.c.h.b16 %v809
  %v843 = vunpack.c.l.b16 %v810
  %v844 = vunpack.c.h.b16 %v810
  %v845 = vunpack.c.l.b16 %v811
  %v846 = vunpack.c.h.b16 %v811
  %v847 = vunpack.c.l.b16 %v812
  %v848 = vunpack.c.h.b16 %v812
  %v849 = vunpack.c.l.b16 %v813
  %v850 = vunpack.c.h.b16 %v813
  %v851 = vunpack.c.l.b16 %v814
  %v852 = vunpack.c.h.b16 %v814
  %v853 = vunpack.c.l.b16 %v815
  %v854 = vunpack.c.h.b16 %v815
  %v855 = vunpack.c.l.b16 %v816
  %v856 = vunpack.c.h.b16 %v816
  %v857 = vunpack.c.l.b16 %v817
  %v858 = vunpack.c.h.b16 %v817
  %v859 = vunpack.c.l.b16 %v818
  %v860 = vunpack.c.h.b16 %v818
  %v861 = vunpack.c.l.b16 %v819
  %v862 = vunpack.c.h.b16 %v819
  %v863 = vunpack.c.l.b16 %v820
  %v864 = vunpack.c.h.b16 %v820
  %v865 = vunpack.c.l.b16 %v821
  %v866 = vunpack.c.h.b16 %v821
  %v867 = vunpack.c.l.b16 %v822
  %v868 = vunpack.c.h.b16 %v822
  %v869 = vunpack.c.l.b16 %v823
  %v870 = vunpack.c.h.b16 %v823
  %v871 = vunpack.c.l.b16 %v824
  %v872 = vunpack.c.h.b16 %v824
  %v873 = vpack.c.b16 %v843, %v841
  %v874 = vpack.c.b16 %v844, %v842
  %v875 = vpack.c.b16 %v847, %v845
  %v876 = vpack.c.b16 %v848, %v846
  %v877 = vpack.c.b16 %v851, %v849
  %v878 = vpack.c.b16 %v852, %v850
  %v879 = vpack.c.b16 %v855, %v853
  %v880 = vpack.c.b16 %v856, %v854
  %v881 = vpack.c.b16 %v859, %v857
  %v882 = vpack.c.b16 %v860, %v858
  %v883 = vpack.c.b16 %v863, %v861
  %v884 = vpack.c.b16 %v864, %v862
  %v885 = vpack.c.b16 %v867, %v865
  %v886 = vpack.c.b16 %v868, %v866
  %v887 = vpack.c.b16 %v871, %v869
  %v888 = vpack.c.b16 %v872, %v870
  %905 = vmatprep.subr.bf16.mxu0 0
  %906 = vmatpush1.bf16.msra.mxu0 %v214
  %907 = vmatprep.subr.bf16.mxu0 0
  %908 = vmatpush1.bf16.msra.mxu0 %v215
  %909 = vmatprep.subr.bf16.mxu0 0
  %910 = vmatpush1.bf16.msra.mxu0 %v216
  %911 = vmatprep.subr.bf16.mxu0 0
  %912 = vmatpush1.bf16.msra.mxu0 %v217
  %913 = vmatprep.subr.bf16.mxu0 0
  %914 = vmatpush1.bf16.msra.mxu0 %v218
  %915 = vmatprep.subr.bf16.mxu0 0
  %916 = vmatpush1.bf16.msra.mxu0 %v219
  %917 = vmatprep.subr.bf16.mxu0 0
  %918 = vmatpush1.bf16.msra.mxu0 %v220
  %919 = vmatprep.subr.bf16.mxu0 0
  %920 = vmatpush1.bf16.msra.mxu0 %v221
  %921 = vmatprep.subr.bf16.mxu0 0
  %922 = vmatpush1.bf16.msra.mxu0 %v222
  %923 = vmatprep.subr.bf16.mxu0 0
  %924 = vmatpush1.bf16.msra.mxu0 %v223
  %925 = vmatprep.subr.bf16.mxu0 0
  %926 = vmatpush1.bf16.msra.mxu0 %v224
  %927 = vmatprep.subr.bf16.mxu0 0
  %928 = vmatpush1.bf16.msra.mxu0 %v225
  %929 = vmatprep.subr.bf16.mxu0 0
  %930 = vmatpush1.bf16.msra.mxu0 %v226
  %931 = vmatprep.subr.bf16.mxu0 0
  %932 = vmatpush1.bf16.msra.mxu0 %v227
  %933 = vmatprep.subr.bf16.mxu0 0
  %934 = vmatpush1.bf16.msra.mxu0 %v228
  %935 = vmatprep.subr.bf16.mxu0 0
  %936 = vmatpush1.bf16.msra.mxu0 %v229
  %937 = vmatprep.mubr.bf16.mxu0 %v874
  %938 = vmatmul.mubr.bf16.gmra.mrb[0].mxu0 %v873
  %v939 = vpop.f32.mrb[0].mxu0
  %v940 = vadd.f32 %v68, %v939
  %v941 = vpop.f32.mrb[0].mxu0
  %v942 = vpop.f32.mrb[0].mxu0
  %v943 = vadd.f32 %v68, %v942
  %v944 = vpop.f32.mrb[0].mxu0
  %945 = vmatprep.mubr.bf16.mxu0 %v876
  %946 = vmatmul.mubr.bf16.gmra.mrb[0].mxu0 %v875
  %v947 = vpop.f32.mrb[0].mxu0
  %v948 = vadd.f32 %v68, %v947
  %v949 = vpop.f32.mrb[0].mxu0
  %v950 = vpop.f32.mrb[0].mxu0
  %v951 = vadd.f32 %v68, %v950
  %v952 = vpop.f32.mrb[0].mxu0
  %953 = vmatprep.mubr.bf16.mxu0 %v878
  %954 = vmatmul.mubr.bf16.gmra.mrb[0].mxu0 %v877
  %v955 = vpop.f32.mrb[0].mxu0
  %v956 = vadd.f32 %v68, %v955
  %v957 = vpop.f32.mrb[0].mxu0
  %v958 = vpop.f32.mrb[0].mxu0
  %v959 = vadd.f32 %v68, %v958
  %v960 = vpop.f32.mrb[0].mxu0
  %961 = vmatprep.mubr.bf16.mxu0 %v880
  %962 = vmatmul.mubr.bf16.gmra.mrb[0].mxu0 %v879
  %v963 = vpop.f32.mrb[0].mxu0
  %v964 = vadd.f32 %v68, %v963
  %v965 = vpop.f32.mrb[0].mxu0
  %v966 = vpop.f32.mrb[0].mxu0
  %v967 = vadd.f32 %v68, %v966
  %v968 = vpop.f32.mrb[0].mxu0
  %969 = vmatprep.mubr.bf16.mxu0 %v882
  %970 = vmatmul.mubr.bf16.gmra.mrb[0].mxu0 %v881
  %v971 = vpop.f32.mrb[0].mxu0
  %v972 = vadd.f32 %v68, %v971
  %v973 = vpop.f32.mrb[0].mxu0
  %v974 = vpop.f32.mrb[0].mxu0
  %v975 = vadd.f32 %v68, %v974
  %v976 = vpop.f32.mrb[0].mxu0
  %977 = vmatprep.mubr.bf16.mxu0 %v884
  %978 = vmatmul.mubr.bf16.gmra.mrb[0].mxu0 %v883
  %v979 = vpop.f32.mrb[0].mxu0
  %v980 = vadd.f32 %v68, %v979
  %v981 = vpop.f32.mrb[0].mxu0
  %v982 = vpop.f32.mrb[0].mxu0
  %v983 = vadd.f32 %v68, %v982
  %v984 = vpop.f32.mrb[0].mxu0
  %985 = vmatprep.mubr.bf16.mxu0 %v886
  %986 = vmatmul.mubr.bf16.gmra.mrb[0].mxu0 %v885
  %v987 = vpop.f32.mrb[0].mxu0
  %v988 = vadd.f32 %v68, %v987
  %v989 = vpop.f32.mrb[0].mxu0
  %v990 = vpop.f32.mrb[0].mxu0
  %v991 = vadd.f32 %v68, %v990
  %v992 = vpop.f32.mrb[0].mxu0
  %993 = vmatprep.mubr.bf16.mxu0 %v888
  %994 = vmatmul.mubr.bf16.gmra.mrb[0].mxu0 %v887
  %v995 = vpop.f32.mrb[0].mxu0
  %v996 = vadd.f32 %v68, %v995
  %v997 = vpop.f32.mrb[0].mxu0
  %v998 = vpop.f32.mrb[0].mxu0
  %v999 = vadd.f32 %v68, %v998
  %v1000 = vpop.f32.mrb[0].mxu0
  %1001 = vdwg.mxu0
  %v1002 = vmax.f32 %v940, 0.0
  %v1003 = vmax.f32 %v943, 0.0
  %v1004 = vmax.f32 %v948, 0.0
  %v1005 = vmax.f32 %v951, 0.0
  %v1006 = vmax.f32 %v956, 0.0
  %v1007 = vmax.f32 %v959, 0.0
  %v1008 = vmax.f32 %v964, 0.0
  %v1009 = vmax.f32 %v967, 0.0
  %v1010 = vmax.f32 %v972, 0.0
  %v1011 = vmax.f32 %v975, 0.0
  %v1012 = vmax.f32 %v980, 0.0
  %v1013 = vmax.f32 %v983, 0.0
  %v1014 = vmax.f32 %v988, 0.0
  %v1015 = vmax.f32 %v991, 0.0
  %v1016 = vmax.f32 %v996, 0.0
  %v1017 = vmax.f32 %v999, 0.0
  %v1018 = vmax.f32 %v793, %v1002
  %v1019 = vmax.f32 %v794, %v1003
  %v1020 = vmax.f32 %v795, %v1004
  %v1021 = vmax.f32 %v796, %v1005
  %v1022 = vmax.f32 %v797, %v1006
  %v1023 = vmax.f32 %v798, %v1007
  %v1024 = vmax.f32 %v799, %v1008
  %v1025 = vmax.f32 %v800, %v1009
  %v1026 = vmax.f32 %v801, %v1010
  %v1027 = vmax.f32 %v802, %v1011
  %v1028 = vmax.f32 %v803, %v1012
  %v1029 = vmax.f32 %v804, %v1013
  %v1030 = vmax.f32 %v805, %v1014
  %v1031 = vmax.f32 %v806, %v1015
  %v1032 = vmax.f32 %v807, %v1016
  %v1033 = vmax.f32 %v808, %v1017
  %v1034 = vpack.c.bf16 %v1019, %v1018
  %v1035 = vpack.c.bf16 %v1021, %v1020
  %v1036 = vpack.c.bf16 %v1023, %v1022
  %v1037 = vpack.c.bf16 %v1025, %v1024
  %v1038 = vpack.c.bf16 %v1027, %v1026
  %v1039 = vpack.c.bf16 %v1029, %v1028
  %v1040 = vpack.c.bf16 %v1031, %v1030
  %v1041 = vpack.c.bf16 %v1033, %v1032
  %v1050 = vunpack.c.l.b16 %v1034
  %v1051 = vunpack.c.h.b16 %v1034
  %v1052 = vunpack.c.l.b16 %v1035
  %v1053 = vunpack.c.h.b16 %v1035
  %v1054 = vunpack.c.l.b16 %v1036
  %v1055 = vunpack.c.h.b16 %v1036
  %v1056 = vunpack.c.l.b16 %v1037
  %v1057 = vunpack.c.h.b16 %v1037
  %v1058 = vunpack.c.l.b16 %v1038
  %v1059 = vunpack.c.h.b16 %v1038
  %v1060 = vunpack.c.l.b16 %v1039
  %v1061 = vunpack.c.h.b16 %v1039
  %v1062 = vunpack.c.l.b16 %v1040
  %v1063 = vunpack.c.h.b16 %v1040
  %v1064 = vunpack.c.l.b16 %v1041
  %v1065 = vunpack.c.h.b16 %v1041
  %v1066 = vpack.c.b16 %v1050, %v1050
  %v1067 = vpack.c.b16 %v1051, %v1051
  %v1068 = vpack.c.b16 %v1052, %v1052
  %v1069 = vpack.c.b16 %v1053, %v1053
  %v1070 = vpack.c.b16 %v1054, %v1054
  %v1071 = vpack.c.b16 %v1055, %v1055
  %v1072 = vpack.c.b16 %v1056, %v1056
  %v1073 = vpack.c.b16 %v1057, %v1057
  %v1074 = vpack.c.b16 %v1058, %v1058
  %v1075 = vpack.c.b16 %v1059, %v1059
  %v1076 = vpack.c.b16 %v1060, %v1060
  %v1077 = vpack.c.b16 %v1061, %v1061
  %v1078 = vpack.c.b16 %v1062, %v1062
  %v1079 = vpack.c.b16 %v1063, %v1063
  %v1080 = vpack.c.b16 %v1064, %v1064
  %v1081 = vpack.c.b16 %v1065, %v1065
  %vm1098 = vcmask 257024
  %1099 = vst.msk [vmem:[%s3] sm:$0xf] %vm1098, %v1066
  %1100 = vst.msk [vmem:[%s3 + $0x4] sm:$0xf] %vm1098, %v1067
  %1101 = vst.msk [vmem:[%s3 + $0x8] sm:$0xf] %vm1098, %v1068
  %1102 = vst.msk [vmem:[%s3 + $0xc] sm:$0xf] %vm1098, %v1069
  %1103 = vst.msk [vmem:[%s3 + $0x10] sm:$0xf] %vm1098, %v1070
  %1104 = vst.msk [vmem:[%s3 + $0x14] sm:$0xf] %vm1098, %v1071
  %1105 = vst.msk [vmem:[%s3 + $0x18] sm:$0xf] %vm1098, %v1072
  %1106 = vst.msk [vmem:[%s3 + $0x1c] sm:$0xf] %vm1098, %v1073
  %1107 = vst.msk [vmem:[%s3 + $0x20] sm:$0xf] %vm1098, %v1074
  %1108 = vst.msk [vmem:[%s3 + $0x24] sm:$0xf] %vm1098, %v1075
  %1109 = vst.msk [vmem:[%s3 + $0x28] sm:$0xf] %vm1098, %v1076
  %1110 = vst.msk [vmem:[%s3 + $0x2c] sm:$0xf] %vm1098, %v1077
  %1111 = vst.msk [vmem:[%s3 + $0x30] sm:$0xf] %vm1098, %v1078
  %1112 = vst.msk [vmem:[%s3 + $0x34] sm:$0xf] %vm1098, %v1079
  %1113 = vst.msk [vmem:[%s3 + $0x38] sm:$0xf] %vm1098, %v1080
  %1114 = vst.msk [vmem:[%s3 + $0x3c] sm:$0xf] %vm1098, %v1081
  // Predicated region
  $region14: #{teacher_cnn_mnist_forward.4} parent=0 // pred_check
    _
  $region15: #{teacher_cnn_mnist_forward.4} parent=0 // pred_check_branch
    %1116 = sbr.rel (0) target = $region17
  $region16: #{teacher_cnn_mnist_forward.4} parent=0 // pred_region
    _
  $region17: #{teacher_cnn_mnist_forward.4} parent=0 // pred_fallthru
    _
  // Predicated region
  $region18: #{teacher_cnn_mnist_forward.4} parent=0 // pred_check
    _
  $region19: #{teacher_cnn_mnist_forward.4} parent=0 // pred_check_branch
    %1118 = sbr.rel (0) target = $region21
  $region20: #{teacher_cnn_mnist_forward.4} parent=0 // pred_region
    _
  $region21: #{teacher_cnn_mnist_forward.4} parent=0 // pred_fallthru
    _

// kernel: teacher_cnn_mnist_forward.5
$region0: #{teacher_cnn_mnist_forward.5}
  #allocation0 [shape = 'u32[]', space=smem, size = 0x4, offset = 0x4, fixed_abs, tag = 'smem constant byte address 0x4 - core index']
  #allocation1 [shape = 'u32[144,128]{1,0:T(1,128)}', space=vmem, size = 0x12000, scoped, tag = 'internal scratch']
  %s0 = inlined_call_operand.vmem [shape: bf16[8,512], index: 0, kind: input, shape index: {}]
  %s1 = inlined_call_operand.vmem [shape: bf16[512,128], index: 1, kind: input, shape index: {}]
  %s2 = inlined_call_operand.vmem [shape: f32[1,128], index: 2, kind: input, shape index: {}]
  %s3 = inlined_call_operand.vmem [shape: bf16[128,128], index: 3, kind: input, shape index: {}]
  %s4 = inlined_call_operand.vmem [shape: f32[1,128], index: 4, kind: input, shape index: {}]
  %s5 = inlined_call_operand.vmem [shape: f32[8,128], index: 5, kind: output, shape index: {}]
  %s6 = sld [smem:[#allocation0]]
  $region30: #{teacher_cnn_mnist_forward.5} parent=0
    _
  %s8 = ssub.s32 1, %s6
  %s9 = scalar_select 0, %s8, %s6
  // Predicated region
  $region2: #{teacher_cnn_mnist_forward.5} parent=0 // pred_check
    _
  $region3: #{teacher_cnn_mnist_forward.5} parent=0 // pred_check_branch
    %11 = sbr.rel (0) target = $region5
  $region4: #{teacher_cnn_mnist_forward.5} parent=0 // pred_region
    _
  $region5: #{teacher_cnn_mnist_forward.5} parent=0 // pred_fallthru
    _
  // Predicated region
  $region6: #{teacher_cnn_mnist_forward.5} parent=0 // pred_check
    _
  $region7: #{teacher_cnn_mnist_forward.5} parent=0 // pred_check_branch
    %13 = sbr.rel (0) target = $region9
  $region8: #{teacher_cnn_mnist_forward.5} parent=0 // pred_region
    _
  $region9: #{teacher_cnn_mnist_forward.5} parent=0 // pred_fallthru
    _
  // Predicated region
  $region10: #{teacher_cnn_mnist_forward.5} parent=0 // pred_check
    _
  $region11: #{teacher_cnn_mnist_forward.5} parent=0 // pred_check_branch
    %15 = sbr.rel (0) target = $region13
  $region12: #{teacher_cnn_mnist_forward.5} parent=0 // pred_region
    _
  $region13: #{teacher_cnn_mnist_forward.5} parent=0 // pred_fallthru
    _
  // Predicated region
  $region14: #{teacher_cnn_mnist_forward.5} parent=0 // pred_check
    _
  $region15: #{teacher_cnn_mnist_forward.5} parent=0 // pred_check_branch
    %17 = sbr.rel (0) target = $region17
  $region16: #{teacher_cnn_mnist_forward.5} parent=0 // pred_region
    _
  $region17: #{teacher_cnn_mnist_forward.5} parent=0 // pred_fallthru
    _
  // Predicated region
  $region18: #{teacher_cnn_mnist_forward.5} parent=0 // pred_check
    _
  $region19: #{teacher_cnn_mnist_forward.5} parent=0 // pred_check_branch
    %19 = sbr.rel (0) target = $region21
  $region20: #{teacher_cnn_mnist_forward.5} parent=0 // pred_region
    _
  $region21: #{teacher_cnn_mnist_forward.5} parent=0 // pred_fallthru
    _
  %v21 = vld [vmem:[%s0] sm:$0xff]
  %v22 = vld [vmem:[%s0 + $0x8] sm:$0xff]
  %v23 = vld [vmem:[%s1] sm:$0xf]
  %v24 = vld [vmem:[%s1 + $0x4] sm:$0xf]
  %v25 = vld [vmem:[%s1 + $0x8] sm:$0xf]
  %v26 = vld [vmem:[%s1 + $0xc] sm:$0xf]
  %v27 = vld [vmem:[%s1 + $0x10] sm:$0xf]
  %v28 = vld [vmem:[%s1 + $0x14] sm:$0xf]
  %v29 = vld [vmem:[%s1 + $0x18] sm:$0xf]
  %v30 = vld [vmem:[%s1 + $0x1c] sm:$0xf]
  %v31 = vld [vmem:[%s1 + $0x20] sm:$0xf]
  %v32 = vld [vmem:[%s1 + $0x24] sm:$0xf]
  %v33 = vld [vmem:[%s1 + $0x28] sm:$0xf]
  %v34 = vld [vmem:[%s1 + $0x2c] sm:$0xf]
  %v35 = vld [vmem:[%s1 + $0x30] sm:$0xf]
  %v36 = vld [vmem:[%s1 + $0x34] sm:$0xf]
  %v37 = vld [vmem:[%s1 + $0x38] sm:$0xf]
  %v38 = vld [vmem:[%s1 + $0x3c] sm:$0xf]
  %v39 = vld [vmem:[%s1 + $0x40] sm:$0xf]
  %v40 = vld [vmem:[%s1 + $0x44] sm:$0xf]
  %v41 = vld [vmem:[%s1 + $0x48] sm:$0xf]
  %v42 = vld [vmem:[%s1 + $0x4c] sm:$0xf]
  %v43 = vld [vmem:[%s1 + $0x50] sm:$0xf]
  %v44 = vld [vmem:[%s1 + $0x54] sm:$0xf]
  %v45 = vld [vmem:[%s1 + $0x58] sm:$0xf]
  %v46 = vld [vmem:[%s1 + $0x5c] sm:$0xf]
  %v47 = vld [vmem:[%s1 + $0x60] sm:$0xf]
  %v48 = vld [vmem:[%s1 + $0x64] sm:$0xf]
  %v49 = vld [vmem:[%s1 + $0x68] sm:$0xf]
  %v50 = vld [vmem:[%s1 + $0x6c] sm:$0xf]
  %v51 = vld [vmem:[%s1 + $0x70] sm:$0xf]
  %v52 = vld [vmem:[%s1 + $0x74] sm:$0xf]
  %v53 = vld [vmem:[%s1 + $0x78] sm:$0xf]
  %v54 = vld [vmem:[%s1 + $0x7c] sm:$0xf]
  %v55 = vld [vmem:[%s1 + $0x80] sm:$0xf]
  %v56 = vld [vmem:[%s1 + $0x84] sm:$0xf]
  %v57 = vld [vmem:[%s1 + $0x88] sm:$0xf]
  %v58 = vld [vmem:[%s1 + $0x8c] sm:$0xf]
  %v59 = vld [vmem:[%s1 + $0x90] sm:$0xf]
  %v60 = vld [vmem:[%s1 + $0x94] sm:$0xf]
  %v61 = vld [vmem:[%s1 + $0x98] sm:$0xf]
  %v62 = vld [vmem:[%s1 + $0x9c] sm:$0xf]
  %v63 = vld [vmem:[%s1 + $0xa0] sm:$0xf]
  %v64 = vld [vmem:[%s1 + $0xa4] sm:$0xf]
  %v65 = vld [vmem:[%s1 + $0xa8] sm:$0xf]
  %v66 = vld [vmem:[%s1 + $0xac] sm:$0xf]
  %v67 = vld [vmem:[%s1 + $0xb0] sm:$0xf]
  %v68 = vld [vmem:[%s1 + $0xb4] sm:$0xf]
  %v69 = vld [vmem:[%s1 + $0xb8] sm:$0xf]
  %v70 = vld [vmem:[%s1 + $0xbc] sm:$0xf]
  %v71 = vld [vmem:[%s1 + $0xc0] sm:$0xf]
  %v72 = vld [vmem:[%s1 + $0xc4] sm:$0xf]
  %v73 = vld [vmem:[%s1 + $0xc8] sm:$0xf]
  %v74 = vld [vmem:[%s1 + $0xcc] sm:$0xf]
  %v75 = vld [vmem:[%s1 + $0xd0] sm:$0xf]
  %v76 = vld [vmem:[%s1 + $0xd4] sm:$0xf]
  %v77 = vld [vmem:[%s1 + $0xd8] sm:$0xf]
  %v78 = vld [vmem:[%s1 + $0xdc] sm:$0xf]
  %v79 = vld [vmem:[%s1 + $0xe0] sm:$0xf]
  %v80 = vld [vmem:[%s1 + $0xe4] sm:$0xf]
  %v81 = vld [vmem:[%s1 + $0xe8] sm:$0xf]
  %v82 = vld [vmem:[%s1 + $0xec] sm:$0xf]
  %v83 = vld [vmem:[%s1 + $0xf0] sm:$0xf]
  %v84 = vld [vmem:[%s1 + $0xf4] sm:$0xf]
  %v85 = vld [vmem:[%s1 + $0xf8] sm:$0xf]
  %v86 = vld [vmem:[%s1 + $0xfc] sm:$0xf]
  %v87 = vld [vmem:[%s2] sm:$0x1]
  %v89 = vlaneseq
  %v90 = vshrl.u32 %v89, 7
  %v91 = vsub.s32 0, %v90
  %v92 = vrot.slane %v87, %v91
  %v96 = vunpack.c.l.b16 %v21
  %v97 = vunpack.c.h.b16 %v21
  %v98 = vunpack.c.l.b16 %v22
  %v99 = vunpack.c.h.b16 %v22
  %v100 = vpack.c.b16 %v96, %v96
  %v101 = vpack.c.b16 %v97, %v97
  %v102 = vpack.c.b16 %v98, %v98
  %v103 = vpack.c.b16 %v99, %v99
  %v172 = vunpack.c.l.b16 %v23
  %v173 = vunpack.c.l.b16 %v24
  %v174 = vunpack.c.l.b16 %v25
  %v175 = vunpack.c.l.b16 %v26
  %v176 = vunpack.c.l.b16 %v27
  %v177 = vunpack.c.l.b16 %v28
  %v178 = vunpack.c.l.b16 %v29
  %v179 = vunpack.c.l.b16 %v30
  %v180 = vunpack.c.l.b16 %v31
  %v181 = vunpack.c.l.b16 %v32
  %v182 = vunpack.c.l.b16 %v33
  %v183 = vunpack.c.l.b16 %v34
  %v184 = vunpack.c.l.b16 %v35
  %v185 = vunpack.c.l.b16 %v36
  %v186 = vunpack.c.l.b16 %v37
  %v187 = vunpack.c.l.b16 %v38
  %v188 = vunpack.c.l.b16 %v39
  %v189 = vunpack.c.l.b16 %v40
  %v190 = vunpack.c.l.b16 %v41
  %v191 = vunpack.c.l.b16 %v42
  %v192 = vunpack.c.l.b16 %v43
  %v193 = vunpack.c.l.b16 %v44
  %v194 = vunpack.c.l.b16 %v45
  %v195 = vunpack.c.l.b16 %v46
  %v196 = vunpack.c.l.b16 %v47
  %v197 = vunpack.c.l.b16 %v48
  %v198 = vunpack.c.l.b16 %v49
  %v199 = vunpack.c.l.b16 %v50
  %v200 = vunpack.c.l.b16 %v51
  %v201 = vunpack.c.l.b16 %v52
  %v202 = vunpack.c.l.b16 %v53
  %v203 = vunpack.c.l.b16 %v54
  %v204 = vunpack.c.l.b16 %v55
  %v205 = vunpack.c.l.b16 %v56
  %v206 = vunpack.c.l.b16 %v57
  %v207 = vunpack.c.l.b16 %v58
  %v208 = vunpack.c.l.b16 %v59
  %v209 = vunpack.c.l.b16 %v60
  %v210 = vunpack.c.l.b16 %v61
  %v211 = vunpack.c.l.b16 %v62
  %v212 = vunpack.c.l.b16 %v63
  %v213 = vunpack.c.l.b16 %v64
  %v214 = vunpack.c.l.b16 %v65
  %v215 = vunpack.c.l.b16 %v66
  %v216 = vunpack.c.l.b16 %v67
  %v217 = vunpack.c.l.b16 %v68
  %v218 = vunpack.c.l.b16 %v69
  %v219 = vunpack.c.l.b16 %v70
  %v220 = vunpack.c.l.b16 %v71
  %v221 = vunpack.c.l.b16 %v72
  %v222 = vunpack.c.l.b16 %v73
  %v223 = vunpack.c.l.b16 %v74
  %v224 = vunpack.c.l.b16 %v75
  %v225 = vunpack.c.l.b16 %v76
  %v226 = vunpack.c.l.b16 %v77
  %v227 = vunpack.c.l.b16 %v78
  %v228 = vunpack.c.l.b16 %v79
  %v229 = vunpack.c.l.b16 %v80
  %v230 = vunpack.c.l.b16 %v81
  %v231 = vunpack.c.l.b16 %v82
  %v232 = vunpack.c.l.b16 %v83
  %v233 = vunpack.c.l.b16 %v84
  %v234 = vunpack.c.l.b16 %v85
  %v235 = vunpack.c.l.b16 %v86
  %v236 = vpack.c.b16 %v173, %v172
  %v237 = vpack.c.b16 %v175, %v174
  %v238 = vpack.c.b16 %v177, %v176
  %v239 = vpack.c.b16 %v179, %v178
  %v240 = vpack.c.b16 %v181, %v180
  %v241 = vpack.c.b16 %v183, %v182
  %v242 = vpack.c.b16 %v185, %v184
  %v243 = vpack.c.b16 %v187, %v186
  %v244 = vpack.c.b16 %v189, %v188
  %v245 = vpack.c.b16 %v191, %v190
  %v246 = vpack.c.b16 %v193, %v192
  %v247 = vpack.c.b16 %v195, %v194
  %v248 = vpack.c.b16 %v197, %v196
  %v249 = vpack.c.b16 %v199, %v198
  %v250 = vpack.c.b16 %v201, %v200
  %v251 = vpack.c.b16 %v203, %v202
  %v252 = vpack.c.b16 %v205, %v204
  %v253 = vpack.c.b16 %v207, %v206
  %v254 = vpack.c.b16 %v209, %v208
  %v255 = vpack.c.b16 %v211, %v210
  %v256 = vpack.c.b16 %v213, %v212
  %v257 = vpack.c.b16 %v215, %v214
  %v258 = vpack.c.b16 %v217, %v216
  %v259 = vpack.c.b16 %v219, %v218
  %v260 = vpack.c.b16 %v221, %v220
  %v261 = vpack.c.b16 %v223, %v222
  %v262 = vpack.c.b16 %v225, %v224
  %v263 = vpack.c.b16 %v227, %v226
  %v264 = vpack.c.b16 %v229, %v228
  %v265 = vpack.c.b16 %v231, %v230
  %v266 = vpack.c.b16 %v233, %v232
  %v267 = vpack.c.b16 %v235, %v234
  %300 = vmatprep.subr.bf16.mxu0 0
  %301 = vmatpush1.bf16.msra.mxu0 %v236
  %302 = vmatprep.subr.bf16.mxu0 0
  %303 = vmatpush1.bf16.msra.mxu0 %v237
  %304 = vmatprep.subr.bf16.mxu0 0
  %305 = vmatpush1.bf16.msra.mxu0 %v238
  %306 = vmatprep.subr.bf16.mxu0 0
  %307 = vmatpush1.bf16.msra.mxu0 %v239
  %308 = vmatprep.subr.bf16.mxu0 0
  %309 = vmatpush1.bf16.msra.mxu0 %v240
  %310 = vmatprep.subr.bf16.mxu0 0
  %311 = vmatpush1.bf16.msra.mxu0 %v241
  %312 = vmatprep.subr.bf16.mxu0 0
  %313 = vmatpush1.bf16.msra.mxu0 %v242
  %314 = vmatprep.subr.bf16.mxu0 0
  %315 = vmatpush1.bf16.msra.mxu0 %v243
  %316 = vmatprep.subr.bf16.mxu0 0
  %317 = vmatpush1.bf16.msra.mxu0 %v244
  %318 = vmatprep.subr.bf16.mxu0 0
  %319 = vmatpush1.bf16.msra.mxu0 %v245
  %320 = vmatprep.subr.bf16.mxu0 0
  %321 = vmatpush1.bf16.msra.mxu0 %v246
  %322 = vmatprep.subr.bf16.mxu0 0
  %323 = vmatpush1.bf16.msra.mxu0 %v247
  %324 = vmatprep.subr.bf16.mxu0 0
  %325 = vmatpush1.bf16.msra.mxu0 %v248
  %326 = vmatprep.subr.bf16.mxu0 0
  %327 = vmatpush1.bf16.msra.mxu0 %v249
  %328 = vmatprep.subr.bf16.mxu0 0
  %329 = vmatpush1.bf16.msra.mxu0 %v250
  %330 = vmatprep.subr.bf16.mxu0 0
  %331 = vmatpush1.bf16.msra.mxu0 %v251
  %332 = vmatprep.mubr.bf16.mxu0 %v101
  %333 = vmatmul.mubr.bf16.gmra.mrb[0].mxu0 %v100
  %v334 = vpop.f32.mrb[0].mxu0
  %v335 = vadd.f32 %v92, %v334
  %v336 = vpop.f32.mrb[0].mxu0
  %v337 = vpop.f32.mrb[0].mxu0
  %v338 = vpop.f32.mrb[0].mxu0
  %339 = vdwg.mxu0
  %340 = vmatprep.subr.bf16.mxu0 0
  %341 = vmatpush1.bf16.msra.mxu0 %v252
  %342 = vmatprep.subr.bf16.mxu0 0
  %343 = vmatpush1.bf16.msra.mxu0 %v253
  %344 = vmatprep.subr.bf16.mxu0 0
  %345 = vmatpush1.bf16.msra.mxu0 %v254
  %346 = vmatprep.subr.bf16.mxu0 0
  %347 = vmatpush1.bf16.msra.mxu0 %v255
  %348 = vmatprep.subr.bf16.mxu0 0
  %349 = vmatpush1.bf16.msra.mxu0 %v256
  %350 = vmatprep.subr.bf16.mxu0 0
  %351 = vmatpush1.bf16.msra.mxu0 %v257
  %352 = vmatprep.subr.bf16.mxu0 0
  %353 = vmatpush1.bf16.msra.mxu0 %v258
  %354 = vmatprep.subr.bf16.mxu0 0
  %355 = vmatpush1.bf16.msra.mxu0 %v259
  %356 = vmatprep.subr.bf16.mxu0 0
  %357 = vmatpush1.bf16.msra.mxu0 %v260
  %358 = vmatprep.subr.bf16.mxu0 0
  %359 = vmatpush1.bf16.msra.mxu0 %v261
  %360 = vmatprep.subr.bf16.mxu0 0
  %361 = vmatpush1.bf16.msra.mxu0 %v262
  %362 = vmatprep.subr.bf16.mxu0 0
  %363 = vmatpush1.bf16.msra.mxu0 %v263
  %364 = vmatprep.subr.bf16.mxu0 0
  %365 = vmatpush1.bf16.msra.mxu0 %v264
  %366 = vmatprep.subr.bf16.mxu0 0
  %367 = vmatpush1.bf16.msra.mxu0 %v265
  %368 = vmatprep.subr.bf16.mxu0 0
  %369 = vmatpush1.bf16.msra.mxu0 %v266
  %370 = vmatprep.subr.bf16.mxu0 0
  %371 = vmatpush1.bf16.msra.mxu0 %v267
  %372 = vmatprep.mubr.bf16.mxu0 %v103
  %373 = vmatmul.mubr.bf16.gmra.mrb[0].mxu0 %v102
  %v374 = vpop.f32.mrb[0].mxu0
  %v375 = vadd.f32 %v335, %v374
  %v376 = vpop.f32.mrb[0].mxu0
  %v377 = vpop.f32.mrb[0].mxu0
  %v378 = vpop.f32.mrb[0].mxu0
  %379 = vdwg.mxu0
  %v380 = vmax.f32 %v375, 0.0
  %v381 = vpack.c.bf16 %v380, %v380
  %v382 = vld [vmem:[%s3] sm:$0xf]
  %v383 = vld [vmem:[%s3 + $0x4] sm:$0xf]
  %v384 = vld [vmem:[%s3 + $0x8] sm:$0xf]
  %v385 = vld [vmem:[%s3 + $0xc] sm:$0xf]
  %v386 = vld [vmem:[%s3 + $0x10] sm:$0xf]
  %v387 = vld [vmem:[%s3 + $0x14] sm:$0xf]
  %v388 = vld [vmem:[%s3 + $0x18] sm:$0xf]
  %v389 = vld [vmem:[%s3 + $0x1c] sm:$0xf]
  %v390 = vld [vmem:[%s3 + $0x20] sm:$0xf]
  %v391 = vld [vmem:[%s3 + $0x24] sm:$0xf]
  %v392 = vld [vmem:[%s3 + $0x28] sm:$0xf]
  %v393 = vld [vmem:[%s3 + $0x2c] sm:$0xf]
  %v394 = vld [vmem:[%s3 + $0x30] sm:$0xf]
  %v395 = vld [vmem:[%s3 + $0x34] sm:$0xf]
  %v396 = vld [vmem:[%s3 + $0x38] sm:$0xf]
  %v397 = vld [vmem:[%s3 + $0x3c] sm:$0xf]
  %v398 = vld [vmem:[%s4] sm:$0x1]
  %v400 = vlaneseq
  %v401 = vshrl.u32 %v400, 7
  %v402 = vsub.s32 0, %v401
  %v403 = vrot.slane %v398, %v402
  %v421 = vunpack.c.l.b16 %v382
  %v422 = vunpack.c.l.b16 %v383
  %v423 = vunpack.c.l.b16 %v384
  %v424 = vunpack.c.l.b16 %v385
  %v425 = vunpack.c.l.b16 %v386
  %v426 = vunpack.c.l.b16 %v387
  %v427 = vunpack.c.l.b16 %v388
  %v428 = vunpack.c.l.b16 %v389
  %v429 = vunpack.c.l.b16 %v390
  %v430 = vunpack.c.l.b16 %v391
  %v431 = vunpack.c.l.b16 %v392
  %v432 = vunpack.c.l.b16 %v393
  %v433 = vunpack.c.l.b16 %v394
  %v434 = vunpack.c.l.b16 %v395
  %v435 = vunpack.c.l.b16 %v396
  %v436 = vunpack.c.l.b16 %v397
  %v437 = vpack.c.b16 %v422, %v421
  %v438 = vpack.c.b16 %v424, %v423
  %v439 = vpack.c.b16 %v426, %v425
  %v440 = vpack.c.b16 %v428, %v427
  %v441 = vpack.c.b16 %v430, %v429
  %v442 = vpack.c.b16 %v432, %v431
  %v443 = vpack.c.b16 %v434, %v433
  %v444 = vpack.c.b16 %v436, %v435
  %453 = vmatprep.subr.bf16.mxu0 0
  %454 = vmatpush1.bf16.msra.mxu0 %v437
  %455 = vmatprep.subr.bf16.mxu0 0
  %456 = vmatpush1.bf16.msra.mxu0 %v438
  %457 = vmatprep.subr.bf16.mxu0 0
  %458 = vmatpush1.bf16.msra.mxu0 %v439
  %459 = vmatprep.subr.bf16.mxu0 0
  %460 = vmatpush1.bf16.msra.mxu0 %v440
  %461 = vmatprep.subr.bf16.mxu0 0
  %462 = vmatpush1.bf16.msra.mxu0 %v441
  %463 = vmatprep.subr.bf16.mxu0 0
  %464 = vmatpush1.bf16.msra.mxu0 %v442
  %465 = vmatprep.subr.bf16.mxu0 0
  %466 = vmatpush1.bf16.msra.mxu0 %v443
  %467 = vmatprep.subr.bf16.mxu0 0
  %468 = vmatpush1.bf16.msra.mxu0 %v444
  %469 = vmatprep.subr.bf16.mxu0 0
  %470 = vmatpush1.bf16.msra.mxu0 0
  %471 = vmatprep.subr.bf16.mxu0 0
  %472 = vmatpush1.bf16.msra.mxu0 0
  %473 = vmatprep.subr.bf16.mxu0 0
  %474 = vmatpush1.bf16.msra.mxu0 0
  %475 = vmatprep.subr.bf16.mxu0 0
  %476 = vmatpush1.bf16.msra.mxu0 0
  %477 = vmatprep.subr.bf16.mxu0 0
  %478 = vmatpush1.bf16.msra.mxu0 0
  %479 = vmatprep.subr.bf16.mxu0 0
  %480 = vmatpush1.bf16.msra.mxu0 0
  %481 = vmatprep.subr.bf16.mxu0 0
  %482 = vmatpush1.bf16.msra.mxu0 0
  %483 = vmatprep.subr.bf16.mxu0 0
  %484 = vmatpush1.bf16.msra.mxu0 0
  %485 = vmatprep.mubr.bf16.mxu0 0
  %486 = vmatmul.mubr.bf16.gmra.mrb[0].mxu0 %v381
  %v487 = vpop.f32.mrb[0].mxu0
  %v488 = vadd.f32 %v403, %v487
  %v489 = vpop.f32.mrb[0].mxu0
  %v490 = vpop.f32.mrb[0].mxu0
  %v491 = vpop.f32.mrb[0].mxu0
  %492 = vdwg.mxu0
  %493 = vst [vmem:[%s5] sm:$0xff] %v488
  // Predicated region
  $region22: #{teacher_cnn_mnist_forward.5} parent=0 // pred_check
    _
  $region23: #{teacher_cnn_mnist_forward.5} parent=0 // pred_check_branch
    %495 = sbr.rel (0) target = $region25
  $region24: #{teacher_cnn_mnist_forward.5} parent=0 // pred_region
    _
  $region25: #{teacher_cnn_mnist_forward.5} parent=0 // pred_fallthru
    _
  // Predicated region
  $region26: #{teacher_cnn_mnist_forward.5} parent=0 // pred_check
    _
  $region27: #{teacher_cnn_mnist_forward.5} parent=0 // pred_check_branch
    %497 = sbr.rel (0) target = $region29
  $region28: #{teacher_cnn_mnist_forward.5} parent=0 // pred_region
    _
  $region29: #{teacher_cnn_mnist_forward.5} parent=0 // pred_fallthru
    _

</llo_original>
